<compile_context>
chip_gen: v7x
topology: tpu7x:2x2x1
jax: 0.10.0
libtpu: 0.0.40
codegen_flags: <defaults>
</compile_context>

<pallas_src>
import jax
import jax.numpy as jnp
from jax import lax
from jax.experimental import pallas as pl
from jax.experimental.pallas import tpu as pltpu

_VMEM_LIMIT = 32 * 1024 * 1024      # explicit scoped-VMEM budget (>= defaults everywhere)
_LANE_TILE_TARGET = 2048            # lanes per block (big tiles amortize per-step overhead)


def _pick_lane_tile(m, target=_LANE_TILE_TARGET):
    """Largest multiple of 128 <= target that divides m, else the full extent."""
    if m <= target:
        return m
    t = (target // 128) * 128
    while t >= 128:
        if m % t == 0:
            return t
        t -= 128
    return m


def _fold_bn(w, b, gamma, beta, mean, var, eps=1e-5):
    """Fold an inference-mode BatchNorm into the preceding conv's weight/bias."""
    scale = gamma / jnp.sqrt(var + eps)
    w_eff = w * scale.reshape((w.shape[0],) + (1,) * (w.ndim - 1))
    b_eff = (b - mean) * scale + beta
    return w_eff, b_eff


# ---------------------------------------------------------------------------
# Kernel 1: ConvTranspose2d(inC, outC, kernel=2, stride=2) as one weight-left
# matmul producing all 4 spatial phases at once: out4 = W4 @ x_flat + b4.
# ---------------------------------------------------------------------------
def _upconv_kernel(x_ref, w_ref, b_ref, o_ref):
    # x_ref: (Cin, TM)  w_ref: (4*Cout, Cin)  b_ref: (4*Cout, 1)  o_ref: (4*Cout, TM)
    acc = jnp.dot(w_ref[...], x_ref[...], preferred_element_type=jnp.float32)
    o_ref[...] = (acc + b_ref[...]).astype(o_ref.dtype)


def _upconv(x, wt, bt):
    n, cin, h, w = x.shape
    cout = wt.shape[1]
    m = h * w
    xf = x.reshape(n, cin, m)                                   # free reshape, no transpose
    w4 = jnp.transpose(wt, (2, 3, 1, 0)).reshape(4 * cout, cin)  # [(kh,kw,co), ci]
    b4 = jnp.tile(bt, 4).reshape(4 * cout, 1)
    tm = _pick_lane_tile(m)
    grid = (n, m // tm)

    out4 = pl.pallas_call(
        _upconv_kernel,
        out_shape=jax.ShapeDtypeStruct((n, 4 * cout, m), jnp.float32),
        grid_spec=pltpu.PrefetchScalarGridSpec(
            num_scalar_prefetch=0,
            grid=grid,
            in_specs=[
                pl.BlockSpec((None, cin, tm), lambda i, j: (i, 0, j)),
                pl.BlockSpec((4 * cout, cin), lambda i, j: (0, 0)),
                pl.BlockSpec((4 * cout, 1), lambda i, j: (0, 0)),
            ],
            out_specs=pl.BlockSpec((None, 4 * cout, tm), lambda i, j: (i, 0, j)),
        ),
        compiler_params=pltpu.CompilerParams(
            dimension_semantics=("parallel", "parallel"),
            vmem_limit_bytes=_VMEM_LIMIT),
    )(xf, w4, b4)

    # Interleave the 4 phases into the upsampled NCHW image:
    # out4[(kh*2+kw)*cout+co, i*w+j] -> up[co, 2i+kh, 2j+kw]
    up = out4.reshape(n, 2, 2, cout, h, w)
    up = up.transpose(0, 3, 4, 1, 5, 2).reshape(n, cout, 2 * h, 2 * w)
    return up


# ---------------------------------------------------------------------------
# Kernel 2: fused Attention_block (W_g, W_x, psi 1x1 convs + folded BN + ReLU
# + Sigmoid + gating), weight-left matmuls on [C, spatial-tile] blocks.
# ---------------------------------------------------------------------------
def _attention_kernel(up_ref, xs_ref, wg_ref, bg_ref, wx_ref, bx_ref,
                      wp_ref, bp_ref, o_ref):
    up = up_ref[...]                                            # (C, TM)
    xs = xs_ref[...]                                            # (C, TM)
    g1 = jnp.dot(wg_ref[...], up, preferred_element_type=jnp.float32) + bg_ref[...]
    x1 = jnp.dot(wx_ref[...], xs, preferred_element_type=jnp.float32) + bx_ref[...]
    s = jnp.maximum(g1 + x1, 0.0)                               # ReLU
    z = jnp.dot(wp_ref[...], s, preferred_element_type=jnp.float32) + bp_ref[...]
    psi = 1.0 / (1.0 + jnp.exp(-z))                             # Sigmoid, (1, TM)
    o_ref[...] = (xs * psi).astype(o_ref.dtype)


def _attention(up, xskip, wg, bg, wx, bx, wp, bp):
    n, c, h2, w2 = up.shape
    m = h2 * w2
    upf = up.reshape(n, c, m)
    xsf = xskip.reshape(n, c, m)
    f_int = wg.shape[0]
    tm = _pick_lane_tile(m)
    grid = (n, m // tm)

    att = pl.pallas_call(
        _attention_kernel,
        out_shape=jax.ShapeDtypeStruct((n, c, m), jnp.float32),
        grid_spec=pltpu.PrefetchScalarGridSpec(
            num_scalar_prefetch=0,
            grid=grid,
            in_specs=[
                pl.BlockSpec((None, c, tm), lambda i, j: (i, 0, j)),
                pl.BlockSpec((None, c, tm), lambda i, j: (i, 0, j)),
                pl.BlockSpec((f_int, c), lambda i, j: (0, 0)),
                pl.BlockSpec((f_int, 1), lambda i, j: (0, 0)),
                pl.BlockSpec((f_int, c), lambda i, j: (0, 0)),
                pl.BlockSpec((f_int, 1), lambda i, j: (0, 0)),
                pl.BlockSpec((1, f_int), lambda i, j: (0, 0)),
                pl.BlockSpec((1, 1), lambda i, j: (0, 0)),
            ],
            out_specs=pl.BlockSpec((None, c, tm), lambda i, j: (i, 0, j)),
        ),
        compiler_params=pltpu.CompilerParams(
            dimension_semantics=("parallel", "parallel"),
            vmem_limit_bytes=_VMEM_LIMIT),
    )(upf, xsf, wg, bg.reshape(f_int, 1), wx, bx.reshape(f_int, 1),
      wp, bp.reshape(1, 1))
    return att.reshape(n, c, h2, w2)


# ---------------------------------------------------------------------------
# Kernel 3: 3x3 conv (padding=1) + folded BN + ReLU, row-major [Hp, C, Wp]
# layout. One image per grid step; rows are walked with a fori_loop and the
# 9 taps accumulate as small weight-left matmuls with W on the lanes.
# ---------------------------------------------------------------------------
# TODO(synk): tile rows (with halo DMA) for images too large to hold one padded
#             image block in VMEM.
def _conv3x3_kernel(x_ref, w_ref, b_ref, o_ref):
    # x_ref: (Hp, Cin, Wp)  w_ref: (9, Cout, Cin)  b_ref: (Cout, 1)
    # o_ref: (Hout, Cout, Wout)
    hout, cout, wout = o_ref.shape

    def row_body(i, carry):
        acc = jnp.zeros((cout, wout), jnp.float32)
        for dy in range(3):
            xr = x_ref[i + dy]                                  # (Cin, Wp), dynamic row
            for dx in range(3):
                acc = acc + jnp.dot(w_ref[3 * dy + dx], xr[:, dx:dx + wout],
                                    preferred_element_type=jnp.float32)
        acc = acc + b_ref[...]
        o_ref[i] = jnp.maximum(acc, 0.0).astype(o_ref.dtype)    # fused (folded) BN + ReLU
        return carry

    lax.fori_loop(0, hout, row_body, 0)


def _conv3x3_bn_relu(x_rm_pad, w_eff, b_eff):
    # x_rm_pad: [N, Hp, Cin, Wp]  (already zero-padded by 1 in H and W)
    n, hp, cin, wp = x_rm_pad.shape
    hout, wout = hp - 2, wp - 2
    cout = w_eff.shape[0]
    w9 = jnp.transpose(w_eff, (2, 3, 0, 1)).reshape(9, cout, cin)   # [(kh,kw), o, i]
    b2 = b_eff.reshape(cout, 1)

    return pl.pallas_call(
        _conv3x3_kernel,
        out_shape=jax.ShapeDtypeStruct((n, hout, cout, wout), jnp.float32),
        grid_spec=pltpu.PrefetchScalarGridSpec(
            num_scalar_prefetch=0,
            grid=(n,),
            in_specs=[
                pl.BlockSpec((None, hp, cin, wp), lambda i: (i, 0, 0, 0)),
                pl.BlockSpec((9, cout, cin), lambda i: (0, 0, 0)),
                pl.BlockSpec((cout, 1), lambda i: (0, 0)),
            ],
            out_specs=pl.BlockSpec((None, hout, cout, wout), lambda i: (i, 0, 0, 0)),
        ),
        compiler_params=pltpu.CompilerParams(
            dimension_semantics=("parallel",),
            vmem_limit_bytes=_VMEM_LIMIT),
    )(x_rm_pad, w9, b2)


# ---------------------------------------------------------------------------
# Full UpTransition forward.
# ---------------------------------------------------------------------------
@jax.jit
def up_transition(x, xskip, params):
    # 1) up = ConvTranspose2d(inC, outC, 2, stride=2)(x)
    up = _upconv(x, params["wt"], params["bt"])

    # 2) att = Attention_block(outC, outC, outC // 2)(up, xskip)   (fully fused)
    wg, bg = _fold_bn(params["wg"][:, :, 0, 0], params["bg"], *params["bn_g"])
    wx, bx = _fold_bn(params["wx"][:, :, 0, 0], params["bx"], *params["bn_x"])
    wp, bp = _fold_bn(params["wp"][:, :, 0, 0], params["bp"], *params["bn_p"])
    att = _attention(up, xskip, wg, bg, wx, bx, wp, bp)

    # 3) out = DoubleConv(inC, outC)(cat(att, up))
    w1, b1 = _fold_bn(params["w1"], params["b1"], *params["bn_1"])
    w2, b2 = _fold_bn(params["w2"], params["b2"], *params["bn_2"])
    cat = jnp.concatenate([att, up], axis=1)                 # [N, inC, 2H, 2W]
    xrm = jnp.transpose(cat, (0, 2, 1, 3))                   # row-major for the 3x3 convs
    xrm = jnp.pad(xrm, ((0, 0), (1, 1), (0, 0), (1, 1)))     # 'same' padding (semantic)
    h1 = _conv3x3_bn_relu(xrm, w1, b1)                       # [N, 2H, outC, 2W]
    h1 = jnp.pad(h1, ((0, 0), (1, 1), (0, 0), (1, 1)))
    h2 = _conv3x3_bn_relu(h1, w2, b2)                        # [N, 2H, outC, 2W]
    return jnp.transpose(h2, (0, 2, 1, 3))                   # back to NCHW


# ---------------------------------------------------------------------------
# Pure-JAX reference (inference-mode BatchNorm) for the correctness check.
# ---------------------------------------------------------------------------
def _ref_bn(x, gamma, beta, mean, var, eps=1e-5):
    inv = gamma / jnp.sqrt(var + eps)
    return (x - mean[None, :, None, None]) * inv[None, :, None, None] \
        + beta[None, :, None, None]


def _ref_conv1x1(x, w, b):
    return jnp.einsum("nchw,oc->nohw", x, w[:, :, 0, 0]) + b[None, :, None, None]


def _ref_conv3x3(x, w, b):
    y = lax.conv_general_dilated(x, w, (1, 1), "SAME",
                                 dimension_numbers=("NCHW", "OIHW", "NCHW"))
    return y + b[None, :, None, None]


def _ref_convT2x2(x, w, b):
    y = jnp.einsum("ncij,cokl->noikjl", x, w)
    n, o, h, _, ww, _ = y.shape
    return y.reshape(n, o, 2 * h, 2 * ww) + b[None, :, None, None]


def _ref_up_transition(x, xskip, p):
    up = _ref_convT2x2(x, p["wt"], p["bt"])
    g1 = _ref_bn(_ref_conv1x1(up, p["wg"], p["bg"]), *p["bn_g"])
    x1 = _ref_bn(_ref_conv1x1(xskip, p["wx"], p["bx"]), *p["bn_x"])
    s = jax.nn.relu(g1 + x1)
    psi = jax.nn.sigmoid(_ref_bn(_ref_conv1x1(s, p["wp"], p["bp"]), *p["bn_p"]))
    att = xskip * psi
    cat = jnp.concatenate([att, up], axis=1)
    h1 = jax.nn.relu(_ref_bn(_ref_conv3x3(cat, p["w1"], p["b1"]), *p["bn_1"]))
    return jax.nn.relu(_ref_bn(_ref_conv3x3(h1, p["w2"], p["b2"]), *p["bn_2"]))


if __name__ == "__main__":
    keys = iter(jax.random.split(jax.random.PRNGKey(0), 48))

    N, IN_CH, H, W = 2, 8, 8, 8          # x: [2, 8, 8, 8]
    OUT_CH = IN_CH // 2                  # 4
    F_INT = OUT_CH // 2                  # 2
    H2, W2 = 2 * H, 2 * W                # xskip: [2, 4, 16, 16]

    def nrm(shape, scale):
        return scale * jax.random.normal(next(keys), shape, jnp.float32)

    def bn_params(c):
        gamma = 1.0 + 0.1 * jax.random.normal(next(keys), (c,), jnp.float32)
        beta = 0.1 * jax.random.normal(next(keys), (c,), jnp.float32)
        mean = 0.1 * jax.random.normal(next(keys), (c,), jnp.float32)
        var = 1.0 + 0.5 * jax.random.uniform(next(keys), (c,), jnp.float32)
        return (gamma, beta, mean, var)

    x = jax.random.normal(next(keys), (N, IN_CH, H, W), jnp.float32)
    xskip = jax.random.normal(next(keys), (N, OUT_CH, H2, W2), jnp.float32)

    params = {
        # ConvTranspose2d(IN_CH, OUT_CH, 2, stride=2): weight [Cin, Cout, 2, 2]
        "wt": nrm((IN_CH, OUT_CH, 2, 2), 0.2), "bt": nrm((OUT_CH,), 0.05),
        # Attention_block(OUT_CH, OUT_CH, F_INT)
        "wg": nrm((F_INT, OUT_CH, 1, 1), 0.3), "bg": nrm((F_INT,), 0.05),
        "bn_g": bn_params(F_INT),
        "wx": nrm((F_INT, OUT_CH, 1, 1), 0.3), "bx": nrm((F_INT,), 0.05),
        "bn_x": bn_params(F_INT),
        "wp": nrm((1, F_INT, 1, 1), 0.3), "bp": nrm((1,), 0.05),
        "bn_p": bn_params(1),
        # DoubleConv(IN_CH, OUT_CH)
        "w1": nrm((OUT_CH, IN_CH, 3, 3), 0.15), "b1": nrm((OUT_CH,), 0.05),
        "bn_1": bn_params(OUT_CH),
        "w2": nrm((OUT_CH, OUT_CH, 3, 3), 0.15), "b2": nrm((OUT_CH,), 0.05),
        "bn_2": bn_params(OUT_CH),
    }

    out = up_transition(x, xskip, params)
    out = jax.block_until_ready(out)

    ref = _ref_up_transition(x, xskip, params)
    assert out.shape == (N, OUT_CH, H2, W2), out.shape
    assert jnp.allclose(out, ref, atol=1e-2, rtol=1e-2), \
        float(jnp.max(jnp.abs(out - ref)))

    print("KERNEL_OK")
</pallas_src>

<mosaic_0001>
module attributes {stable_mosaic.version = 11 : i64} {
  func.func @_upconv_kernel(%arg0: i32, %arg1: i32, %arg2: memref<1x8x64xf32, #tpu.memory_space<vmem>>, %arg3: memref<16x8xf32, #tpu.memory_space<vmem>>, %arg4: memref<16x1xf32, #tpu.memory_space<vmem>>, %arg5: memref<1x16x64xf32, #tpu.memory_space<vmem>>) attributes {dimension_semantics = [#tpu.dimension_semantics<parallel>, #tpu.dimension_semantics<parallel>], iteration_bounds = array<i64: 2, 1>, scalar_prefetch = 0 : i64, scratch_operands = 0 : i64, tpu.core_type = #tpu.core_type<tc>, window_params = [{transform_indices = @transform_0, window_bounds = array<i64: 1, 8, 64>}, {pipeline_mode = #tpu.pipeline_mode<synchronous>, transform_indices = @transform_1, window_bounds = array<i64: 16, 8>}, {pipeline_mode = #tpu.pipeline_mode<synchronous>, transform_indices = @transform_2, window_bounds = array<i64: 16, 1>}, {transform_indices = @transform_3, window_bounds = array<i64: 1, 16, 64>}]} {
    %c0 = arith.constant 0 : index
    %c0_0 = arith.constant 0 : index
    %0 = vector.load %arg3[%c0, %c0_0] : memref<16x8xf32, #tpu.memory_space<vmem>>, vector<16x8xf32>
    %c0_1 = arith.constant 0 : index
    %c0_2 = arith.constant 0 : index
    %c0_3 = arith.constant 0 : index
    %1 = vector.load %arg2[%c0_1, %c0_2, %c0_3] : memref<1x8x64xf32, #tpu.memory_space<vmem>>, vector<1x8x64xf32>
    %2 = vector.shape_cast %1 : vector<1x8x64xf32> to vector<8x64xf32>
    %cst = arith.constant dense<0.000000e+00> : vector<16x64xf32>
    %3 = tpu.matmul %0, %2, %cst {dimension_numbers = #tpu.dot_dimension_numbers<[1], [0], [0], [1], [0, 0, 1, 1], [], []>} : vector<16x8xf32>, vector<8x64xf32>, vector<16x64xf32> -> vector<16x64xf32>
    %c0_4 = arith.constant 0 : index
    %c0_5 = arith.constant 0 : index
    %4 = vector.load %arg4[%c0_4, %c0_5] : memref<16x1xf32, #tpu.memory_space<vmem>>, vector<16x1xf32>
    %5 = vector.broadcast %4 : vector<16x1xf32> to vector<16x64xf32>
    %6 = arith.addf %3, %5 : vector<16x64xf32>
    %c0_6 = arith.constant 0 : index
    %c0_7 = arith.constant 0 : index
    %c0_8 = arith.constant 0 : index
    %7 = vector.load %arg5[%c0_6, %c0_7, %c0_8] : memref<1x16x64xf32, #tpu.memory_space<vmem>>, vector<1x16x64xf32>
    %8 = vector.shape_cast %7 : vector<1x16x64xf32> to vector<16x64xf32>
    %9 = vector.shape_cast %6 : vector<16x64xf32> to vector<1x16x64xf32>
    tpu.vector_store %arg5[%c0_6, %c0_7, %c0_8], %9 {strides = array<i32>} : memref<1x16x64xf32, #tpu.memory_space<vmem>>, vector<1x16x64xf32>,
    return
  }
  func.func @transform_0(%arg0: i32, %arg1: i32) -> (i32, i32, i32) {
    %c0_i32 = arith.constant 0 : i32
    %c0_i32_0 = arith.constant 0 : i32
    return %arg0, %c0_i32, %arg1 : i32, i32, i32
  }
  func.func @transform_1(%arg0: i32, %arg1: i32) -> (i32, i32) {
    %c0_i32 = arith.constant 0 : i32
    %c0_i32_0 = arith.constant 0 : i32
    %c0_i32_1 = arith.constant 0 : i32
    return %c0_i32, %c0_i32_0 : i32, i32
  }
  func.func @transform_2(%arg0: i32, %arg1: i32) -> (i32, i32) {
    %c0_i32 = arith.constant 0 : i32
    %c0_i32_0 = arith.constant 0 : i32
    %c0_i32_1 = arith.constant 0 : i32
    return %c0_i32, %c0_i32_0 : i32, i32
  }
  func.func @transform_3(%arg0: i32, %arg1: i32) -> (i32, i32, i32) {
    %c0_i32 = arith.constant 0 : i32
    %c0_i32_0 = arith.constant 0 : i32
    return %arg0, %c0_i32, %arg1 : i32, i32, i32
  }
}

module attributes {stable_mosaic.version = 11 : i64} {
  func.func @_attention_kernel(%arg0: i32, %arg1: i32, %arg2: memref<1x4x256xf32, #tpu.memory_space<vmem>>, %arg3: memref<1x4x256xf32, #tpu.memory_space<vmem>>, %arg4: memref<2x4xf32, #tpu.memory_space<vmem>>, %arg5: memref<2x1xf32, #tpu.memory_space<vmem>>, %arg6: memref<2x4xf32, #tpu.memory_space<vmem>>, %arg7: memref<2x1xf32, #tpu.memory_space<vmem>>, %arg8: memref<1x2xf32, #tpu.memory_space<vmem>>, %arg9: memref<1x1xf32, #tpu.memory_space<vmem>>, %arg10: memref<1x4x256xf32, #tpu.memory_space<vmem>>) attributes {dimension_semantics = [#tpu.dimension_semantics<parallel>, #tpu.dimension_semantics<parallel>], iteration_bounds = array<i64: 2, 1>, scalar_prefetch = 0 : i64, scratch_operands = 0 : i64, tpu.core_type = #tpu.core_type<tc>, window_params = [{transform_indices = @transform_0, window_bounds = array<i64: 1, 4, 256>}, {transform_indices = @transform_1, window_bounds = array<i64: 1, 4, 256>}, {pipeline_mode = #tpu.pipeline_mode<synchronous>, transform_indices = @transform_2, window_bounds = array<i64: 2, 4>}, {pipeline_mode = #tpu.pipeline_mode<synchronous>, transform_indices = @transform_3, window_bounds = array<i64: 2, 1>}, {pipeline_mode = #tpu.pipeline_mode<synchronous>, transform_indices = @transform_4, window_bounds = array<i64: 2, 4>}, {pipeline_mode = #tpu.pipeline_mode<synchronous>, transform_indices = @transform_5, window_bounds = array<i64: 2, 1>}, {pipeline_mode = #tpu.pipeline_mode<synchronous>, transform_indices = @transform_6, window_bounds = array<i64: 1, 2>}, {pipeline_mode = #tpu.pipeline_mode<synchronous>, transform_indices = @transform_7, window_bounds = array<i64: 1, 1>}, {transform_indices = @transform_8, window_bounds = array<i64: 1, 4, 256>}]} {
    %c0 = arith.constant 0 : index
    %c0_0 = arith.constant 0 : index
    %c0_1 = arith.constant 0 : index
    %0 = vector.load %arg2[%c0, %c0_0, %c0_1] : memref<1x4x256xf32, #tpu.memory_space<vmem>>, vector<1x4x256xf32>
    %1 = vector.shape_cast %0 : vector<1x4x256xf32> to vector<4x256xf32>
    %c0_2 = arith.constant 0 : index
    %c0_3 = arith.constant 0 : index
    %c0_4 = arith.constant 0 : index
    %2 = vector.load %arg3[%c0_2, %c0_3, %c0_4] : memref<1x4x256xf32, #tpu.memory_space<vmem>>, vector<1x4x256xf32>
    %3 = vector.shape_cast %2 : vector<1x4x256xf32> to vector<4x256xf32>
    %c0_5 = arith.constant 0 : index
    %c0_6 = arith.constant 0 : index
    %4 = vector.load %arg4[%c0_5, %c0_6] : memref<2x4xf32, #tpu.memory_space<vmem>>, vector<2x4xf32>
    %cst = arith.constant dense<0.000000e+00> : vector<2x256xf32>
    %5 = tpu.matmul %4, %1, %cst {dimension_numbers = #tpu.dot_dimension_numbers<[1], [0], [0], [1], [0, 0, 1, 1], [], []>} : vector<2x4xf32>, vector<4x256xf32>, vector<2x256xf32> -> vector<2x256xf32>
    %c0_7 = arith.constant 0 : index
    %c0_8 = arith.constant 0 : index
    %6 = vector.load %arg5[%c0_7, %c0_8] : memref<2x1xf32, #tpu.memory_space<vmem>>, vector<2x1xf32>
    %7 = vector.broadcast %6 : vector<2x1xf32> to vector<2x256xf32>
    %8 = arith.addf %5, %7 : vector<2x256xf32>
    %c0_9 = arith.constant 0 : index
    %c0_10 = arith.constant 0 : index
    %9 = vector.load %arg6[%c0_9, %c0_10] : memref<2x4xf32, #tpu.memory_space<vmem>>, vector<2x4xf32>
    %cst_11 = arith.constant dense<0.000000e+00> : vector<2x256xf32>
    %10 = tpu.matmul %9, %3, %cst_11 {dimension_numbers = #tpu.dot_dimension_numbers<[1], [0], [0], [1], [0, 0, 1, 1], [], []>} : vector<2x4xf32>, vector<4x256xf32>, vector<2x256xf32> -> vector<2x256xf32>
    %c0_12 = arith.constant 0 : index
    %c0_13 = arith.constant 0 : index
    %11 = vector.load %arg7[%c0_12, %c0_13] : memref<2x1xf32, #tpu.memory_space<vmem>>, vector<2x1xf32>
    %12 = vector.broadcast %11 : vector<2x1xf32> to vector<2x256xf32>
    %13 = arith.addf %10, %12 : vector<2x256xf32>
    %14 = arith.addf %8, %13 : vector<2x256xf32>
    %cst_14 = arith.constant 0.000000e+00 : f32
    %15 = vector.broadcast %cst_14 : f32 to vector<2x256xf32>
    %16 = arith.maximumf %14, %15 : vector<2x256xf32>
    %c0_15 = arith.constant 0 : index
    %c0_16 = arith.constant 0 : index
    %17 = vector.load %arg8[%c0_15, %c0_16] : memref<1x2xf32, #tpu.memory_space<vmem>>, vector<1x2xf32>
    %cst_17 = arith.constant dense<0.000000e+00> : vector<1x256xf32>
    %18 = tpu.matmul %17, %16, %cst_17 {dimension_numbers = #tpu.dot_dimension_numbers<[1], [0], [0], [1], [0, 0, 1, 1], [], []>} : vector<1x2xf32>, vector<2x256xf32>, vector<1x256xf32> -> vector<1x256xf32>
    %c0_18 = arith.constant 0 : index
    %c0_19 = arith.constant 0 : index
    %19 = vector.load %arg9[%c0_18, %c0_19] : memref<1x1xf32, #tpu.memory_space<vmem>>, vector<1x1xf32>
    %20 = vector.broadcast %19 : vector<1x1xf32> to vector<1x256xf32>
    %21 = arith.addf %18, %20 : vector<1x256xf32>
    %cst_20 = arith.constant 0.000000e+00 : f32
    %22 = vector.broadcast %cst_20 : f32 to vector<1x256xf32>
    %23 = arith.subf %22, %21 : vector<1x256xf32>
    %24 = math.exp %23 : vector<1x256xf32>
    %cst_21 = arith.constant 1.000000e+00 : f32
    %25 = vector.broadcast %cst_21 : f32 to vector<1x256xf32>
    %26 = arith.addf %25, %24 : vector<1x256xf32>
    %cst_22 = arith.constant 1.000000e+00 : f32
    %27 = vector.broadcast %cst_22 : f32 to vector<1x256xf32>
    %28 = arith.divf %27, %26 : vector<1x256xf32>
    %29 = vector.broadcast %28 : vector<1x256xf32> to vector<4x256xf32>
    %30 = arith.mulf %3, %29 : vector<4x256xf32>
    %c0_23 = arith.constant 0 : index
    %c0_24 = arith.constant 0 : index
    %c0_25 = arith.constant 0 : index
    %31 = vector.load %arg10[%c0_23, %c0_24, %c0_25] : memref<1x4x256xf32, #tpu.memory_space<vmem>>, vector<1x4x256xf32>
    %32 = vector.shape_cast %31 : vector<1x4x256xf32> to vector<4x256xf32>
    %33 = vector.shape_cast %30 : vector<4x256xf32> to vector<1x4x256xf32>
    tpu.vector_store %arg10[%c0_23, %c0_24, %c0_25], %33 {strides = array<i32>} : memref<1x4x256xf32, #tpu.memory_space<vmem>>, vector<1x4x256xf32>,
    return
  }
  func.func @transform_0(%arg0: i32, %arg1: i32) -> (i32, i32, i32) {
    %c0_i32 = arith.constant 0 : i32
    %c0_i32_0 = arith.constant 0 : i32
    return %arg0, %c0_i32, %arg1 : i32, i32, i32
  }
  func.func @transform_1(%arg0: i32, %arg1: i32) -> (i32, i32, i32) {
    %c0_i32 = arith.constant 0 : i32
    %c0_i32_0 = arith.constant 0 : i32
    return %arg0, %c0_i32, %arg1 : i32, i32, i32
  }
  func.func @transform_2(%arg0: i32, %arg1: i32) -> (i32, i32) {
    %c0_i32 = arith.constant 0 : i32
    %c0_i32_0 = arith.constant 0 : i32
    %c0_i32_1 = arith.constant 0 : i32
    return %c0_i32, %c0_i32_0 : i32, i32
  }
  func.func @transform_3(%arg0: i32, %arg1: i32) -> (i32, i32) {
    %c0_i32 = arith.constant 0 : i32
    %c0_i32_0 = arith.constant 0 : i32
    %c0_i32_1 = arith.constant 0 : i32
    return %c0_i32, %c0_i32_0 : i32, i32
  }
  func.func @transform_4(%arg0: i32, %arg1: i32) -> (i32, i32) {
    %c0_i32 = arith.constant 0 : i32
    %c0_i32_0 = arith.constant 0 : i32
    %c0_i32_1 = arith.constant 0 : i32
    return %c0_i32, %c0_i32_0 : i32, i32
  }
  func.func @transform_5(%arg0: i32, %arg1: i32) -> (i32, i32) {
    %c0_i32 = arith.constant 0 : i32
    %c0_i32_0 = arith.constant 0 : i32
    %c0_i32_1 = arith.constant 0 : i32
    return %c0_i32, %c0_i32_0 : i32, i32
  }
  func.func @transform_6(%arg0: i32, %arg1: i32) -> (i32, i32) {
    %c0_i32 = arith.constant 0 : i32
    %c0_i32_0 = arith.constant 0 : i32
    %c0_i32_1 = arith.constant 0 : i32
    return %c0_i32, %c0_i32_0 : i32, i32
  }
  func.func @transform_7(%arg0: i32, %arg1: i32) -> (i32, i32) {
    %c0_i32 = arith.constant 0 : i32
    %c0_i32_0 = arith.constant 0 : i32
    %c0_i32_1 = arith.constant 0 : i32
    return %c0_i32, %c0_i32_0 : i32, i32
  }
  func.func @transform_8(%arg0: i32, %arg1: i32) -> (i32, i32, i32) {
    %c0_i32 = arith.constant 0 : i32
    %c0_i32_0 = arith.constant 0 : i32
    return %arg0, %c0_i32, %arg1 : i32, i32, i32
  }
}

module attributes {stable_mosaic.version = 11 : i64} {
  func.func @_conv3x3_kernel(%arg0: i32, %arg1: memref<1x18x4x18xf32, #tpu.memory_space<vmem>>, %arg2: memref<9x4x4xf32, #tpu.memory_space<vmem>>, %arg3: memref<4x1xf32, #tpu.memory_space<vmem>>, %arg4: memref<1x16x4x16xf32, #tpu.memory_space<vmem>>) attributes {dimension_semantics = [#tpu.dimension_semantics<parallel>], iteration_bounds = array<i64: 2>, scalar_prefetch = 0 : i64, scratch_operands = 0 : i64, tpu.core_type = #tpu.core_type<tc>, window_params = [{transform_indices = @transform_0, window_bounds = array<i64: 1, 18, 4, 18>}, {pipeline_mode = #tpu.pipeline_mode<synchronous>, transform_indices = @transform_1, window_bounds = array<i64: 9, 4, 4>}, {pipeline_mode = #tpu.pipeline_mode<synchronous>, transform_indices = @transform_2, window_bounds = array<i64: 4, 1>}, {transform_indices = @transform_3, window_bounds = array<i64: 1, 16, 4, 16>}]} {
    %c0_i32 = arith.constant 0 : i32
    %c16_i32 = arith.constant 16 : i32
    %0 = arith.addi %c0_i32, %c16_i32 : i32
    %c1_i32 = arith.constant 1 : i32
    scf.for %arg5 = %c0_i32 to %0 step %c1_i32  : i32 {
      %cst = arith.constant 0.000000e+00 : f32
      %1 = vector.broadcast %cst : f32 to vector<4x16xf32>
      %c0_i32_1 = arith.constant 0 : i32
      %2 = arith.addi %arg5, %c0_i32_1 : i32
      %c0 = arith.constant 0 : index
      %3 = arith.index_cast %2 : i32 to index
      %c0_2 = arith.constant 0 : index
      %c0_3 = arith.constant 0 : index
      %4 = vector.load %arg1[%c0, %3, %c0_2, %c0_3] : memref<1x18x4x18xf32, #tpu.memory_space<vmem>>, vector<1x1x4x18xf32>
      %5 = vector.shape_cast %4 : vector<1x1x4x18xf32> to vector<4x18xf32>
      %c0_4 = arith.constant 0 : index
      %c0_5 = arith.constant 0 : index
      %c0_6 = arith.constant 0 : index
      %6 = vector.load %arg2[%c0_4, %c0_5, %c0_6] : memref<9x4x4xf32, #tpu.memory_space<vmem>>, vector<1x4x4xf32>
      %7 = vector.shape_cast %6 : vector<1x4x4xf32> to vector<4x4xf32>
      %8 = vector.extract_strided_slice %5 {offsets = [0, 0], sizes = [4, 16], strides = [1, 1]} : vector<4x18xf32> to vector<4x16xf32>
      %cst_7 = arith.constant dense<0.000000e+00> : vector<4x16xf32>
      %9 = tpu.matmul %7, %8, %cst_7 {dimension_numbers = #tpu.dot_dimension_numbers<[1], [0], [0], [1], [0, 0, 1, 1], [], []>} : vector<4x4xf32>, vector<4x16xf32>, vector<4x16xf32> -> vector<4x16xf32>
      %10 = arith.addf %1, %9 : vector<4x16xf32>
      %c1 = arith.constant 1 : index
      %c0_8 = arith.constant 0 : index
      %c0_9 = arith.constant 0 : index
      %11 = vector.load %arg2[%c1, %c0_8, %c0_9] : memref<9x4x4xf32, #tpu.memory_space<vmem>>, vector<1x4x4xf32>
      %12 = vector.shape_cast %11 : vector<1x4x4xf32> to vector<4x4xf32>
      %13 = vector.extract_strided_slice %5 {offsets = [0, 1], sizes = [4, 16], strides = [1, 1]} : vector<4x18xf32> to vector<4x16xf32>
      %cst_10 = arith.constant dense<0.000000e+00> : vector<4x16xf32>
      %14 = tpu.matmul %12, %13, %cst_10 {dimension_numbers = #tpu.dot_dimension_numbers<[1], [0], [0], [1], [0, 0, 1, 1], [], []>} : vector<4x4xf32>, vector<4x16xf32>, vector<4x16xf32> -> vector<4x16xf32>
      %15 = arith.addf %10, %14 : vector<4x16xf32>
      %c2 = arith.constant 2 : index
      %c0_11 = arith.constant 0 : index
      %c0_12 = arith.constant 0 : index
      %16 = vector.load %arg2[%c2, %c0_11, %c0_12] : memref<9x4x4xf32, #tpu.memory_space<vmem>>, vector<1x4x4xf32>
      %17 = vector.shape_cast %16 : vector<1x4x4xf32> to vector<4x4xf32>
      %18 = vector.extract_strided_slice %5 {offsets = [0, 2], sizes = [4, 16], strides = [1, 1]} : vector<4x18xf32> to vector<4x16xf32>
      %cst_13 = arith.constant dense<0.000000e+00> : vector<4x16xf32>
      %19 = tpu.matmul %17, %18, %cst_13 {dimension_numbers = #tpu.dot_dimension_numbers<[1], [0], [0], [1], [0, 0, 1, 1], [], []>} : vector<4x4xf32>, vector<4x16xf32>, vector<4x16xf32> -> vector<4x16xf32>
      %20 = arith.addf %15, %19 : vector<4x16xf32>
      %c1_i32_14 = arith.constant 1 : i32
      %21 = arith.addi %arg5, %c1_i32_14 : i32
      %c0_15 = arith.constant 0 : index
      %22 = arith.index_cast %21 : i32 to index
      %c0_16 = arith.constant 0 : index
      %c0_17 = arith.constant 0 : index
      %23 = vector.load %arg1[%c0_15, %22, %c0_16, %c0_17] : memref<1x18x4x18xf32, #tpu.memory_space<vmem>>, vector<1x1x4x18xf32>
      %24 = vector.shape_cast %23 : vector<1x1x4x18xf32> to vector<4x18xf32>
      %c3 = arith.constant 3 : index
      %c0_18 = arith.constant 0 : index
      %c0_19 = arith.constant 0 : index
      %25 = vector.load %arg2[%c3, %c0_18, %c0_19] : memref<9x4x4xf32, #tpu.memory_space<vmem>>, vector<1x4x4xf32>
      %26 = vector.shape_cast %25 : vector<1x4x4xf32> to vector<4x4xf32>
      %27 = vector.extract_strided_slice %24 {offsets = [0, 0], sizes = [4, 16], strides = [1, 1]} : vector<4x18xf32> to vector<4x16xf32>
      %cst_20 = arith.constant dense<0.000000e+00> : vector<4x16xf32>
      %28 = tpu.matmul %26, %27, %cst_20 {dimension_numbers = #tpu.dot_dimension_numbers<[1], [0], [0], [1], [0, 0, 1, 1], [], []>} : vector<4x4xf32>, vector<4x16xf32>, vector<4x16xf32> -> vector<4x16xf32>
      %29 = arith.addf %20, %28 : vector<4x16xf32>
      %c4 = arith.constant 4 : index
      %c0_21 = arith.constant 0 : index
      %c0_22 = arith.constant 0 : index
      %30 = vector.load %arg2[%c4, %c0_21, %c0_22] : memref<9x4x4xf32, #tpu.memory_space<vmem>>, vector<1x4x4xf32>
      %31 = vector.shape_cast %30 : vector<1x4x4xf32> to vector<4x4xf32>
      %32 = vector.extract_strided_slice %24 {offsets = [0, 1], sizes = [4, 16], strides = [1, 1]} : vector<4x18xf32> to vector<4x16xf32>
      %cst_23 = arith.constant dense<0.000000e+00> : vector<4x16xf32>
      %33 = tpu.matmul %31, %32, %cst_23 {dimension_numbers = #tpu.dot_dimension_numbers<[1], [0], [0], [1], [0, 0, 1, 1], [], []>} : vector<4x4xf32>, vector<4x16xf32>, vector<4x16xf32> -> vector<4x16xf32>
      %34 = arith.addf %29, %33 : vector<4x16xf32>
      %c5 = arith.constant 5 : index
      %c0_24 = arith.constant 0 : index
      %c0_25 = arith.constant 0 : index
      %35 = vector.load %arg2[%c5, %c0_24, %c0_25] : memref<9x4x4xf32, #tpu.memory_space<vmem>>, vector<1x4x4xf32>
      %36 = vector.shape_cast %35 : vector<1x4x4xf32> to vector<4x4xf32>
      %37 = vector.extract_strided_slice %24 {offsets = [0, 2], sizes = [4, 16], strides = [1, 1]} : vector<4x18xf32> to vector<4x16xf32>
      %cst_26 = arith.constant dense<0.000000e+00> : vector<4x16xf32>
      %38 = tpu.matmul %36, %37, %cst_26 {dimension_numbers = #tpu.dot_dimension_numbers<[1], [0], [0], [1], [0, 0, 1, 1], [], []>} : vector<4x4xf32>, vector<4x16xf32>, vector<4x16xf32> -> vector<4x16xf32>
      %39 = arith.addf %34, %38 : vector<4x16xf32>
      %c2_i32 = arith.constant 2 : i32
      %40 = arith.addi %arg5, %c2_i32 : i32
      %c0_27 = arith.constant 0 : index
      %41 = arith.index_cast %40 : i32 to index
      %c0_28 = arith.constant 0 : index
      %c0_29 = arith.constant 0 : index
      %42 = vector.load %arg1[%c0_27, %41, %c0_28, %c0_29] : memref<1x18x4x18xf32, #tpu.memory_space<vmem>>, vector<1x1x4x18xf32>
      %43 = vector.shape_cast %42 : vector<1x1x4x18xf32> to vector<4x18xf32>
      %c6 = arith.constant 6 : index
      %c0_30 = arith.constant 0 : index
      %c0_31 = arith.constant 0 : index
      %44 = vector.load %arg2[%c6, %c0_30, %c0_31] : memref<9x4x4xf32, #tpu.memory_space<vmem>>, vector<1x4x4xf32>
      %45 = vector.shape_cast %44 : vector<1x4x4xf32> to vector<4x4xf32>
      %46 = vector.extract_strided_slice %43 {offsets = [0, 0], sizes = [4, 16], strides = [1, 1]} : vector<4x18xf32> to vector<4x16xf32>
      %cst_32 = arith.constant dense<0.000000e+00> : vector<4x16xf32>
      %47 = tpu.matmul %45, %46, %cst_32 {dimension_numbers = #tpu.dot_dimension_numbers<[1], [0], [0], [1], [0, 0, 1, 1], [], []>} : vector<4x4xf32>, vector<4x16xf32>, vector<4x16xf32> -> vector<4x16xf32>
      %48 = arith.addf %39, %47 : vector<4x16xf32>
      %c7 = arith.constant 7 : index
      %c0_33 = arith.constant 0 : index
      %c0_34 = arith.constant 0 : index
      %49 = vector.load %arg2[%c7, %c0_33, %c0_34] : memref<9x4x4xf32, #tpu.memory_space<vmem>>, vector<1x4x4xf32>
      %50 = vector.shape_cast %49 : vector<1x4x4xf32> to vector<4x4xf32>
      %51 = vector.extract_strided_slice %43 {offsets = [0, 1], sizes = [4, 16], strides = [1, 1]} : vector<4x18xf32> to vector<4x16xf32>
      %cst_35 = arith.constant dense<0.000000e+00> : vector<4x16xf32>
      %52 = tpu.matmul %50, %51, %cst_35 {dimension_numbers = #tpu.dot_dimension_numbers<[1], [0], [0], [1], [0, 0, 1, 1], [], []>} : vector<4x4xf32>, vector<4x16xf32>, vector<4x16xf32> -> vector<4x16xf32>
      %53 = arith.addf %48, %52 : vector<4x16xf32>
      %c8 = arith.constant 8 : index
      %c0_36 = arith.constant 0 : index
      %c0_37 = arith.constant 0 : index
      %54 = vector.load %arg2[%c8, %c0_36, %c0_37] : memref<9x4x4xf32, #tpu.memory_space<vmem>>, vector<1x4x4xf32>
      %55 = vector.shape_cast %54 : vector<1x4x4xf32> to vector<4x4xf32>
      %56 = vector.extract_strided_slice %43 {offsets = [0, 2], sizes = [4, 16], strides = [1, 1]} : vector<4x18xf32> to vector<4x16xf32>
      %cst_38 = arith.constant dense<0.000000e+00> : vector<4x16xf32>
      %57 = tpu.matmul %55, %56, %cst_38 {dimension_numbers = #tpu.dot_dimension_numbers<[1], [0], [0], [1], [0, 0, 1, 1], [], []>} : vector<4x4xf32>, vector<4x16xf32>, vector<4x16xf32> -> vector<4x16xf32>
      %58 = arith.addf %53, %57 : vector<4x16xf32>
      %c0_39 = arith.constant 0 : index
      %c0_40 = arith.constant 0 : index
      %59 = vector.load %arg3[%c0_39, %c0_40] : memref<4x1xf32, #tpu.memory_space<vmem>>, vector<4x1xf32>
      %60 = vector.broadcast %59 : vector<4x1xf32> to vector<4x16xf32>
      %61 = arith.addf %58, %60 : vector<4x16xf32>
      %cst_41 = arith.constant 0.000000e+00 : f32
      %62 = vector.broadcast %cst_41 : f32 to vector<4x16xf32>
      %63 = arith.maximumf %61, %62 : vector<4x16xf32>
      %c0_42 = arith.constant 0 : index
      %64 = arith.index_cast %arg5 : i32 to index
      %c0_43 = arith.constant 0 : index
      %c0_44 = arith.constant 0 : index
      %65 = vector.load %arg4[%c0_42, %64, %c0_43, %c0_44] : memref<1x16x4x16xf32, #tpu.memory_space<vmem>>, vector<1x1x4x16xf32>
      %66 = vector.shape_cast %65 : vector<1x1x4x16xf32> to vector<4x16xf32>
      %67 = vector.shape_cast %63 : vector<4x16xf32> to vector<1x1x4x16xf32>
      tpu.vector_store %arg4[%c0_42, %64, %c0_43, %c0_44], %67 {strides = array<i32>} : memref<1x16x4x16xf32, #tpu.memory_space<vmem>>, vector<1x1x4x16xf32>,
    }
    %c16_i32_0 = arith.constant 16 : i32
    return
  }
  func.func @transform_0(%arg0: i32) -> (i32, i32, i32, i32) {
    %c0_i32 = arith.constant 0 : i32
    %c0_i32_0 = arith.constant 0 : i32
    %c0_i32_1 = arith.constant 0 : i32
    %c0_i32_2 = arith.constant 0 : i32
    return %arg0, %c0_i32, %c0_i32_0, %c0_i32_1 : i32, i32, i32, i32
  }
  func.func @transform_1(%arg0: i32) -> (i32, i32, i32) {
    %c0_i32 = arith.constant 0 : i32
    %c0_i32_0 = arith.constant 0 : i32
    %c0_i32_1 = arith.constant 0 : i32
    %c0_i32_2 = arith.constant 0 : i32
    return %c0_i32, %c0_i32_0, %c0_i32_1 : i32, i32, i32
  }
  func.func @transform_2(%arg0: i32) -> (i32, i32) {
    %c0_i32 = arith.constant 0 : i32
    %c0_i32_0 = arith.constant 0 : i32
    %c0_i32_1 = arith.constant 0 : i32
    return %c0_i32, %c0_i32_0 : i32, i32
  }
  func.func @transform_3(%arg0: i32) -> (i32, i32, i32, i32) {
    %c0_i32 = arith.constant 0 : i32
    %c0_i32_0 = arith.constant 0 : i32
    %c0_i32_1 = arith.constant 0 : i32
    %c0_i32_2 = arith.constant 0 : i32
    return %arg0, %c0_i32, %c0_i32_0, %c0_i32_1 : i32, i32, i32, i32
  }
}

module attributes {stable_mosaic.version = 11 : i64} {
  func.func @_conv3x3_kernel(%arg0: i32, %arg1: memref<1x18x8x18xf32, #tpu.memory_space<vmem>>, %arg2: memref<9x4x8xf32, #tpu.memory_space<vmem>>, %arg3: memref<4x1xf32, #tpu.memory_space<vmem>>, %arg4: memref<1x16x4x16xf32, #tpu.memory_space<vmem>>) attributes {dimension_semantics = [#tpu.dimension_semantics<parallel>], iteration_bounds = array<i64: 2>, scalar_prefetch = 0 : i64, scratch_operands = 0 : i64, tpu.core_type = #tpu.core_type<tc>, window_params = [{transform_indices = @transform_0, window_bounds = array<i64: 1, 18, 8, 18>}, {pipeline_mode = #tpu.pipeline_mode<synchronous>, transform_indices = @transform_1, window_bounds = array<i64: 9, 4, 8>}, {pipeline_mode = #tpu.pipeline_mode<synchronous>, transform_indices = @transform_2, window_bounds = array<i64: 4, 1>}, {transform_indices = @transform_3, window_bounds = array<i64: 1, 16, 4, 16>}]} {
    %c0_i32 = arith.constant 0 : i32
    %c16_i32 = arith.constant 16 : i32
    %0 = arith.addi %c0_i32, %c16_i32 : i32
    %c1_i32 = arith.constant 1 : i32
    scf.for %arg5 = %c0_i32 to %0 step %c1_i32  : i32 {
      %cst = arith.constant 0.000000e+00 : f32
      %1 = vector.broadcast %cst : f32 to vector<4x16xf32>
      %c0_i32_1 = arith.constant 0 : i32
      %2 = arith.addi %arg5, %c0_i32_1 : i32
      %c0 = arith.constant 0 : index
      %3 = arith.index_cast %2 : i32 to index
      %c0_2 = arith.constant 0 : index
      %c0_3 = arith.constant 0 : index
      %4 = vector.load %arg1[%c0, %3, %c0_2, %c0_3] : memref<1x18x8x18xf32, #tpu.memory_space<vmem>>, vector<1x1x8x18xf32>
      %5 = vector.shape_cast %4 : vector<1x1x8x18xf32> to vector<8x18xf32>
      %c0_4 = arith.constant 0 : index
      %c0_5 = arith.constant 0 : index
      %c0_6 = arith.constant 0 : index
      %6 = vector.load %arg2[%c0_4, %c0_5, %c0_6] : memref<9x4x8xf32, #tpu.memory_space<vmem>>, vector<1x4x8xf32>
      %7 = vector.shape_cast %6 : vector<1x4x8xf32> to vector<4x8xf32>
      %8 = vector.extract_strided_slice %5 {offsets = [0, 0], sizes = [8, 16], strides = [1, 1]} : vector<8x18xf32> to vector<8x16xf32>
      %cst_7 = arith.constant dense<0.000000e+00> : vector<4x16xf32>
      %9 = tpu.matmul %7, %8, %cst_7 {dimension_numbers = #tpu.dot_dimension_numbers<[1], [0], [0], [1], [0, 0, 1, 1], [], []>} : vector<4x8xf32>, vector<8x16xf32>, vector<4x16xf32> -> vector<4x16xf32>
      %10 = arith.addf %1, %9 : vector<4x16xf32>
      %c1 = arith.constant 1 : index
      %c0_8 = arith.constant 0 : index
      %c0_9 = arith.constant 0 : index
      %11 = vector.load %arg2[%c1, %c0_8, %c0_9] : memref<9x4x8xf32, #tpu.memory_space<vmem>>, vector<1x4x8xf32>
      %12 = vector.shape_cast %11 : vector<1x4x8xf32> to vector<4x8xf32>
      %13 = vector.extract_strided_slice %5 {offsets = [0, 1], sizes = [8, 16], strides = [1, 1]} : vector<8x18xf32> to vector<8x16xf32>
      %cst_10 = arith.constant dense<0.000000e+00> : vector<4x16xf32>
      %14 = tpu.matmul %12, %13, %cst_10 {dimension_numbers = #tpu.dot_dimension_numbers<[1], [0], [0], [1], [0, 0, 1, 1], [], []>} : vector<4x8xf32>, vector<8x16xf32>, vector<4x16xf32> -> vector<4x16xf32>
      %15 = arith.addf %10, %14 : vector<4x16xf32>
      %c2 = arith.constant 2 : index
      %c0_11 = arith.constant 0 : index
      %c0_12 = arith.constant 0 : index
      %16 = vector.load %arg2[%c2, %c0_11, %c0_12] : memref<9x4x8xf32, #tpu.memory_space<vmem>>, vector<1x4x8xf32>
      %17 = vector.shape_cast %16 : vector<1x4x8xf32> to vector<4x8xf32>
      %18 = vector.extract_strided_slice %5 {offsets = [0, 2], sizes = [8, 16], strides = [1, 1]} : vector<8x18xf32> to vector<8x16xf32>
      %cst_13 = arith.constant dense<0.000000e+00> : vector<4x16xf32>
      %19 = tpu.matmul %17, %18, %cst_13 {dimension_numbers = #tpu.dot_dimension_numbers<[1], [0], [0], [1], [0, 0, 1, 1], [], []>} : vector<4x8xf32>, vector<8x16xf32>, vector<4x16xf32> -> vector<4x16xf32>
      %20 = arith.addf %15, %19 : vector<4x16xf32>
      %c1_i32_14 = arith.constant 1 : i32
      %21 = arith.addi %arg5, %c1_i32_14 : i32
      %c0_15 = arith.constant 0 : index
      %22 = arith.index_cast %21 : i32 to index
      %c0_16 = arith.constant 0 : index
      %c0_17 = arith.constant 0 : index
      %23 = vector.load %arg1[%c0_15, %22, %c0_16, %c0_17] : memref<1x18x8x18xf32, #tpu.memory_space<vmem>>, vector<1x1x8x18xf32>
      %24 = vector.shape_cast %23 : vector<1x1x8x18xf32> to vector<8x18xf32>
      %c3 = arith.constant 3 : index
      %c0_18 = arith.constant 0 : index
      %c0_19 = arith.constant 0 : index
      %25 = vector.load %arg2[%c3, %c0_18, %c0_19] : memref<9x4x8xf32, #tpu.memory_space<vmem>>, vector<1x4x8xf32>
      %26 = vector.shape_cast %25 : vector<1x4x8xf32> to vector<4x8xf32>
      %27 = vector.extract_strided_slice %24 {offsets = [0, 0], sizes = [8, 16], strides = [1, 1]} : vector<8x18xf32> to vector<8x16xf32>
      %cst_20 = arith.constant dense<0.000000e+00> : vector<4x16xf32>
      %28 = tpu.matmul %26, %27, %cst_20 {dimension_numbers = #tpu.dot_dimension_numbers<[1], [0], [0], [1], [0, 0, 1, 1], [], []>} : vector<4x8xf32>, vector<8x16xf32>, vector<4x16xf32> -> vector<4x16xf32>
      %29 = arith.addf %20, %28 : vector<4x16xf32>
      %c4 = arith.constant 4 : index
      %c0_21 = arith.constant 0 : index
      %c0_22 = arith.constant 0 : index
      %30 = vector.load %arg2[%c4, %c0_21, %c0_22] : memref<9x4x8xf32, #tpu.memory_space<vmem>>, vector<1x4x8xf32>
      %31 = vector.shape_cast %30 : vector<1x4x8xf32> to vector<4x8xf32>
      %32 = vector.extract_strided_slice %24 {offsets = [0, 1], sizes = [8, 16], strides = [1, 1]} : vector<8x18xf32> to vector<8x16xf32>
      %cst_23 = arith.constant dense<0.000000e+00> : vector<4x16xf32>
      %33 = tpu.matmul %31, %32, %cst_23 {dimension_numbers = #tpu.dot_dimension_numbers<[1], [0], [0], [1], [0, 0, 1, 1], [], []>} : vector<4x8xf32>, vector<8x16xf32>, vector<4x16xf32> -> vector<4x16xf32>
      %34 = arith.addf %29, %33 : vector<4x16xf32>
      %c5 = arith.constant 5 : index
      %c0_24 = arith.constant 0 : index
      %c0_25 = arith.constant 0 : index
      %35 = vector.load %arg2[%c5, %c0_24, %c0_25] : memref<9x4x8xf32, #tpu.memory_space<vmem>>, vector<1x4x8xf32>
      %36 = vector.shape_cast %35 : vector<1x4x8xf32> to vector<4x8xf32>
      %37 = vector.extract_strided_slice %24 {offsets = [0, 2], sizes = [8, 16], strides = [1, 1]} : vector<8x18xf32> to vector<8x16xf32>
      %cst_26 = arith.constant dense<0.000000e+00> : vector<4x16xf32>
      %38 = tpu.matmul %36, %37, %cst_26 {dimension_numbers = #tpu.dot_dimension_numbers<[1], [0], [0], [1], [0, 0, 1, 1], [], []>} : vector<4x8xf32>, vector<8x16xf32>, vector<4x16xf32> -> vector<4x16xf32>
      %39 = arith.addf %34, %38 : vector<4x16xf32>
      %c2_i32 = arith.constant 2 : i32
      %40 = arith.addi %arg5, %c2_i32 : i32
      %c0_27 = arith.constant 0 : index
      %41 = arith.index_cast %40 : i32 to index
      %c0_28 = arith.constant 0 : index
      %c0_29 = arith.constant 0 : index
      %42 = vector.load %arg1[%c0_27, %41, %c0_28, %c0_29] : memref<1x18x8x18xf32, #tpu.memory_space<vmem>>, vector<1x1x8x18xf32>
      %43 = vector.shape_cast %42 : vector<1x1x8x18xf32> to vector<8x18xf32>
      %c6 = arith.constant 6 : index
      %c0_30 = arith.constant 0 : index
      %c0_31 = arith.constant 0 : index
      %44 = vector.load %arg2[%c6, %c0_30, %c0_31] : memref<9x4x8xf32, #tpu.memory_space<vmem>>, vector<1x4x8xf32>
      %45 = vector.shape_cast %44 : vector<1x4x8xf32> to vector<4x8xf32>
      %46 = vector.extract_strided_slice %43 {offsets = [0, 0], sizes = [8, 16], strides = [1, 1]} : vector<8x18xf32> to vector<8x16xf32>
      %cst_32 = arith.constant dense<0.000000e+00> : vector<4x16xf32>
      %47 = tpu.matmul %45, %46, %cst_32 {dimension_numbers = #tpu.dot_dimension_numbers<[1], [0], [0], [1], [0, 0, 1, 1], [], []>} : vector<4x8xf32>, vector<8x16xf32>, vector<4x16xf32> -> vector<4x16xf32>
      %48 = arith.addf %39, %47 : vector<4x16xf32>
      %c7 = arith.constant 7 : index
      %c0_33 = arith.constant 0 : index
      %c0_34 = arith.constant 0 : index
      %49 = vector.load %arg2[%c7, %c0_33, %c0_34] : memref<9x4x8xf32, #tpu.memory_space<vmem>>, vector<1x4x8xf32>
      %50 = vector.shape_cast %49 : vector<1x4x8xf32> to vector<4x8xf32>
      %51 = vector.extract_strided_slice %43 {offsets = [0, 1], sizes = [8, 16], strides = [1, 1]} : vector<8x18xf32> to vector<8x16xf32>
      %cst_35 = arith.constant dense<0.000000e+00> : vector<4x16xf32>
      %52 = tpu.matmul %50, %51, %cst_35 {dimension_numbers = #tpu.dot_dimension_numbers<[1], [0], [0], [1], [0, 0, 1, 1], [], []>} : vector<4x8xf32>, vector<8x16xf32>, vector<4x16xf32> -> vector<4x16xf32>
      %53 = arith.addf %48, %52 : vector<4x16xf32>
      %c8 = arith.constant 8 : index
      %c0_36 = arith.constant 0 : index
      %c0_37 = arith.constant 0 : index
      %54 = vector.load %arg2[%c8, %c0_36, %c0_37] : memref<9x4x8xf32, #tpu.memory_space<vmem>>, vector<1x4x8xf32>
      %55 = vector.shape_cast %54 : vector<1x4x8xf32> to vector<4x8xf32>
      %56 = vector.extract_strided_slice %43 {offsets = [0, 2], sizes = [8, 16], strides = [1, 1]} : vector<8x18xf32> to vector<8x16xf32>
      %cst_38 = arith.constant dense<0.000000e+00> : vector<4x16xf32>
      %57 = tpu.matmul %55, %56, %cst_38 {dimension_numbers = #tpu.dot_dimension_numbers<[1], [0], [0], [1], [0, 0, 1, 1], [], []>} : vector<4x8xf32>, vector<8x16xf32>, vector<4x16xf32> -> vector<4x16xf32>
      %58 = arith.addf %53, %57 : vector<4x16xf32>
      %c0_39 = arith.constant 0 : index
      %c0_40 = arith.constant 0 : index
      %59 = vector.load %arg3[%c0_39, %c0_40] : memref<4x1xf32, #tpu.memory_space<vmem>>, vector<4x1xf32>
      %60 = vector.broadcast %59 : vector<4x1xf32> to vector<4x16xf32>
      %61 = arith.addf %58, %60 : vector<4x16xf32>
      %cst_41 = arith.constant 0.000000e+00 : f32
      %62 = vector.broadcast %cst_41 : f32 to vector<4x16xf32>
      %63 = arith.maximumf %61, %62 : vector<4x16xf32>
      %c0_42 = arith.constant 0 : index
      %64 = arith.index_cast %arg5 : i32 to index
      %c0_43 = arith.constant 0 : index
      %c0_44 = arith.constant 0 : index
      %65 = vector.load %arg4[%c0_42, %64, %c0_43, %c0_44] : memref<1x16x4x16xf32, #tpu.memory_space<vmem>>, vector<1x1x4x16xf32>
      %66 = vector.shape_cast %65 : vector<1x1x4x16xf32> to vector<4x16xf32>
      %67 = vector.shape_cast %63 : vector<4x16xf32> to vector<1x1x4x16xf32>
      tpu.vector_store %arg4[%c0_42, %64, %c0_43, %c0_44], %67 {strides = array<i32>} : memref<1x16x4x16xf32, #tpu.memory_space<vmem>>, vector<1x1x4x16xf32>,
    }
    %c16_i32_0 = arith.constant 16 : i32
    return
  }
  func.func @transform_0(%arg0: i32) -> (i32, i32, i32, i32) {
    %c0_i32 = arith.constant 0 : i32
    %c0_i32_0 = arith.constant 0 : i32
    %c0_i32_1 = arith.constant 0 : i32
    %c0_i32_2 = arith.constant 0 : i32
    return %arg0, %c0_i32, %c0_i32_0, %c0_i32_1 : i32, i32, i32, i32
  }
  func.func @transform_1(%arg0: i32) -> (i32, i32, i32) {
    %c0_i32 = arith.constant 0 : i32
    %c0_i32_0 = arith.constant 0 : i32
    %c0_i32_1 = arith.constant 0 : i32
    %c0_i32_2 = arith.constant 0 : i32
    return %c0_i32, %c0_i32_0, %c0_i32_1 : i32, i32, i32
  }
  func.func @transform_2(%arg0: i32) -> (i32, i32) {
    %c0_i32 = arith.constant 0 : i32
    %c0_i32_0 = arith.constant 0 : i32
    %c0_i32_1 = arith.constant 0 : i32
    return %c0_i32, %c0_i32_0 : i32, i32
  }
  func.func @transform_3(%arg0: i32) -> (i32, i32, i32, i32) {
    %c0_i32 = arith.constant 0 : i32
    %c0_i32_0 = arith.constant 0 : i32
    %c0_i32_1 = arith.constant 0 : i32
    %c0_i32_2 = arith.constant 0 : i32
    return %arg0, %c0_i32, %c0_i32_0, %c0_i32_1 : i32, i32, i32, i32
  }
}

</mosaic_0001>

<llo_original>
// kernel: tile.0
$region0: #{tile.0}
  %s0 = inlined_call_operand.vmem [shape: f32[4,4], index: 0, kind: input, shape index: {}]
  %s1 = inlined_call_operand.vmem [shape: f32[16,1], index: 1, kind: output, shape index: {}]
  $region1: #{tile.0} parent=0
    #allocation0 [shape = 'u8[4096]{0}', space=vmem, size = 0x1000, scoped, tag = 'scoped mem for input reshape']
    %s3 = sshllo.u32 0, 4
    %v4 = vld [vmem:[%s0] sm:%s3]
    %5 = vst [vmem:[#allocation0] sm:%s3] %v4
    %v6 = vld [vmem:[#allocation0] sm:$0xf]
    %vm7 = vcmask 7168
    %8 = vst.msk [vmem:[%s1] ss:$4 sm:$0xf] %vm7, %v6
    %v9 = vld [vmem:[#allocation0] sm:$0xf]
    %10 = vrot.lane.b32.xlu0 %v9, 127
    %v11 = vpop.permute.xlu0 %10
    %vm12 = vcmask 7168
    %s13 = scalar_lea.vmem %s1, 1
    %14 = vst.msk [vmem:[%s13] ss:$4 sm:$0xf] %vm12, %v11
    %v15 = vld [vmem:[#allocation0] sm:$0xf]
    %16 = vrot.lane.b32.xlu0 %v15, 126
    %v17 = vpop.permute.xlu0 %16
    %vm18 = vcmask 7168
    %s19 = scalar_lea.vmem %s1, 2
    %20 = vst.msk [vmem:[%s19] ss:$4 sm:$0xf] %vm18, %v17
    %v21 = vld [vmem:[#allocation0] sm:$0xf]
    %22 = vrot.lane.b32.xlu0 %v21, 125
    %v23 = vpop.permute.xlu0 %22
    %vm24 = vcmask 7168
    %s25 = scalar_lea.vmem %s1, 3
    %26 = vst.msk [vmem:[%s25] ss:$4 sm:$0xf] %vm24, %v23

// kernel: tile.8
$region0: #{tile.8}
  #allocation0 [shape = 's32[1]{0}', space=sflag, size = 0x4, scoped, tag = 'scoped memory for tile.8']
  %s0 = inlined_call_operand.vmem [shape: f32[4], index: 0, kind: input, shape index: {}]
  %s1 = inlined_call_operand.vmem [shape: f32[4,4], index: 1, kind: output, shape index: {}]
  // Predicated region
  $region2: #{tile.8} parent=0 // pred_check
    _
  $region3: #{tile.8} parent=0 // pred_check_branch
    %3 = sbr.rel (0) target = $region5
  $region4: #{tile.8} parent=0 // pred_region
    _
  $region5: #{tile.8} parent=0 // pred_fallthru
    _
  %v4 = vld [vmem:[%s0] ss:$0 sm:$0xff]
  %5 = vst [vmem:[%s1] sm:$0xf] %v4

// kernel: up_transition.4
$region0: #{up_transition.4}
  #allocation0 [shape = 'u32[]', space=smem, size = 0x4, offset = 0x4, fixed_abs, tag = 'smem constant byte address 0x4 - core index']
  #allocation1 [shape = 'u32[144,128]{1,0:T(1,128)}', space=vmem, size = 0x12000, scoped, tag = 'internal scratch']
  %s0 = inlined_call_operand.vmem [shape: f32[2,8,64], index: 0, kind: input, shape index: {}]
  %s1 = inlined_call_operand.vmem [shape: f32[16,8], index: 1, kind: input, shape index: {}]
  %s2 = inlined_call_operand.vmem [shape: f32[16,1], index: 2, kind: input, shape index: {}]
  %s3 = inlined_call_operand.vmem [shape: f32[2,16,64], index: 3, kind: output, shape index: {}]
  %s4 = sld [smem:[#allocation0]]
  $region45: #{up_transition.4} parent=0
    _
  %s6 = ssub.s32 1, %s4
  %s7 = scalar_select 0, %s6, %s4
  loop: start=0, step=1, limit=4
  $region2: #{up_transition.4} parent=0 // loop_pre_header
    _
  $region3: #{up_transition.4} parent=0 // loop_header
    %s9 = sphi 0, %s13
    %p10 = scmp.ge.s32.totalorder %s9, 4
    %s16 = sphi 0, %s28
    %s17 = sphi 0, %s24
    %s18 = sphi 0, %s16
    %s19 = sphi 0, %s17
    %s20 = sphi 0, %s18
    %s21 = sphi 0, %s19
    %s33 = sphi 0, %s35
    %s36 = sphi 0, %s33
    %s37 = sphi 0, %s36
    %s53 = sphi 0, %s37
    %s57 = sphi 0, %s57
    %s59 = sphi 0, %s57
    %s60 = sphi 0, %s59
    %s74 = sphi 0, %s60
    %s78 = sphi 0, %s78
    %s80 = sphi 0, %s78
    %s81 = sphi 0, %s80
    %s95 = sphi 0, %s81
    %s103 = sphi 0, %s105
    %s106 = sphi 0, %s103
    %s107 = sphi 0, %s106
    %s123 = sphi 0, %s107
  $region4: #{up_transition.4} parent=0 // loop_header_branch
    %12 = sbr.rel (%p10) target = $region8
  $region5: #{up_transition.4} parent=0 // loop_body
    %s14 = ssub.s32 %s9, 1
    %s15 = ssub.s32 %s9, 2
    %s22 = sadd.s32 1, %s17
    %p23 = scmp.ge.s32.totalorder %s22, 1
    %s24 = scalar_select %p23, 0, %s22
    %s25 = sadd.s32 1, %s16
    %s26 = scalar_select %p23, %s25, %s16
    %p27 = scmp.ge.s32.totalorder %s26, 2
    %s28 = scalar_select %p27, 0, %s26
    %s29 = ssub.s32 %s16, %s28
    %s30 = ssub.s32 %s17, %s24
    %s31 = sor.u32 %s29, %s30
    %p32 = scmp.eq.s32.totalorder %s31, 0
    %s34 = sadd.s32 %s33, 1
    %s35 = scalar_select %p32, %s33, %s34
    %p38 = pneg %p32
    %p39 = scmp.eq.s32.totalorder %s9, 1
    %p40 = por %p38, %p39
    %p41 = scmp.ne.s32.totalorder %s33, %s36
    %p42 = scmp.eq.s32.totalorder %s9, 0
    %p43 = por %p41, %p42
    %p44 = scmp.ne.s32.totalorder %s33, %s36
    %p45 = scmp.eq.s32.totalorder %s14, 1
    %p46 = por %p44, %p45
    %p47 = scmp.ne.s32.totalorder %s36, %s37
    %p48 = scmp.eq.s32.totalorder %s14, 0
    %p49 = por %p47, %p48
    %p50 = scmp.ne.s32.totalorder %s36, %s37
    %p51 = scmp.eq.s32.totalorder %s15, 1
    %p52 = por %p50, %p51
    %p54 = scmp.ne.s32.totalorder %s37, %s53
    %p55 = scmp.eq.s32.totalorder %s15, 0
    %p56 = por %p54, %p55
    %s58 = sadd.s32 %s57, 1
    %p61 = scmp.eq.s32.totalorder %s9, 1
    %p62 = scmp.ne.s32.totalorder %s57, %s59
    %p63 = scmp.eq.s32.totalorder %s9, 0
    %p64 = por %p62, %p63
    %p65 = scmp.ne.s32.totalorder %s57, %s59
    %p66 = scmp.eq.s32.totalorder %s14, 1
    %p67 = por %p65, %p66
    %p68 = scmp.ne.s32.totalorder %s59, %s60
    %p69 = scmp.eq.s32.totalorder %s14, 0
    %p70 = por %p68, %p69
    %p71 = scmp.ne.s32.totalorder %s59, %s60
    %p72 = scmp.eq.s32.totalorder %s15, 1
    %p73 = por %p71, %p72
    %p75 = scmp.ne.s32.totalorder %s60, %s74
    %p76 = scmp.eq.s32.totalorder %s15, 0
    %p77 = por %p75, %p76
    %s79 = sadd.s32 %s78, 1
    %p82 = scmp.eq.s32.totalorder %s9, 1
    %p83 = scmp.ne.s32.totalorder %s78, %s80
    %p84 = scmp.eq.s32.totalorder %s9, 0
    %p85 = por %p83, %p84
    %p86 = scmp.ne.s32.totalorder %s78, %s80
    %p87 = scmp.eq.s32.totalorder %s14, 1
    %p88 = por %p86, %p87
    %p89 = scmp.ne.s32.totalorder %s80, %s81
    %p90 = scmp.eq.s32.totalorder %s14, 0
    %p91 = por %p89, %p90
    %p92 = scmp.ne.s32.totalorder %s80, %s81
    %p93 = scmp.eq.s32.totalorder %s15, 1
    %p94 = por %p92, %p93
    %p96 = scmp.ne.s32.totalorder %s81, %s95
    %p97 = scmp.eq.s32.totalorder %s15, 0
    %p98 = por %p96, %p97
    %s99 = ssub.s32 %s16, %s28
    %s100 = ssub.s32 %s17, %s24
    %s101 = sor.u32 %s99, %s100
    %p102 = scmp.eq.s32.totalorder %s101, 0
    %s104 = sadd.s32 %s103, 1
    %s105 = scalar_select %p102, %s103, %s104
    %p108 = pneg %p102
    %p109 = scmp.eq.s32.totalorder %s9, 1
    %p110 = por %p108, %p109
    %p111 = scmp.ne.s32.totalorder %s103, %s106
    %p112 = scmp.eq.s32.totalorder %s9, 0
    %p113 = por %p111, %p112
    %p114 = scmp.ne.s32.totalorder %s103, %s106
    %p115 = scmp.eq.s32.totalorder %s14, 1
    %p116 = por %p114, %p115
    %p117 = scmp.ne.s32.totalorder %s106, %s107
    %p118 = scmp.eq.s32.totalorder %s14, 0
    %p119 = por %p117, %p118
    %p120 = scmp.ne.s32.totalorder %s106, %s107
    %p121 = scmp.eq.s32.totalorder %s15, 1
    %p122 = por %p120, %p121
    %p124 = scmp.ne.s32.totalorder %s107, %s123
    %p125 = scmp.eq.s32.totalorder %s15, 0
    %p126 = por %p124, %p125
    %p127 = scmp.le.s32.totalorder 1, %s9
    %p128 = scmp.lt.s32.totalorder %s9, 3
    %p129 = pnand %p127, %p128
    %p130 = pneg %p129
    // Predicated region
    $region9: #{up_transition.4} parent=5 // pred_check
      _
    $region10: #{up_transition.4} parent=5 // pred_check_branch
      %132 = sbr.rel (%p129) target = $region12
    $region11: #{up_transition.4} parent=5 // pred_region
      %s133 = ssub.s32 %s9, 1
      // Predicated region
      $region13: #{up_transition.4} parent=11 // pred_check
        %p134 = pneg %p70
      $region14: #{up_transition.4} parent=11 // pred_check_branch
        %136 = sbr.rel (%p134) target = $region16
      $region15: #{up_transition.4} parent=11 // pred_region
        _
      $region16: #{up_transition.4} parent=11 // pred_fallthru
        _
      // Predicated region
      $region17: #{up_transition.4} parent=11 // pred_check
        %p137 = pneg %p91
      $region18: #{up_transition.4} parent=11 // pred_check_branch
        %139 = sbr.rel (%p137) target = $region20
      $region19: #{up_transition.4} parent=11 // pred_region
        _
      $region20: #{up_transition.4} parent=11 // pred_fallthru
        _
    $region12: #{up_transition.4} parent=5 // pred_fallthru
      _
    %p140 = scmp.lt.s32.totalorder %s9, 2
    // Predicated region
    $region21: #{up_transition.4} parent=5 // pred_check
      %p141 = pneg %p140
    $region22: #{up_transition.4} parent=5 // pred_check_branch
      %143 = sbr.rel (%p141) target = $region24
    $region23: #{up_transition.4} parent=5 // pred_region
      // Predicated region
      $region25: #{up_transition.4} parent=23 // pred_check
        %p144 = pneg %p43
      $region26: #{up_transition.4} parent=23 // pred_check_branch
        %146 = sbr.rel (%p144) target = $region28
      $region27: #{up_transition.4} parent=23 // pred_region
        %p147 = scmp.lt.s32.totalorder %s16, 1
        %s148 = scalar_select %p147, %s16, 1
        %p149 = scmp.lt.s32.totalorder %s17, 0
        %s150 = scalar_select %p149, %s17, 0
        %s151 = sadd.s32 %s150, %s148
        %s152 = smul.addr %s151, 8
        %s153 = scalar_lea.vmem %s0, %s152
      $region28: #{up_transition.4} parent=23 // pred_fallthru
        _
    $region24: #{up_transition.4} parent=5 // pred_fallthru
      _
    %p154 = scmp.le.s32.totalorder 1, %s9
    %p155 = scmp.lt.s32.totalorder %s9, 3
    %p156 = pnand %p154, %p155
    %p157 = pneg %p156
    // Predicated region
    $region29: #{up_transition.4} parent=5 // pred_check
      _
    $region30: #{up_transition.4} parent=5 // pred_check_branch
      %159 = sbr.rel (%p156) target = $region32
    $region31: #{up_transition.4} parent=5 // pred_region
      %s160 = ssub.s32 %s9, 1
      %p161 = scmp.lt.s32.totalorder %s18, 1
      %s162 = scalar_select %p161, %s18, 1
      %p163 = scmp.lt.s32.totalorder %s19, 0
      %s164 = scalar_select %p163, %s19, 0
      %s165 = sadd.s32 %s164, %s162
      %s166 = smul.addr %s165, 8
      %s167 = scalar_lea.vmem %s0, %s166
      %p168 = pneg %p49
      %p169 = pneg %p46
      %p170 = pneg %p70
      %p171 = pneg %p67
      %p172 = pneg %p91
      %p173 = pneg %p88
      %p174 = pneg %p119
      %p175 = pneg %p116
      %p176 = scmp.lt.s32.totalorder %s18, 1
      %s177 = scalar_select %p176, %s18, 1
      %p178 = scmp.lt.s32.totalorder %s19, 0
      %s179 = scalar_select %p178, %s19, 0
      %s180 = smul.addr %s177, 2
      %s181 = sadd.s32 %s179, %s180
      %s182 = smul.addr %s181, 8
      %s183 = scalar_lea.vmem %s3, %s182
      %p184 = scmp.lt.s32.totalorder %s18, 1
      %s185 = scalar_select %p184, %s18, 1
      %p186 = scmp.lt.s32.totalorder %s19, 0
      %s187 = scalar_select %p186, %s19, 0
      %s188 = sadd.s32 %s187, %s185
      %s189 = smul.addr %s188, 8
      %s190 = scalar_lea.vmem %s0, %s189
      %p191 = scmp.lt.s32.totalorder %s18, 1
      %s192 = scalar_select %p191, %s18, 1
      %p193 = scmp.lt.s32.totalorder %s19, 0
      %s194 = scalar_select %p193, %s19, 0
      %s195 = smul.addr %s192, 2
      %s196 = sadd.s32 %s194, %s195
      %s197 = smul.addr %s196, 8
      %s198 = scalar_lea.vmem %s3, %s197
      %v199 = vld [vmem:[%s1] sm:$0xff]
      %v200 = vld [vmem:[%s1 + $0x8] sm:$0xff]
      %v201 = vld [vmem:[%s190] sm:$0xff]
      %v202 = vld [vmem:[%s2] sm:$0xff]
      %v203 = vld [vmem:[%s2 + $0x8] sm:$0xff]
      %205 = vset.pattern.permute.xlu0 0
      %206 = vperm.xlu0 %205, %v202
      %v207 = vpop.permute.xlu0 %206
      %210 = vset.pattern.permute.xlu0 0
      %211 = vperm.xlu0 %210, %v203
      %v212 = vpop.permute.xlu0 %211
      %vm214 = vcmask 64512
      %v216 = vsel %vm214, %v199, 0
      %v219 = vsel %vm214, %v200, 0
      %221 = vmatprep.subr.mxu0 0.0
      %222 = vmatpush1.msra.mxu0 %v201
      %223 = vmatprep.subr.mxu0 0.0
      %224 = vmatpush1.msra.mxu0 0.0
      %225 = vmatprep.subr.mxu0 0.0
      %226 = vmatpush1.msra.mxu0 0.0
      %227 = vmatprep.subr.mxu0 0.0
      %228 = vmatpush1.msra.mxu0 0.0
      %229 = vmatprep.subr.mxu0 0.0
      %230 = vmatpush1.msra.mxu0 0.0
      %231 = vmatprep.subr.mxu0 0.0
      %232 = vmatpush1.msra.mxu0 0.0
      %233 = vmatprep.subr.mxu0 0.0
      %234 = vmatpush1.msra.mxu0 0.0
      %235 = vmatprep.subr.mxu0 0.0
      %236 = vmatpush1.msra.mxu0 0.0
      %237 = vmatprep.subr.mxu0 0.0
      %238 = vmatpush1.msra.mxu0 0.0
      %239 = vmatprep.subr.mxu0 0.0
      %240 = vmatpush1.msra.mxu0 0.0
      %241 = vmatprep.subr.mxu0 0.0
      %242 = vmatpush1.msra.mxu0 0.0
      %243 = vmatprep.subr.mxu0 0.0
      %244 = vmatpush1.msra.mxu0 0.0
      %245 = vmatprep.subr.mxu0 0.0
      %246 = vmatpush1.msra.mxu0 0.0
      %247 = vmatprep.subr.mxu0 0.0
      %248 = vmatpush1.msra.mxu0 0.0
      %249 = vmatprep.subr.mxu0 0.0
      %250 = vmatpush1.msra.mxu0 0.0
      %251 = vmatprep.subr.mxu0 0.0
      %252 = vmatpush1.msra.mxu0 0.0
      %253 = vmatprep.subr.mxu0 0.0
      %254 = vmatpush1.msra.mxu0 0.0
      %255 = vmatprep.subr.mxu0 0.0
      %256 = vmatpush1.msra.mxu0 0.0
      %257 = vmatprep.subr.mxu0 0.0
      %258 = vmatpush1.msra.mxu0 0.0
      %259 = vmatprep.subr.mxu0 0.0
      %260 = vmatpush1.msra.mxu0 0.0
      %261 = vmatprep.subr.mxu0 0.0
      %262 = vmatpush1.msra.mxu0 0.0
      %263 = vmatprep.subr.mxu0 0.0
      %264 = vmatpush1.msra.mxu0 0.0
      %265 = vmatprep.subr.mxu0 0.0
      %266 = vmatpush1.msra.mxu0 0.0
      %267 = vmatprep.subr.mxu0 0.0
      %268 = vmatpush1.msra.mxu0 0.0
      %269 = vmatprep.subr.mxu0 0.0
      %270 = vmatpush1.msra.mxu0 0.0
      %271 = vmatprep.subr.mxu0 0.0
      %272 = vmatpush1.msra.mxu0 0.0
      %273 = vmatprep.subr.mxu0 0.0
      %274 = vmatpush1.msra.mxu0 0.0
      %275 = vmatprep.subr.mxu0 0.0
      %276 = vmatpush1.msra.mxu0 0.0
      %277 = vmatprep.subr.mxu0 0.0
      %278 = vmatpush1.msra.mxu0 0.0
      %279 = vmatprep.subr.mxu0 0.0
      %280 = vmatpush1.msra.mxu0 0.0
      %281 = vmatprep.subr.mxu0 0.0
      %282 = vmatpush1.msra.mxu0 0.0
      %283 = vmatprep.subr.mxu0 0.0
      %284 = vmatpush1.msra.mxu0 0.0
      %285 = vmatprep.mubr.f32.mxu0 0.0
      %286 = vmatmul.mubr.f32.gmra.mrb[0].mxu0 %v216
      %v287 = vpop.f32.mrb[0].mxu0
      %v288 = vadd.f32 %v207, %v287
      %v289 = vpop.f32.mrb[0].mxu0
      %290 = vmatprep.mubr.f32.mxu0 0.0
      %291 = vmatmul.mubr.f32.gmra.mrb[0].mxu0 %v219
      %v292 = vpop.f32.mrb[0].mxu0
      %v293 = vadd.f32 %v212, %v292
      %v294 = vpop.f32.mrb[0].mxu0
      %295 = vdwg.mxu0
      %vm296 = vcmask 523264
      %297 = vst.msk [vmem:[%s198] sm:$0xff] %vm296, %v288
      %298 = vst.msk [vmem:[%s198 + $0x8] sm:$0xff] %vm296, %v293
      %p299 = scmp.lt.s32.totalorder %s18, 1
      %s300 = scalar_select %p299, %s18, 1
      %p301 = scmp.lt.s32.totalorder %s19, 0
      %s302 = scalar_select %p301, %s19, 0
      %s303 = smul.addr %s300, 2
      %s304 = sadd.s32 %s302, %s303
      %s305 = smul.addr %s304, 8
      %s306 = scalar_lea.vmem %s3, %s305
      // Predicated region
      $region33: #{up_transition.4} parent=31 // pred_check
        %p307 = pneg %p116
      $region34: #{up_transition.4} parent=31 // pred_check_branch
        %309 = sbr.rel (%p307) target = $region36
      $region35: #{up_transition.4} parent=31 // pred_region
        _
      $region36: #{up_transition.4} parent=31 // pred_fallthru
        _
    $region32: #{up_transition.4} parent=5 // pred_fallthru
      _
    %p310 = scmp.le.s32.totalorder 2, %s9
    // Predicated region
    $region37: #{up_transition.4} parent=5 // pred_check
      %p311 = pneg %p310
    $region38: #{up_transition.4} parent=5 // pred_check_branch
      %313 = sbr.rel (%p311) target = $region40
    $region39: #{up_transition.4} parent=5 // pred_region
      %s314 = ssub.s32 %s9, 2
      // Predicated region
      $region41: #{up_transition.4} parent=39 // pred_check
        %p315 = pneg %p122
      $region42: #{up_transition.4} parent=39 // pred_check_branch
        %317 = sbr.rel (%p315) target = $region44
      $region43: #{up_transition.4} parent=39 // pred_region
        %p318 = scmp.lt.s32.totalorder %s20, 1
        %s319 = scalar_select %p318, %s20, 1
        %p320 = scmp.lt.s32.totalorder %s21, 0
        %s321 = scalar_select %p320, %s21, 0
        %s322 = smul.addr %s319, 2
        %s323 = sadd.s32 %s321, %s322
        %s324 = smul.addr %s323, 8
        %s325 = scalar_lea.vmem %s3, %s324
      $region44: #{up_transition.4} parent=39 // pred_fallthru
        _
    $region40: #{up_transition.4} parent=5 // pred_fallthru
      _
  $region6: #{up_transition.4} parent=0 // loop_footer
    %s13 = sadd.s32 1, %s9
  $region7: #{up_transition.4} parent=0 // loop_footer_branch
    %8 = sbr.rel target = $region3
  $region8: #{up_transition.4} parent=0 // loop_exit
    _

// kernel: up_transition.5
$region0: #{up_transition.5}
  #allocation0 [shape = 'u32[]', space=smem, size = 0x4, offset = 0x4, fixed_abs, tag = 'smem constant byte address 0x4 - core index']
  #allocation1 [shape = 'u32[144,128]{1,0:T(1,128)}', space=vmem, size = 0x12000, scoped, tag = 'internal scratch']
  #allocation2 [shape = 'f32[1,1]{1,0:T(1,128)S(1)}', space=vmem, size = 0x200, scoped, tag = 'scoped memory for up_transition.5']
  %s0 = inlined_call_operand.vmem [shape: f32[2,4,256], index: 0, kind: input, shape index: {}]
  %s1 = inlined_call_operand.vmem [shape: f32[2,4,256], index: 1, kind: input, shape index: {}]
  %s2 = inlined_call_operand.vmem [shape: f32[2,4], index: 2, kind: input, shape index: {}]
  %s3 = inlined_call_operand.vmem [shape: f32[2,1], index: 3, kind: input, shape index: {}]
  %s4 = inlined_call_operand.vmem [shape: f32[2,4], index: 4, kind: input, shape index: {}]
  %s5 = inlined_call_operand.vmem [shape: f32[2,1], index: 5, kind: input, shape index: {}]
  %s6 = inlined_call_operand.vmem [shape: f32[1,2], index: 6, kind: input, shape index: {}]
  %s7 = inlined_call_operand.<no memory space> [shape: f32[1,1], index: 7, kind: input, shape index: {}]
  %s8 = inlined_call_operand.vmem [shape: f32[2,4,256], index: 8, kind: output, shape index: {}]
  %s9 = sld [smem:[#allocation0]]
  $region65: #{up_transition.5} parent=0
    _
  %s11 = ssub.s32 1, %s9
  %s12 = scalar_select 0, %s11, %s9
  %v13 = vstv %s7
  %14 = vst [vmem:[#allocation2] sm:$0x1] %v13
  loop: start=0, step=1, limit=4
  $region2: #{up_transition.5} parent=0 // loop_pre_header
    _
  $region3: #{up_transition.5} parent=0 // loop_header
    %s16 = sphi 0, %s20
    %p17 = scmp.ge.s32.totalorder %s16, 4
    %s23 = sphi 0, %s35
    %s24 = sphi 0, %s31
    %s25 = sphi 0, %s23
    %s26 = sphi 0, %s24
    %s27 = sphi 0, %s25
    %s28 = sphi 0, %s26
    %s40 = sphi 0, %s42
    %s43 = sphi 0, %s40
    %s44 = sphi 0, %s43
    %s60 = sphi 0, %s44
    %s68 = sphi 0, %s70
    %s71 = sphi 0, %s68
    %s72 = sphi 0, %s71
    %s88 = sphi 0, %s72
    %s92 = sphi 0, %s92
    %s94 = sphi 0, %s92
    %s95 = sphi 0, %s94
    %s109 = sphi 0, %s95
    %s113 = sphi 0, %s113
    %s115 = sphi 0, %s113
    %s116 = sphi 0, %s115
    %s130 = sphi 0, %s116
    %s134 = sphi 0, %s134
    %s136 = sphi 0, %s134
    %s137 = sphi 0, %s136
    %s151 = sphi 0, %s137
    %s155 = sphi 0, %s155
    %s157 = sphi 0, %s155
    %s158 = sphi 0, %s157
    %s172 = sphi 0, %s158
    %s176 = sphi 0, %s176
    %s178 = sphi 0, %s176
    %s179 = sphi 0, %s178
    %s193 = sphi 0, %s179
    %s197 = sphi 0, %s197
    %s199 = sphi 0, %s197
    %s200 = sphi 0, %s199
    %s214 = sphi 0, %s200
    %s222 = sphi 0, %s224
    %s225 = sphi 0, %s222
    %s226 = sphi 0, %s225
    %s242 = sphi 0, %s226
  $region4: #{up_transition.5} parent=0 // loop_header_branch
    %19 = sbr.rel (%p17) target = $region8
  $region5: #{up_transition.5} parent=0 // loop_body
    %s21 = ssub.s32 %s16, 1
    %s22 = ssub.s32 %s16, 2
    %s29 = sadd.s32 1, %s24
    %p30 = scmp.ge.s32.totalorder %s29, 1
    %s31 = scalar_select %p30, 0, %s29
    %s32 = sadd.s32 1, %s23
    %s33 = scalar_select %p30, %s32, %s23
    %p34 = scmp.ge.s32.totalorder %s33, 2
    %s35 = scalar_select %p34, 0, %s33
    %s36 = ssub.s32 %s23, %s35
    %s37 = ssub.s32 %s24, %s31
    %s38 = sor.u32 %s36, %s37
    %p39 = scmp.eq.s32.totalorder %s38, 0
    %s41 = sadd.s32 %s40, 1
    %s42 = scalar_select %p39, %s40, %s41
    %p45 = pneg %p39
    %p46 = scmp.eq.s32.totalorder %s16, 1
    %p47 = por %p45, %p46
    %p48 = scmp.ne.s32.totalorder %s40, %s43
    %p49 = scmp.eq.s32.totalorder %s16, 0
    %p50 = por %p48, %p49
    %p51 = scmp.ne.s32.totalorder %s40, %s43
    %p52 = scmp.eq.s32.totalorder %s21, 1
    %p53 = por %p51, %p52
    %p54 = scmp.ne.s32.totalorder %s43, %s44
    %p55 = scmp.eq.s32.totalorder %s21, 0
    %p56 = por %p54, %p55
    %p57 = scmp.ne.s32.totalorder %s43, %s44
    %p58 = scmp.eq.s32.totalorder %s22, 1
    %p59 = por %p57, %p58
    %p61 = scmp.ne.s32.totalorder %s44, %s60
    %p62 = scmp.eq.s32.totalorder %s22, 0
    %p63 = por %p61, %p62
    %s64 = ssub.s32 %s23, %s35
    %s65 = ssub.s32 %s24, %s31
    %s66 = sor.u32 %s64, %s65
    %p67 = scmp.eq.s32.totalorder %s66, 0
    %s69 = sadd.s32 %s68, 1
    %s70 = scalar_select %p67, %s68, %s69
    %p73 = pneg %p67
    %p74 = scmp.eq.s32.totalorder %s16, 1
    %p75 = por %p73, %p74
    %p76 = scmp.ne.s32.totalorder %s68, %s71
    %p77 = scmp.eq.s32.totalorder %s16, 0
    %p78 = por %p76, %p77
    %p79 = scmp.ne.s32.totalorder %s68, %s71
    %p80 = scmp.eq.s32.totalorder %s21, 1
    %p81 = por %p79, %p80
    %p82 = scmp.ne.s32.totalorder %s71, %s72
    %p83 = scmp.eq.s32.totalorder %s21, 0
    %p84 = por %p82, %p83
    %p85 = scmp.ne.s32.totalorder %s71, %s72
    %p86 = scmp.eq.s32.totalorder %s22, 1
    %p87 = por %p85, %p86
    %p89 = scmp.ne.s32.totalorder %s72, %s88
    %p90 = scmp.eq.s32.totalorder %s22, 0
    %p91 = por %p89, %p90
    %s93 = sadd.s32 %s92, 1
    %p96 = scmp.eq.s32.totalorder %s16, 1
    %p97 = scmp.ne.s32.totalorder %s92, %s94
    %p98 = scmp.eq.s32.totalorder %s16, 0
    %p99 = por %p97, %p98
    %p100 = scmp.ne.s32.totalorder %s92, %s94
    %p101 = scmp.eq.s32.totalorder %s21, 1
    %p102 = por %p100, %p101
    %p103 = scmp.ne.s32.totalorder %s94, %s95
    %p104 = scmp.eq.s32.totalorder %s21, 0
    %p105 = por %p103, %p104
    %p106 = scmp.ne.s32.totalorder %s94, %s95
    %p107 = scmp.eq.s32.totalorder %s22, 1
    %p108 = por %p106, %p107
    %p110 = scmp.ne.s32.totalorder %s95, %s109
    %p111 = scmp.eq.s32.totalorder %s22, 0
    %p112 = por %p110, %p111
    %s114 = sadd.s32 %s113, 1
    %p117 = scmp.eq.s32.totalorder %s16, 1
    %p118 = scmp.ne.s32.totalorder %s113, %s115
    %p119 = scmp.eq.s32.totalorder %s16, 0
    %p120 = por %p118, %p119
    %p121 = scmp.ne.s32.totalorder %s113, %s115
    %p122 = scmp.eq.s32.totalorder %s21, 1
    %p123 = por %p121, %p122
    %p124 = scmp.ne.s32.totalorder %s115, %s116
    %p125 = scmp.eq.s32.totalorder %s21, 0
    %p126 = por %p124, %p125
    %p127 = scmp.ne.s32.totalorder %s115, %s116
    %p128 = scmp.eq.s32.totalorder %s22, 1
    %p129 = por %p127, %p128
    %p131 = scmp.ne.s32.totalorder %s116, %s130
    %p132 = scmp.eq.s32.totalorder %s22, 0
    %p133 = por %p131, %p132
    %s135 = sadd.s32 %s134, 1
    %p138 = scmp.eq.s32.totalorder %s16, 1
    %p139 = scmp.ne.s32.totalorder %s134, %s136
    %p140 = scmp.eq.s32.totalorder %s16, 0
    %p141 = por %p139, %p140
    %p142 = scmp.ne.s32.totalorder %s134, %s136
    %p143 = scmp.eq.s32.totalorder %s21, 1
    %p144 = por %p142, %p143
    %p145 = scmp.ne.s32.totalorder %s136, %s137
    %p146 = scmp.eq.s32.totalorder %s21, 0
    %p147 = por %p145, %p146
    %p148 = scmp.ne.s32.totalorder %s136, %s137
    %p149 = scmp.eq.s32.totalorder %s22, 1
    %p150 = por %p148, %p149
    %p152 = scmp.ne.s32.totalorder %s137, %s151
    %p153 = scmp.eq.s32.totalorder %s22, 0
    %p154 = por %p152, %p153
    %s156 = sadd.s32 %s155, 1
    %p159 = scmp.eq.s32.totalorder %s16, 1
    %p160 = scmp.ne.s32.totalorder %s155, %s157
    %p161 = scmp.eq.s32.totalorder %s16, 0
    %p162 = por %p160, %p161
    %p163 = scmp.ne.s32.totalorder %s155, %s157
    %p164 = scmp.eq.s32.totalorder %s21, 1
    %p165 = por %p163, %p164
    %p166 = scmp.ne.s32.totalorder %s157, %s158
    %p167 = scmp.eq.s32.totalorder %s21, 0
    %p168 = por %p166, %p167
    %p169 = scmp.ne.s32.totalorder %s157, %s158
    %p170 = scmp.eq.s32.totalorder %s22, 1
    %p171 = por %p169, %p170
    %p173 = scmp.ne.s32.totalorder %s158, %s172
    %p174 = scmp.eq.s32.totalorder %s22, 0
    %p175 = por %p173, %p174
    %s177 = sadd.s32 %s176, 1
    %p180 = scmp.eq.s32.totalorder %s16, 1
    %p181 = scmp.ne.s32.totalorder %s176, %s178
    %p182 = scmp.eq.s32.totalorder %s16, 0
    %p183 = por %p181, %p182
    %p184 = scmp.ne.s32.totalorder %s176, %s178
    %p185 = scmp.eq.s32.totalorder %s21, 1
    %p186 = por %p184, %p185
    %p187 = scmp.ne.s32.totalorder %s178, %s179
    %p188 = scmp.eq.s32.totalorder %s21, 0
    %p189 = por %p187, %p188
    %p190 = scmp.ne.s32.totalorder %s178, %s179
    %p191 = scmp.eq.s32.totalorder %s22, 1
    %p192 = por %p190, %p191
    %p194 = scmp.ne.s32.totalorder %s179, %s193
    %p195 = scmp.eq.s32.totalorder %s22, 0
    %p196 = por %p194, %p195
    %s198 = sadd.s32 %s197, 1
    %p201 = scmp.eq.s32.totalorder %s16, 1
    %p202 = scmp.ne.s32.totalorder %s197, %s199
    %p203 = scmp.eq.s32.totalorder %s16, 0
    %p204 = por %p202, %p203
    %p205 = scmp.ne.s32.totalorder %s197, %s199
    %p206 = scmp.eq.s32.totalorder %s21, 1
    %p207 = por %p205, %p206
    %p208 = scmp.ne.s32.totalorder %s199, %s200
    %p209 = scmp.eq.s32.totalorder %s21, 0
    %p210 = por %p208, %p209
    %p211 = scmp.ne.s32.totalorder %s199, %s200
    %p212 = scmp.eq.s32.totalorder %s22, 1
    %p213 = por %p211, %p212
    %p215 = scmp.ne.s32.totalorder %s200, %s214
    %p216 = scmp.eq.s32.totalorder %s22, 0
    %p217 = por %p215, %p216
    %s218 = ssub.s32 %s23, %s35
    %s219 = ssub.s32 %s24, %s31
    %s220 = sor.u32 %s218, %s219
    %p221 = scmp.eq.s32.totalorder %s220, 0
    %s223 = sadd.s32 %s222, 1
    %s224 = scalar_select %p221, %s222, %s223
    %p227 = pneg %p221
    %p228 = scmp.eq.s32.totalorder %s16, 1
    %p229 = por %p227, %p228
    %p230 = scmp.ne.s32.totalorder %s222, %s225
    %p231 = scmp.eq.s32.totalorder %s16, 0
    %p232 = por %p230, %p231
    %p233 = scmp.ne.s32.totalorder %s222, %s225
    %p234 = scmp.eq.s32.totalorder %s21, 1
    %p235 = por %p233, %p234
    %p236 = scmp.ne.s32.totalorder %s225, %s226
    %p237 = scmp.eq.s32.totalorder %s21, 0
    %p238 = por %p236, %p237
    %p239 = scmp.ne.s32.totalorder %s225, %s226
    %p240 = scmp.eq.s32.totalorder %s22, 1
    %p241 = por %p239, %p240
    %p243 = scmp.ne.s32.totalorder %s226, %s242
    %p244 = scmp.eq.s32.totalorder %s22, 0
    %p245 = por %p243, %p244
    %p246 = scmp.le.s32.totalorder 1, %s16
    %p247 = scmp.lt.s32.totalorder %s16, 3
    %p248 = pnand %p246, %p247
    %p249 = pneg %p248
    // Predicated region
    $region9: #{up_transition.5} parent=5 // pred_check
      _
    $region10: #{up_transition.5} parent=5 // pred_check_branch
      %251 = sbr.rel (%p248) target = $region12
    $region11: #{up_transition.5} parent=5 // pred_region
      %s252 = ssub.s32 %s16, 1
      // Predicated region
      $region13: #{up_transition.5} parent=11 // pred_check
        %p253 = pneg %p105
      $region14: #{up_transition.5} parent=11 // pred_check_branch
        %255 = sbr.rel (%p253) target = $region16
      $region15: #{up_transition.5} parent=11 // pred_region
        _
      $region16: #{up_transition.5} parent=11 // pred_fallthru
        _
      // Predicated region
      $region17: #{up_transition.5} parent=11 // pred_check
        %p256 = pneg %p126
      $region18: #{up_transition.5} parent=11 // pred_check_branch
        %258 = sbr.rel (%p256) target = $region20
      $region19: #{up_transition.5} parent=11 // pred_region
        _
      $region20: #{up_transition.5} parent=11 // pred_fallthru
        _
      // Predicated region
      $region21: #{up_transition.5} parent=11 // pred_check
        %p259 = pneg %p147
      $region22: #{up_transition.5} parent=11 // pred_check_branch
        %261 = sbr.rel (%p259) target = $region24
      $region23: #{up_transition.5} parent=11 // pred_region
        _
      $region24: #{up_transition.5} parent=11 // pred_fallthru
        _
      // Predicated region
      $region25: #{up_transition.5} parent=11 // pred_check
        %p262 = pneg %p168
      $region26: #{up_transition.5} parent=11 // pred_check_branch
        %264 = sbr.rel (%p262) target = $region28
      $region27: #{up_transition.5} parent=11 // pred_region
        _
      $region28: #{up_transition.5} parent=11 // pred_fallthru
        _
      // Predicated region
      $region29: #{up_transition.5} parent=11 // pred_check
        %p265 = pneg %p189
      $region30: #{up_transition.5} parent=11 // pred_check_branch
        %267 = sbr.rel (%p265) target = $region32
      $region31: #{up_transition.5} parent=11 // pred_region
        _
      $region32: #{up_transition.5} parent=11 // pred_fallthru
        _
      // Predicated region
      $region33: #{up_transition.5} parent=11 // pred_check
        %p268 = pneg %p210
      $region34: #{up_transition.5} parent=11 // pred_check_branch
        %270 = sbr.rel (%p268) target = $region36
      $region35: #{up_transition.5} parent=11 // pred_region
        _
      $region36: #{up_transition.5} parent=11 // pred_fallthru
        _
    $region12: #{up_transition.5} parent=5 // pred_fallthru
      _
    %p271 = scmp.lt.s32.totalorder %s16, 2
    // Predicated region
    $region37: #{up_transition.5} parent=5 // pred_check
      %p272 = pneg %p271
    $region38: #{up_transition.5} parent=5 // pred_check_branch
      %274 = sbr.rel (%p272) target = $region40
    $region39: #{up_transition.5} parent=5 // pred_region
      // Predicated region
      $region41: #{up_transition.5} parent=39 // pred_check
        %p275 = pneg %p50
      $region42: #{up_transition.5} parent=39 // pred_check_branch
        %277 = sbr.rel (%p275) target = $region44
      $region43: #{up_transition.5} parent=39 // pred_region
        %s278 = smul.u32 2, %s24
        %p279 = scmp.lt.s32.totalorder %s23, 1
        %s280 = scalar_select %p279, %s23, 1
        %p281 = scmp.lt.s32.totalorder %s278, 1
        %s282 = scalar_select %p281, %s278, 1
        %s283 = smul.addr %s280, 2
        %s284 = sadd.s32 %s282, %s283
        %s285 = smul.addr %s284, 4
        %s286 = scalar_lea.vmem %s0, %s285
        %s287 = smul.u32 2, %s24
      $region44: #{up_transition.5} parent=39 // pred_fallthru
        _
      // Predicated region
      $region45: #{up_transition.5} parent=39 // pred_check
        %p288 = pneg %p78
      $region46: #{up_transition.5} parent=39 // pred_check_branch
        %290 = sbr.rel (%p288) target = $region48
      $region47: #{up_transition.5} parent=39 // pred_region
        %s291 = smul.u32 2, %s24
        %p292 = scmp.lt.s32.totalorder %s23, 1
        %s293 = scalar_select %p292, %s23, 1
        %p294 = scmp.lt.s32.totalorder %s291, 1
        %s295 = scalar_select %p294, %s291, 1
        %s296 = smul.addr %s293, 2
        %s297 = sadd.s32 %s295, %s296
        %s298 = smul.addr %s297, 4
        %s299 = scalar_lea.vmem %s1, %s298
        %s300 = smul.u32 2, %s24
      $region48: #{up_transition.5} parent=39 // pred_fallthru
        _
    $region40: #{up_transition.5} parent=5 // pred_fallthru
      _
    %p301 = scmp.le.s32.totalorder 1, %s16
    %p302 = scmp.lt.s32.totalorder %s16, 3
    %p303 = pnand %p301, %p302
    %p304 = pneg %p303
    // Predicated region
    $region49: #{up_transition.5} parent=5 // pred_check
      _
    $region50: #{up_transition.5} parent=5 // pred_check_branch
      %306 = sbr.rel (%p303) target = $region52
    $region51: #{up_transition.5} parent=5 // pred_region
      %s307 = ssub.s32 %s16, 1
      %s308 = smul.u32 2, %s26
      %p309 = scmp.lt.s32.totalorder %s25, 1
      %s310 = scalar_select %p309, %s25, 1
      %p311 = scmp.lt.s32.totalorder %s308, 1
      %s312 = scalar_select %p311, %s308, 1
      %s313 = smul.addr %s310, 2
      %s314 = sadd.s32 %s312, %s313
      %s315 = smul.addr %s314, 4
      %s316 = scalar_lea.vmem %s0, %s315
      %p317 = pneg %p56
      %p318 = pneg %p53
      %s319 = smul.u32 2, %s26
      %p320 = scmp.lt.s32.totalorder %s25, 1
      %s321 = scalar_select %p320, %s25, 1
      %p322 = scmp.lt.s32.totalorder %s319, 1
      %s323 = scalar_select %p322, %s319, 1
      %s324 = smul.addr %s321, 2
      %s325 = sadd.s32 %s323, %s324
      %s326 = smul.addr %s325, 4
      %s327 = scalar_lea.vmem %s1, %s326
      %p328 = pneg %p84
      %p329 = pneg %p81
      %p330 = pneg %p105
      %p331 = pneg %p102
      %p332 = pneg %p126
      %p333 = pneg %p123
      %p334 = pneg %p147
      %p335 = pneg %p144
      %p336 = pneg %p168
      %p337 = pneg %p165
      %p338 = pneg %p189
      %p339 = pneg %p186
      %p340 = pneg %p210
      %p341 = pneg %p207
      %p342 = pneg %p238
      %p343 = pneg %p235
      %s344 = smul.u32 2, %s26
      %p345 = scmp.lt.s32.totalorder %s25, 1
      %s346 = scalar_select %p345, %s25, 1
      %p347 = scmp.lt.s32.totalorder %s344, 1
      %s348 = scalar_select %p347, %s344, 1
      %s349 = smul.addr %s346, 2
      %s350 = sadd.s32 %s348, %s349
      %s351 = smul.addr %s350, 4
      %s352 = scalar_lea.vmem %s8, %s351
      %s353 = smul.u32 2, %s26
      %p354 = scmp.lt.s32.totalorder %s25, 1
      %s355 = scalar_select %p354, %s25, 1
      %p356 = scmp.lt.s32.totalorder %s353, 1
      %s357 = scalar_select %p356, %s353, 1
      %s358 = smul.addr %s355, 2
      %s359 = sadd.s32 %s357, %s358
      %s360 = smul.addr %s359, 4
      %s361 = scalar_lea.vmem %s0, %s360
      %s362 = smul.u32 2, %s26
      %s363 = smul.u32 2, %s26
      %p364 = scmp.lt.s32.totalorder %s25, 1
      %s365 = scalar_select %p364, %s25, 1
      %p366 = scmp.lt.s32.totalorder %s363, 1
      %s367 = scalar_select %p366, %s363, 1
      %s368 = smul.addr %s365, 2
      %s369 = sadd.s32 %s367, %s368
      %s370 = smul.addr %s369, 4
      %s371 = scalar_lea.vmem %s1, %s370
      %s372 = smul.u32 2, %s26
      %s373 = smul.u32 2, %s26
      %p374 = scmp.lt.s32.totalorder %s25, 1
      %s375 = scalar_select %p374, %s25, 1
      %p376 = scmp.lt.s32.totalorder %s373, 1
      %s377 = scalar_select %p376, %s373, 1
      %s378 = smul.addr %s375, 2
      %s379 = sadd.s32 %s377, %s378
      %s380 = smul.addr %s379, 4
      %s381 = scalar_lea.vmem %s8, %s380
      %s382 = smul.u32 2, %s26
      %v383 = vld [vmem:[%s361] sm:$0xff]
      %v384 = vld [vmem:[%s371] sm:$0xff]
      %v385 = vld [vmem:[%s2] sm:$0x3]
      %v386 = vld [vmem:[%s3] sm:$0x3]
      %388 = vset.pattern.permute.xlu0 0
      %389 = vperm.xlu0 %388, %v386
      %v390 = vpop.permute.xlu0 %389
      %v393 = vcombine.high %v383, %v383
      %vm394 = vcmask 31744
      %v396 = vsel %vm394, %v385, 0
      %vm398 = vcmask 1043456
      %v399 = vsel %vm398, %v383, 0
      %v401 = vsel %vm398, %v393, 0
      %403 = vmatprep.subr.mxu0 %v401
      %404 = vmatpush1.msra.mxu0 %v399
      %405 = vmatprep.subr.mxu0 0.0
      %406 = vmatpush1.msra.mxu0 0.0
      %407 = vmatprep.subr.mxu0 0.0
      %408 = vmatpush1.msra.mxu0 0.0
      %409 = vmatprep.subr.mxu0 0.0
      %410 = vmatpush1.msra.mxu0 0.0
      %411 = vmatprep.subr.mxu0 0.0
      %412 = vmatpush1.msra.mxu0 0.0
      %413 = vmatprep.subr.mxu0 0.0
      %414 = vmatpush1.msra.mxu0 0.0
      %415 = vmatprep.subr.mxu0 0.0
      %416 = vmatpush1.msra.mxu0 0.0
      %417 = vmatprep.subr.mxu0 0.0
      %418 = vmatpush1.msra.mxu0 0.0
      %419 = vmatprep.subr.mxu0 0.0
      %420 = vmatpush1.msra.mxu0 0.0
      %421 = vmatprep.subr.mxu0 0.0
      %422 = vmatpush1.msra.mxu0 0.0
      %423 = vmatprep.subr.mxu0 0.0
      %424 = vmatpush1.msra.mxu0 0.0
      %425 = vmatprep.subr.mxu0 0.0
      %426 = vmatpush1.msra.mxu0 0.0
      %427 = vmatprep.subr.mxu0 0.0
      %428 = vmatpush1.msra.mxu0 0.0
      %429 = vmatprep.subr.mxu0 0.0
      %430 = vmatpush1.msra.mxu0 0.0
      %431 = vmatprep.subr.mxu0 0.0
      %432 = vmatpush1.msra.mxu0 0.0
      %433 = vmatprep.subr.mxu0 0.0
      %434 = vmatpush1.msra.mxu0 0.0
      %435 = vmatprep.subr.mxu0 0.0
      %436 = vmatpush1.msra.mxu0 0.0
      %437 = vmatprep.subr.mxu0 0.0
      %438 = vmatpush1.msra.mxu0 0.0
      %439 = vmatprep.subr.mxu0 0.0
      %440 = vmatpush1.msra.mxu0 0.0
      %441 = vmatprep.subr.mxu0 0.0
      %442 = vmatpush1.msra.mxu0 0.0
      %443 = vmatprep.subr.mxu0 0.0
      %444 = vmatpush1.msra.mxu0 0.0
      %445 = vmatprep.subr.mxu0 0.0
      %446 = vmatpush1.msra.mxu0 0.0
      %447 = vmatprep.subr.mxu0 0.0
      %448 = vmatpush1.msra.mxu0 0.0
      %449 = vmatprep.subr.mxu0 0.0
      %450 = vmatpush1.msra.mxu0 0.0
      %451 = vmatprep.subr.mxu0 0.0
      %452 = vmatpush1.msra.mxu0 0.0
      %453 = vmatprep.subr.mxu0 0.0
      %454 = vmatpush1.msra.mxu0 0.0
      %455 = vmatprep.subr.mxu0 0.0
      %456 = vmatpush1.msra.mxu0 0.0
      %457 = vmatprep.subr.mxu0 0.0
      %458 = vmatpush1.msra.mxu0 0.0
      %459 = vmatprep.subr.mxu0 0.0
      %460 = vmatpush1.msra.mxu0 0.0
      %461 = vmatprep.subr.mxu0 0.0
      %462 = vmatpush1.msra.mxu0 0.0
      %463 = vmatprep.subr.mxu0 0.0
      %464 = vmatpush1.msra.mxu0 0.0
      %465 = vmatprep.subr.mxu0 0.0
      %466 = vmatpush1.msra.mxu0 0.0
      %467 = vmatprep.mubr.f32.mxu0 0.0
      %468 = vmatmul.mubr.f32.gmra.mrb[0].mxu0 %v396
      %v469 = vpop.f32.mrb[0].mxu0
      %v470 = vadd.f32 %v390, %v469
      %v471 = vpop.f32.mrb[0].mxu0
      %v472 = vadd.f32 %v390, %v471
      %473 = vdwg.mxu0
      %v474 = vld [vmem:[%s4] sm:$0x3]
      %v475 = vld [vmem:[%s5] sm:$0x3]
      %477 = vset.pattern.permute.xlu0 0
      %478 = vperm.xlu0 %477, %v475
      %v479 = vpop.permute.xlu0 %478
      %v482 = vcombine.high %v384, %v384
      %v484 = vsel %vm394, %v474, 0
      %v486 = vsel %vm398, %v384, 0
      %v488 = vsel %vm398, %v482, 0
      %490 = vmatprep.subr.mxu0 %v488
      %491 = vmatpush1.msra.mxu0 %v486
      %492 = vmatprep.subr.mxu0 0.0
      %493 = vmatpush1.msra.mxu0 0.0
      %494 = vmatprep.subr.mxu0 0.0
      %495 = vmatpush1.msra.mxu0 0.0
      %496 = vmatprep.subr.mxu0 0.0
      %497 = vmatpush1.msra.mxu0 0.0
      %498 = vmatprep.subr.mxu0 0.0
      %499 = vmatpush1.msra.mxu0 0.0
      %500 = vmatprep.subr.mxu0 0.0
      %501 = vmatpush1.msra.mxu0 0.0
      %502 = vmatprep.subr.mxu0 0.0
      %503 = vmatpush1.msra.mxu0 0.0
      %504 = vmatprep.subr.mxu0 0.0
      %505 = vmatpush1.msra.mxu0 0.0
      %506 = vmatprep.subr.mxu0 0.0
      %507 = vmatpush1.msra.mxu0 0.0
      %508 = vmatprep.subr.mxu0 0.0
      %509 = vmatpush1.msra.mxu0 0.0
      %510 = vmatprep.subr.mxu0 0.0
      %511 = vmatpush1.msra.mxu0 0.0
      %512 = vmatprep.subr.mxu0 0.0
      %513 = vmatpush1.msra.mxu0 0.0
      %514 = vmatprep.subr.mxu0 0.0
      %515 = vmatpush1.msra.mxu0 0.0
      %516 = vmatprep.subr.mxu0 0.0
      %517 = vmatpush1.msra.mxu0 0.0
      %518 = vmatprep.subr.mxu0 0.0
      %519 = vmatpush1.msra.mxu0 0.0
      %520 = vmatprep.subr.mxu0 0.0
      %521 = vmatpush1.msra.mxu0 0.0
      %522 = vmatprep.subr.mxu0 0.0
      %523 = vmatpush1.msra.mxu0 0.0
      %524 = vmatprep.subr.mxu0 0.0
      %525 = vmatpush1.msra.mxu0 0.0
      %526 = vmatprep.subr.mxu0 0.0
      %527 = vmatpush1.msra.mxu0 0.0
      %528 = vmatprep.subr.mxu0 0.0
      %529 = vmatpush1.msra.mxu0 0.0
      %530 = vmatprep.subr.mxu0 0.0
      %531 = vmatpush1.msra.mxu0 0.0
      %532 = vmatprep.subr.mxu0 0.0
      %533 = vmatpush1.msra.mxu0 0.0
      %534 = vmatprep.subr.mxu0 0.0
      %535 = vmatpush1.msra.mxu0 0.0
      %536 = vmatprep.subr.mxu0 0.0
      %537 = vmatpush1.msra.mxu0 0.0
      %538 = vmatprep.subr.mxu0 0.0
      %539 = vmatpush1.msra.mxu0 0.0
      %540 = vmatprep.subr.mxu0 0.0
      %541 = vmatpush1.msra.mxu0 0.0
      %542 = vmatprep.subr.mxu0 0.0
      %543 = vmatpush1.msra.mxu0 0.0
      %544 = vmatprep.subr.mxu0 0.0
      %545 = vmatpush1.msra.mxu0 0.0
      %546 = vmatprep.subr.mxu0 0.0
      %547 = vmatpush1.msra.mxu0 0.0
      %548 = vmatprep.subr.mxu0 0.0
      %549 = vmatpush1.msra.mxu0 0.0
      %550 = vmatprep.subr.mxu0 0.0
      %551 = vmatpush1.msra.mxu0 0.0
      %552 = vmatprep.subr.mxu0 0.0
      %553 = vmatpush1.msra.mxu0 0.0
      %554 = vmatprep.mubr.f32.mxu0 0.0
      %555 = vmatmul.mubr.f32.gmra.mrb[0].mxu0 %v484
      %v556 = vpop.f32.mrb[0].mxu0
      %v557 = vadd.f32 %v479, %v556
      %v558 = vpop.f32.mrb[0].mxu0
      %v559 = vadd.f32 %v479, %v558
      %560 = vdwg.mxu0
      %v561 = vadd.f32 %v470, %v557
      %v562 = vadd.f32 %v472, %v559
      %v563 = vmax.f32 %v561, 0.0
      %v564 = vmax.f32 %v562, 0.0
      %v565 = vld [vmem:[%s6] sm:$0x1]
      %v566 = vld [vmem:[#allocation2] sm:$0x1]
      %568 = vset.pattern.permute.xlu0 0
      %569 = vperm.xlu0 %568, %v566
      %v570 = vpop.permute.xlu0 %569
      %v572 = vlaneseq
      %v573 = vshrl.u32 %v572, 7
      %v574 = vsub.s32 0, %v573
      %v575 = vrot.slane %v570, %v574
      %vm576 = vcmask 15360
      %v578 = vsel %vm576, %v565, 0
      %vm580 = vcmask 1041408
      %v582 = vsel %vm580, %v563, 0
      %v585 = vsel %vm580, %v564, 0
      %587 = vmatprep.subr.mxu0 %v585
      %588 = vmatpush1.msra.mxu0 %v582
      %589 = vmatprep.subr.mxu0 0.0
      %590 = vmatpush1.msra.mxu0 0.0
      %591 = vmatprep.subr.mxu0 0.0
      %592 = vmatpush1.msra.mxu0 0.0
      %593 = vmatprep.subr.mxu0 0.0
      %594 = vmatpush1.msra.mxu0 0.0
      %595 = vmatprep.subr.mxu0 0.0
      %596 = vmatpush1.msra.mxu0 0.0
      %597 = vmatprep.subr.mxu0 0.0
      %598 = vmatpush1.msra.mxu0 0.0
      %599 = vmatprep.subr.mxu0 0.0
      %600 = vmatpush1.msra.mxu0 0.0
      %601 = vmatprep.subr.mxu0 0.0
      %602 = vmatpush1.msra.mxu0 0.0
      %603 = vmatprep.subr.mxu0 0.0
      %604 = vmatpush1.msra.mxu0 0.0
      %605 = vmatprep.subr.mxu0 0.0
      %606 = vmatpush1.msra.mxu0 0.0
      %607 = vmatprep.subr.mxu0 0.0
      %608 = vmatpush1.msra.mxu0 0.0
      %609 = vmatprep.subr.mxu0 0.0
      %610 = vmatpush1.msra.mxu0 0.0
      %611 = vmatprep.subr.mxu0 0.0
      %612 = vmatpush1.msra.mxu0 0.0
      %613 = vmatprep.subr.mxu0 0.0
      %614 = vmatpush1.msra.mxu0 0.0
      %615 = vmatprep.subr.mxu0 0.0
      %616 = vmatpush1.msra.mxu0 0.0
      %617 = vmatprep.subr.mxu0 0.0
      %618 = vmatpush1.msra.mxu0 0.0
      %619 = vmatprep.subr.mxu0 0.0
      %620 = vmatpush1.msra.mxu0 0.0
      %621 = vmatprep.subr.mxu0 0.0
      %622 = vmatpush1.msra.mxu0 0.0
      %623 = vmatprep.subr.mxu0 0.0
      %624 = vmatpush1.msra.mxu0 0.0
      %625 = vmatprep.subr.mxu0 0.0
      %626 = vmatpush1.msra.mxu0 0.0
      %627 = vmatprep.subr.mxu0 0.0
      %628 = vmatpush1.msra.mxu0 0.0
      %629 = vmatprep.subr.mxu0 0.0
      %630 = vmatpush1.msra.mxu0 0.0
      %631 = vmatprep.subr.mxu0 0.0
      %632 = vmatpush1.msra.mxu0 0.0
      %633 = vmatprep.subr.mxu0 0.0
      %634 = vmatpush1.msra.mxu0 0.0
      %635 = vmatprep.subr.mxu0 0.0
      %636 = vmatpush1.msra.mxu0 0.0
      %637 = vmatprep.subr.mxu0 0.0
      %638 = vmatpush1.msra.mxu0 0.0
      %639 = vmatprep.subr.mxu0 0.0
      %640 = vmatpush1.msra.mxu0 0.0
      %641 = vmatprep.subr.mxu0 0.0
      %642 = vmatpush1.msra.mxu0 0.0
      %643 = vmatprep.subr.mxu0 0.0
      %644 = vmatpush1.msra.mxu0 0.0
      %645 = vmatprep.subr.mxu0 0.0
      %646 = vmatpush1.msra.mxu0 0.0
      %647 = vmatprep.subr.mxu0 0.0
      %648 = vmatpush1.msra.mxu0 0.0
      %649 = vmatprep.subr.mxu0 0.0
      %650 = vmatpush1.msra.mxu0 0.0
      %651 = vmatprep.mubr.f32.mxu0 0.0
      %652 = vmatmul.mubr.f32.gmra.mrb[0].mxu0 %v578
      %v653 = vpop.f32.mrb[0].mxu0
      %v654 = vadd.f32 %v575, %v653
      %v655 = vpop.f32.mrb[0].mxu0
      %v656 = vadd.f32 %v575, %v655
      %657 = vdwg.mxu0
      %v658 = vsub.f32 0.0, %v654
      %v659 = vsub.f32 0.0, %v656
      %v660 = vmul.f32 %v658, 1.442695
      %v661 = vpow.pop %v660
      %v662 = vmul.f32 %v659, 1.442695
      %v663 = vpow.pop %v662
      %v664 = vadd.f32 %v661, 1.0
      %v665 = vadd.f32 %v663, 1.0
      %v666 = vrcp.pop %v664
      %v667 = vmul.f32 1.0, %v666
      %v668 = vrcp.pop %v665
      %v669 = vmul.f32 1.0, %v668
      %v670 = vlaneseq
      %v671 = vshrl.u32 %v670, 7
      %v672 = vsub.s32 0, %v671
      %v673 = vrot.slane %v667, %v672
      %v674 = vlaneseq
      %v675 = vshrl.u32 %v674, 7
      %v676 = vsub.s32 0, %v675
      %v677 = vrot.slane %v669, %v676
      %v680 = vcombine.low %v673, %v677
      %v682 = vmul.f32 %v384, %v680
      %683 = vst [vmem:[%s381] sm:$0xff] %v682
      %s684 = smul.u32 2, %s26
      %p685 = scmp.lt.s32.totalorder %s25, 1
      %s686 = scalar_select %p685, %s25, 1
      %p687 = scmp.lt.s32.totalorder %s684, 1
      %s688 = scalar_select %p687, %s684, 1
      %s689 = smul.addr %s686, 2
      %s690 = sadd.s32 %s688, %s689
      %s691 = smul.addr %s690, 4
      %s692 = scalar_lea.vmem %s8, %s691
      // Predicated region
      $region53: #{up_transition.5} parent=51 // pred_check
        %p693 = pneg %p235
      $region54: #{up_transition.5} parent=51 // pred_check_branch
        %695 = sbr.rel (%p693) target = $region56
      $region55: #{up_transition.5} parent=51 // pred_region
        %s696 = smul.u32 2, %s26
      $region56: #{up_transition.5} parent=51 // pred_fallthru
        _
    $region52: #{up_transition.5} parent=5 // pred_fallthru
      _
    %p697 = scmp.le.s32.totalorder 2, %s16
    // Predicated region
    $region57: #{up_transition.5} parent=5 // pred_check
      %p698 = pneg %p697
    $region58: #{up_transition.5} parent=5 // pred_check_branch
      %700 = sbr.rel (%p698) target = $region60
    $region59: #{up_transition.5} parent=5 // pred_region
      %s701 = ssub.s32 %s16, 2
      // Predicated region
      $region61: #{up_transition.5} parent=59 // pred_check
        %p702 = pneg %p241
      $region62: #{up_transition.5} parent=59 // pred_check_branch
        %704 = sbr.rel (%p702) target = $region64
      $region63: #{up_transition.5} parent=59 // pred_region
        %s705 = smul.u32 2, %s28
        %p706 = scmp.lt.s32.totalorder %s27, 1
        %s707 = scalar_select %p706, %s27, 1
        %p708 = scmp.lt.s32.totalorder %s705, 1
        %s709 = scalar_select %p708, %s705, 1
        %s710 = smul.addr %s707, 2
        %s711 = sadd.s32 %s709, %s710
        %s712 = smul.addr %s711, 4
        %s713 = scalar_lea.vmem %s8, %s712
      $region64: #{up_transition.5} parent=59 // pred_fallthru
        _
    $region60: #{up_transition.5} parent=5 // pred_fallthru
      _
  $region6: #{up_transition.5} parent=0 // loop_footer
    %s20 = sadd.s32 1, %s16
  $region7: #{up_transition.5} parent=0 // loop_footer_branch
    %15 = sbr.rel target = $region3
  $region8: #{up_transition.5} parent=0 // loop_exit
    _

// kernel: up_transition.7
$region0: #{up_transition.7}
  #allocation0 [shape = 'u32[]', space=smem, size = 0x4, offset = 0x4, fixed_abs, tag = 'smem constant byte address 0x4 - core index']
  #allocation1 [shape = 'u32[144,128]{1,0:T(1,128)}', space=vmem, size = 0x12000, scoped, tag = 'internal scratch']
  %s0 = inlined_call_operand.vmem [shape: f32[2,18,4,18], index: 0, kind: input, shape index: {}]
  %s1 = inlined_call_operand.vmem [shape: f32[9,4,4], index: 1, kind: input, shape index: {}]
  %s2 = inlined_call_operand.vmem [shape: f32[4,1], index: 2, kind: input, shape index: {}]
  %s3 = inlined_call_operand.vmem [shape: f32[2,16,4,16], index: 3, kind: output, shape index: {}]
  %s4 = sld [smem:[#allocation0]]
  $region52: #{up_transition.7} parent=0
    _
  %s6 = ssub.s32 1, %s4
  %s7 = scalar_select 0, %s6, %s4
  loop: start=0, step=1, limit=4
  $region2: #{up_transition.7} parent=0 // loop_pre_header
    _
  $region3: #{up_transition.7} parent=0 // loop_header
    %s9 = sphi 0, %s13
    %p10 = scmp.ge.s32.totalorder %s9, 4
    %s19 = sphi 0, %s21
    %s22 = sphi 0, %s19
    %s23 = sphi 0, %s22
    %s39 = sphi 0, %s23
    %s43 = sphi 0, %s43
    %s45 = sphi 0, %s43
    %s46 = sphi 0, %s45
    %s60 = sphi 0, %s46
    %s64 = sphi 0, %s64
    %s66 = sphi 0, %s64
    %s67 = sphi 0, %s66
    %s81 = sphi 0, %s67
    %s87 = sphi 0, %s89
    %s90 = sphi 0, %s87
    %s91 = sphi 0, %s90
    %s107 = sphi 0, %s91
  $region4: #{up_transition.7} parent=0 // loop_header_branch
    %12 = sbr.rel (%p10) target = $region8
  $region5: #{up_transition.7} parent=0 // loop_body
    %s14 = ssub.s32 %s9, 1
    %s15 = ssub.s32 %s9, 2
    %s16 = sadd.s32 %s9, 1
    %s17 = ssub.s32 %s9, %s16
    %p18 = scmp.eq.s32.totalorder %s17, 0
    %s20 = sadd.s32 %s19, 1
    %s21 = scalar_select %p18, %s19, %s20
    %p24 = pneg %p18
    %p25 = scmp.eq.s32.totalorder %s9, 1
    %p26 = por %p24, %p25
    %p27 = scmp.ne.s32.totalorder %s19, %s22
    %p28 = scmp.eq.s32.totalorder %s9, 0
    %p29 = por %p27, %p28
    %p30 = scmp.ne.s32.totalorder %s19, %s22
    %p31 = scmp.eq.s32.totalorder %s14, 1
    %p32 = por %p30, %p31
    %p33 = scmp.ne.s32.totalorder %s22, %s23
    %p34 = scmp.eq.s32.totalorder %s14, 0
    %p35 = por %p33, %p34
    %p36 = scmp.ne.s32.totalorder %s22, %s23
    %p37 = scmp.eq.s32.totalorder %s15, 1
    %p38 = por %p36, %p37
    %p40 = scmp.ne.s32.totalorder %s23, %s39
    %p41 = scmp.eq.s32.totalorder %s15, 0
    %p42 = por %p40, %p41
    %s44 = sadd.s32 %s43, 1
    %p47 = scmp.eq.s32.totalorder %s9, 1
    %p48 = scmp.ne.s32.totalorder %s43, %s45
    %p49 = scmp.eq.s32.totalorder %s9, 0
    %p50 = por %p48, %p49
    %p51 = scmp.ne.s32.totalorder %s43, %s45
    %p52 = scmp.eq.s32.totalorder %s14, 1
    %p53 = por %p51, %p52
    %p54 = scmp.ne.s32.totalorder %s45, %s46
    %p55 = scmp.eq.s32.totalorder %s14, 0
    %p56 = por %p54, %p55
    %p57 = scmp.ne.s32.totalorder %s45, %s46
    %p58 = scmp.eq.s32.totalorder %s15, 1
    %p59 = por %p57, %p58
    %p61 = scmp.ne.s32.totalorder %s46, %s60
    %p62 = scmp.eq.s32.totalorder %s15, 0
    %p63 = por %p61, %p62
    %s65 = sadd.s32 %s64, 1
    %p68 = scmp.eq.s32.totalorder %s9, 1
    %p69 = scmp.ne.s32.totalorder %s64, %s66
    %p70 = scmp.eq.s32.totalorder %s9, 0
    %p71 = por %p69, %p70
    %p72 = scmp.ne.s32.totalorder %s64, %s66
    %p73 = scmp.eq.s32.totalorder %s14, 1
    %p74 = por %p72, %p73
    %p75 = scmp.ne.s32.totalorder %s66, %s67
    %p76 = scmp.eq.s32.totalorder %s14, 0
    %p77 = por %p75, %p76
    %p78 = scmp.ne.s32.totalorder %s66, %s67
    %p79 = scmp.eq.s32.totalorder %s15, 1
    %p80 = por %p78, %p79
    %p82 = scmp.ne.s32.totalorder %s67, %s81
    %p83 = scmp.eq.s32.totalorder %s15, 0
    %p84 = por %p82, %p83
    %s85 = ssub.s32 %s9, %s16
    %p86 = scmp.eq.s32.totalorder %s85, 0
    %s88 = sadd.s32 %s87, 1
    %s89 = scalar_select %p86, %s87, %s88
    %p92 = pneg %p86
    %p93 = scmp.eq.s32.totalorder %s9, 1
    %p94 = por %p92, %p93
    %p95 = scmp.ne.s32.totalorder %s87, %s90
    %p96 = scmp.eq.s32.totalorder %s9, 0
    %p97 = por %p95, %p96
    %p98 = scmp.ne.s32.totalorder %s87, %s90
    %p99 = scmp.eq.s32.totalorder %s14, 1
    %p100 = por %p98, %p99
    %p101 = scmp.ne.s32.totalorder %s90, %s91
    %p102 = scmp.eq.s32.totalorder %s14, 0
    %p103 = por %p101, %p102
    %p104 = scmp.ne.s32.totalorder %s90, %s91
    %p105 = scmp.eq.s32.totalorder %s15, 1
    %p106 = por %p104, %p105
    %p108 = scmp.ne.s32.totalorder %s91, %s107
    %p109 = scmp.eq.s32.totalorder %s15, 0
    %p110 = por %p108, %p109
    %p111 = scmp.le.s32.totalorder 1, %s9
    %p112 = scmp.lt.s32.totalorder %s9, 3
    %p113 = pnand %p111, %p112
    %p114 = pneg %p113
    // Predicated region
    $region9: #{up_transition.7} parent=5 // pred_check
      _
    $region10: #{up_transition.7} parent=5 // pred_check_branch
      %116 = sbr.rel (%p113) target = $region12
    $region11: #{up_transition.7} parent=5 // pred_region
      %s117 = ssub.s32 %s9, 1
      // Predicated region
      $region13: #{up_transition.7} parent=11 // pred_check
        %p118 = pneg %p56
      $region14: #{up_transition.7} parent=11 // pred_check_branch
        %120 = sbr.rel (%p118) target = $region16
      $region15: #{up_transition.7} parent=11 // pred_region
        _
      $region16: #{up_transition.7} parent=11 // pred_fallthru
        _
      // Predicated region
      $region17: #{up_transition.7} parent=11 // pred_check
        %p121 = pneg %p77
      $region18: #{up_transition.7} parent=11 // pred_check_branch
        %123 = sbr.rel (%p121) target = $region20
      $region19: #{up_transition.7} parent=11 // pred_region
        _
      $region20: #{up_transition.7} parent=11 // pred_fallthru
        _
    $region12: #{up_transition.7} parent=5 // pred_fallthru
      _
    %p124 = scmp.lt.s32.totalorder %s9, 2
    // Predicated region
    $region21: #{up_transition.7} parent=5 // pred_check
      %p125 = pneg %p124
    $region22: #{up_transition.7} parent=5 // pred_check_branch
      %127 = sbr.rel (%p125) target = $region24
    $region23: #{up_transition.7} parent=5 // pred_region
      // Predicated region
      $region25: #{up_transition.7} parent=23 // pred_check
        %p128 = pneg %p29
      $region26: #{up_transition.7} parent=23 // pred_check_branch
        %130 = sbr.rel (%p128) target = $region28
      $region27: #{up_transition.7} parent=23 // pred_region
        %p131 = scmp.lt.s32.totalorder %s9, 1
        %s132 = scalar_select %p131, %s9, 1
        %s133 = smul.addr %s132, 18
        %s134 = smul.addr %s133, 4
        %s135 = scalar_lea.vmem %s0, %s134
      $region28: #{up_transition.7} parent=23 // pred_fallthru
        _
    $region24: #{up_transition.7} parent=5 // pred_fallthru
      _
    %p136 = scmp.le.s32.totalorder 1, %s9
    %p137 = scmp.lt.s32.totalorder %s9, 3
    %p138 = pnand %p136, %p137
    %p139 = pneg %p138
    // Predicated region
    $region29: #{up_transition.7} parent=5 // pred_check
      _
    $region30: #{up_transition.7} parent=5 // pred_check_branch
      %141 = sbr.rel (%p138) target = $region32
    $region31: #{up_transition.7} parent=5 // pred_region
      %s142 = ssub.s32 %s9, 1
      %p143 = scmp.lt.s32.totalorder %s14, 1
      %s144 = scalar_select %p143, %s14, 1
      %s145 = smul.addr %s144, 18
      %s146 = smul.addr %s145, 4
      %s147 = scalar_lea.vmem %s0, %s146
      %p148 = pneg %p35
      %p149 = pneg %p32
      %p150 = pneg %p56
      %p151 = pneg %p53
      %p152 = pneg %p77
      %p153 = pneg %p74
      %p154 = pneg %p103
      %p155 = pneg %p100
      %p156 = scmp.lt.s32.totalorder %s14, 1
      %s157 = scalar_select %p156, %s14, 1
      %s158 = smul.addr %s157, 16
      %s159 = smul.addr %s158, 4
      %s160 = scalar_lea.vmem %s3, %s159
      %p161 = scmp.lt.s32.totalorder %s14, 1
      %s162 = scalar_select %p161, %s14, 1
      %s163 = smul.addr %s162, 18
      %s164 = smul.addr %s163, 4
      %s165 = scalar_lea.vmem %s0, %s164
      %p166 = scmp.lt.s32.totalorder %s14, 1
      %s167 = scalar_select %p166, %s14, 1
      %s168 = smul.addr %s167, 16
      %s169 = smul.addr %s168, 4
      %s170 = scalar_lea.vmem %s3, %s169
      loop: start=0, step=1, limit=16
      $region33: #{up_transition.7} parent=31 // loop_pre_header
        _
      $region34: #{up_transition.7} parent=31 // loop_header
        %s172 = sphi 0, %s176
        %p173 = scmp.ge.s32.totalorder %s172, 16
      $region35: #{up_transition.7} parent=31 // loop_header_branch
        %175 = sbr.rel (%p173) target = $region39
      $region36: #{up_transition.7} parent=31 // loop_body
        %s177 = smul.u32 %s172, 4
        %s178 = scalar_lea.vmem %s165, %s177
        %v179 = vld [vmem:[%s178] sm:$0xf]
        %v180 = vld [vmem:[%s1] sm:$0xf]
        %s181 = scalar_lea.vmem %s1, 4
        %v182 = vld [vmem:[%s181] sm:$0xf]
        %184 = vrot.lane.b32.xlu0 %v179, 127
        %v185 = vpop.permute.xlu0 %184
        %vm186 = vcmask 31744
        %v188 = vsel %vm186, %v182, 0
        %vm190 = vcmask 1043456
        %v191 = vsel %vm190, %v185, 0
        %193 = vmatprep.subr.mxu0 0.0
        %194 = vmatpush1.msra.mxu0 %v191
        %195 = vmatprep.subr.mxu0 0.0
        %196 = vmatpush1.msra.mxu0 0.0
        %197 = vmatprep.subr.mxu0 0.0
        %198 = vmatpush1.msra.mxu0 0.0
        %199 = vmatprep.subr.mxu0 0.0
        %200 = vmatpush1.msra.mxu0 0.0
        %201 = vmatprep.subr.mxu0 0.0
        %202 = vmatpush1.msra.mxu0 0.0
        %203 = vmatprep.subr.mxu0 0.0
        %204 = vmatpush1.msra.mxu0 0.0
        %205 = vmatprep.subr.mxu0 0.0
        %206 = vmatpush1.msra.mxu0 0.0
        %207 = vmatprep.subr.mxu0 0.0
        %208 = vmatpush1.msra.mxu0 0.0
        %209 = vmatprep.subr.mxu0 0.0
        %210 = vmatpush1.msra.mxu0 0.0
        %211 = vmatprep.subr.mxu0 0.0
        %212 = vmatpush1.msra.mxu0 0.0
        %213 = vmatprep.subr.mxu0 0.0
        %214 = vmatpush1.msra.mxu0 0.0
        %215 = vmatprep.subr.mxu0 0.0
        %216 = vmatpush1.msra.mxu0 0.0
        %217 = vmatprep.subr.mxu0 0.0
        %218 = vmatpush1.msra.mxu0 0.0
        %219 = vmatprep.subr.mxu0 0.0
        %220 = vmatpush1.msra.mxu0 0.0
        %221 = vmatprep.subr.mxu0 0.0
        %222 = vmatpush1.msra.mxu0 0.0
        %223 = vmatprep.subr.mxu0 0.0
        %224 = vmatpush1.msra.mxu0 0.0
        %225 = vmatprep.subr.mxu0 0.0
        %226 = vmatpush1.msra.mxu0 0.0
        %227 = vmatprep.subr.mxu0 0.0
        %228 = vmatpush1.msra.mxu0 0.0
        %229 = vmatprep.subr.mxu0 0.0
        %230 = vmatpush1.msra.mxu0 0.0
        %231 = vmatprep.subr.mxu0 0.0
        %232 = vmatpush1.msra.mxu0 0.0
        %233 = vmatprep.subr.mxu0 0.0
        %234 = vmatpush1.msra.mxu0 0.0
        %235 = vmatprep.subr.mxu0 0.0
        %236 = vmatpush1.msra.mxu0 0.0
        %237 = vmatprep.subr.mxu0 0.0
        %238 = vmatpush1.msra.mxu0 0.0
        %239 = vmatprep.subr.mxu0 0.0
        %240 = vmatpush1.msra.mxu0 0.0
        %241 = vmatprep.subr.mxu0 0.0
        %242 = vmatpush1.msra.mxu0 0.0
        %243 = vmatprep.subr.mxu0 0.0
        %244 = vmatpush1.msra.mxu0 0.0
        %245 = vmatprep.subr.mxu0 0.0
        %246 = vmatpush1.msra.mxu0 0.0
        %247 = vmatprep.subr.mxu0 0.0
        %248 = vmatpush1.msra.mxu0 0.0
        %249 = vmatprep.subr.mxu0 0.0
        %250 = vmatpush1.msra.mxu0 0.0
        %251 = vmatprep.subr.mxu0 0.0
        %252 = vmatpush1.msra.mxu0 0.0
        %253 = vmatprep.subr.mxu0 0.0
        %254 = vmatpush1.msra.mxu0 0.0
        %255 = vmatprep.subr.mxu0 0.0
        %256 = vmatpush1.msra.mxu0 0.0
        %257 = vmatprep.mubr.f32.mxu0 0.0
        %258 = vmatmul.mubr.f32.gmra.mrb[0].mxu0 %v188
        %v259 = vpop.f32.mrb[0].mxu0
        %v260 = vadd.f32 0.0, %v259
        %v261 = vpop.f32.mrb[0].mxu0
        %262 = vdwg.mxu0
        %v264 = vsel %vm186, %v180, 0
        %v266 = vsel %vm190, %v179, 0
        %268 = vmatprep.subr.mxu0 0.0
        %269 = vmatpush1.msra.mxu0 %v266
        %270 = vmatprep.subr.mxu0 0.0
        %271 = vmatpush1.msra.mxu0 0.0
        %272 = vmatprep.subr.mxu0 0.0
        %273 = vmatpush1.msra.mxu0 0.0
        %274 = vmatprep.subr.mxu0 0.0
        %275 = vmatpush1.msra.mxu0 0.0
        %276 = vmatprep.subr.mxu0 0.0
        %277 = vmatpush1.msra.mxu0 0.0
        %278 = vmatprep.subr.mxu0 0.0
        %279 = vmatpush1.msra.mxu0 0.0
        %280 = vmatprep.subr.mxu0 0.0
        %281 = vmatpush1.msra.mxu0 0.0
        %282 = vmatprep.subr.mxu0 0.0
        %283 = vmatpush1.msra.mxu0 0.0
        %284 = vmatprep.subr.mxu0 0.0
        %285 = vmatpush1.msra.mxu0 0.0
        %286 = vmatprep.subr.mxu0 0.0
        %287 = vmatpush1.msra.mxu0 0.0
        %288 = vmatprep.subr.mxu0 0.0
        %289 = vmatpush1.msra.mxu0 0.0
        %290 = vmatprep.subr.mxu0 0.0
        %291 = vmatpush1.msra.mxu0 0.0
        %292 = vmatprep.subr.mxu0 0.0
        %293 = vmatpush1.msra.mxu0 0.0
        %294 = vmatprep.subr.mxu0 0.0
        %295 = vmatpush1.msra.mxu0 0.0
        %296 = vmatprep.subr.mxu0 0.0
        %297 = vmatpush1.msra.mxu0 0.0
        %298 = vmatprep.subr.mxu0 0.0
        %299 = vmatpush1.msra.mxu0 0.0
        %300 = vmatprep.subr.mxu0 0.0
        %301 = vmatpush1.msra.mxu0 0.0
        %302 = vmatprep.subr.mxu0 0.0
        %303 = vmatpush1.msra.mxu0 0.0
        %304 = vmatprep.subr.mxu0 0.0
        %305 = vmatpush1.msra.mxu0 0.0
        %306 = vmatprep.subr.mxu0 0.0
        %307 = vmatpush1.msra.mxu0 0.0
        %308 = vmatprep.subr.mxu0 0.0
        %309 = vmatpush1.msra.mxu0 0.0
        %310 = vmatprep.subr.mxu0 0.0
        %311 = vmatpush1.msra.mxu0 0.0
        %312 = vmatprep.subr.mxu0 0.0
        %313 = vmatpush1.msra.mxu0 0.0
        %314 = vmatprep.subr.mxu0 0.0
        %315 = vmatpush1.msra.mxu0 0.0
        %316 = vmatprep.subr.mxu0 0.0
        %317 = vmatpush1.msra.mxu0 0.0
        %318 = vmatprep.subr.mxu0 0.0
        %319 = vmatpush1.msra.mxu0 0.0
        %320 = vmatprep.subr.mxu0 0.0
        %321 = vmatpush1.msra.mxu0 0.0
        %322 = vmatprep.subr.mxu0 0.0
        %323 = vmatpush1.msra.mxu0 0.0
        %324 = vmatprep.subr.mxu0 0.0
        %325 = vmatpush1.msra.mxu0 0.0
        %326 = vmatprep.subr.mxu0 0.0
        %327 = vmatpush1.msra.mxu0 0.0
        %328 = vmatprep.subr.mxu0 0.0
        %329 = vmatpush1.msra.mxu0 0.0
        %330 = vmatprep.subr.mxu0 0.0
        %331 = vmatpush1.msra.mxu0 0.0
        %332 = vmatprep.mubr.f32.mxu0 0.0
        %333 = vmatmul.mubr.f32.gmra.mrb[0].mxu0 %v264
        %v334 = vpop.f32.mrb[0].mxu0
        %v335 = vadd.f32 %v260, %v334
        %v336 = vpop.f32.mrb[0].mxu0
        %337 = vdwg.mxu0
        %s338 = scalar_lea.vmem %s1, 8
        %v339 = vld [vmem:[%s338] sm:$0xf]
        %340 = vrot.lane.b32.xlu0 %v179, 126
        %v341 = vpop.permute.xlu0 %340
        %v343 = vsel %vm186, %v339, 0
        %v345 = vsel %vm190, %v341, 0
        %347 = vmatprep.subr.mxu0 0.0
        %348 = vmatpush1.msra.mxu0 %v345
        %349 = vmatprep.subr.mxu0 0.0
        %350 = vmatpush1.msra.mxu0 0.0
        %351 = vmatprep.subr.mxu0 0.0
        %352 = vmatpush1.msra.mxu0 0.0
        %353 = vmatprep.subr.mxu0 0.0
        %354 = vmatpush1.msra.mxu0 0.0
        %355 = vmatprep.subr.mxu0 0.0
        %356 = vmatpush1.msra.mxu0 0.0
        %357 = vmatprep.subr.mxu0 0.0
        %358 = vmatpush1.msra.mxu0 0.0
        %359 = vmatprep.subr.mxu0 0.0
        %360 = vmatpush1.msra.mxu0 0.0
        %361 = vmatprep.subr.mxu0 0.0
        %362 = vmatpush1.msra.mxu0 0.0
        %363 = vmatprep.subr.mxu0 0.0
        %364 = vmatpush1.msra.mxu0 0.0
        %365 = vmatprep.subr.mxu0 0.0
        %366 = vmatpush1.msra.mxu0 0.0
        %367 = vmatprep.subr.mxu0 0.0
        %368 = vmatpush1.msra.mxu0 0.0
        %369 = vmatprep.subr.mxu0 0.0
        %370 = vmatpush1.msra.mxu0 0.0
        %371 = vmatprep.subr.mxu0 0.0
        %372 = vmatpush1.msra.mxu0 0.0
        %373 = vmatprep.subr.mxu0 0.0
        %374 = vmatpush1.msra.mxu0 0.0
        %375 = vmatprep.subr.mxu0 0.0
        %376 = vmatpush1.msra.mxu0 0.0
        %377 = vmatprep.subr.mxu0 0.0
        %378 = vmatpush1.msra.mxu0 0.0
        %379 = vmatprep.subr.mxu0 0.0
        %380 = vmatpush1.msra.mxu0 0.0
        %381 = vmatprep.subr.mxu0 0.0
        %382 = vmatpush1.msra.mxu0 0.0
        %383 = vmatprep.subr.mxu0 0.0
        %384 = vmatpush1.msra.mxu0 0.0
        %385 = vmatprep.subr.mxu0 0.0
        %386 = vmatpush1.msra.mxu0 0.0
        %387 = vmatprep.subr.mxu0 0.0
        %388 = vmatpush1.msra.mxu0 0.0
        %389 = vmatprep.subr.mxu0 0.0
        %390 = vmatpush1.msra.mxu0 0.0
        %391 = vmatprep.subr.mxu0 0.0
        %392 = vmatpush1.msra.mxu0 0.0
        %393 = vmatprep.subr.mxu0 0.0
        %394 = vmatpush1.msra.mxu0 0.0
        %395 = vmatprep.subr.mxu0 0.0
        %396 = vmatpush1.msra.mxu0 0.0
        %397 = vmatprep.subr.mxu0 0.0
        %398 = vmatpush1.msra.mxu0 0.0
        %399 = vmatprep.subr.mxu0 0.0
        %400 = vmatpush1.msra.mxu0 0.0
        %401 = vmatprep.subr.mxu0 0.0
        %402 = vmatpush1.msra.mxu0 0.0
        %403 = vmatprep.subr.mxu0 0.0
        %404 = vmatpush1.msra.mxu0 0.0
        %405 = vmatprep.subr.mxu0 0.0
        %406 = vmatpush1.msra.mxu0 0.0
        %407 = vmatprep.subr.mxu0 0.0
        %408 = vmatpush1.msra.mxu0 0.0
        %409 = vmatprep.subr.mxu0 0.0
        %410 = vmatpush1.msra.mxu0 0.0
        %411 = vmatprep.mubr.f32.mxu0 0.0
        %412 = vmatmul.mubr.f32.gmra.mrb[0].mxu0 %v343
        %v413 = vpop.f32.mrb[0].mxu0
        %v414 = vadd.f32 0.0, %v413
        %v415 = vpop.f32.mrb[0].mxu0
        %416 = vdwg.mxu0
        %v417 = vadd.f32 %v335, %v414
        %s418 = sadd.s32 %s172, 1
        %s419 = smul.u32 %s418, 4
        %s420 = scalar_lea.vmem %s165, %s419
        %v421 = vld [vmem:[%s420] sm:$0xf]
        %s422 = scalar_lea.vmem %s1, 12
        %v423 = vld [vmem:[%s422] sm:$0xf]
        %v425 = vsel %vm186, %v423, 0
        %v428 = vsel %vm190, %v421, 0
        %430 = vmatprep.subr.mxu0 0.0
        %431 = vmatpush1.msra.mxu0 %v428
        %432 = vmatprep.subr.mxu0 0.0
        %433 = vmatpush1.msra.mxu0 0.0
        %434 = vmatprep.subr.mxu0 0.0
        %435 = vmatpush1.msra.mxu0 0.0
        %436 = vmatprep.subr.mxu0 0.0
        %437 = vmatpush1.msra.mxu0 0.0
        %438 = vmatprep.subr.mxu0 0.0
        %439 = vmatpush1.msra.mxu0 0.0
        %440 = vmatprep.subr.mxu0 0.0
        %441 = vmatpush1.msra.mxu0 0.0
        %442 = vmatprep.subr.mxu0 0.0
        %443 = vmatpush1.msra.mxu0 0.0
        %444 = vmatprep.subr.mxu0 0.0
        %445 = vmatpush1.msra.mxu0 0.0
        %446 = vmatprep.subr.mxu0 0.0
        %447 = vmatpush1.msra.mxu0 0.0
        %448 = vmatprep.subr.mxu0 0.0
        %449 = vmatpush1.msra.mxu0 0.0
        %450 = vmatprep.subr.mxu0 0.0
        %451 = vmatpush1.msra.mxu0 0.0
        %452 = vmatprep.subr.mxu0 0.0
        %453 = vmatpush1.msra.mxu0 0.0
        %454 = vmatprep.subr.mxu0 0.0
        %455 = vmatpush1.msra.mxu0 0.0
        %456 = vmatprep.subr.mxu0 0.0
        %457 = vmatpush1.msra.mxu0 0.0
        %458 = vmatprep.subr.mxu0 0.0
        %459 = vmatpush1.msra.mxu0 0.0
        %460 = vmatprep.subr.mxu0 0.0
        %461 = vmatpush1.msra.mxu0 0.0
        %462 = vmatprep.subr.mxu0 0.0
        %463 = vmatpush1.msra.mxu0 0.0
        %464 = vmatprep.subr.mxu0 0.0
        %465 = vmatpush1.msra.mxu0 0.0
        %466 = vmatprep.subr.mxu0 0.0
        %467 = vmatpush1.msra.mxu0 0.0
        %468 = vmatprep.subr.mxu0 0.0
        %469 = vmatpush1.msra.mxu0 0.0
        %470 = vmatprep.subr.mxu0 0.0
        %471 = vmatpush1.msra.mxu0 0.0
        %472 = vmatprep.subr.mxu0 0.0
        %473 = vmatpush1.msra.mxu0 0.0
        %474 = vmatprep.subr.mxu0 0.0
        %475 = vmatpush1.msra.mxu0 0.0
        %476 = vmatprep.subr.mxu0 0.0
        %477 = vmatpush1.msra.mxu0 0.0
        %478 = vmatprep.subr.mxu0 0.0
        %479 = vmatpush1.msra.mxu0 0.0
        %480 = vmatprep.subr.mxu0 0.0
        %481 = vmatpush1.msra.mxu0 0.0
        %482 = vmatprep.subr.mxu0 0.0
        %483 = vmatpush1.msra.mxu0 0.0
        %484 = vmatprep.subr.mxu0 0.0
        %485 = vmatpush1.msra.mxu0 0.0
        %486 = vmatprep.subr.mxu0 0.0
        %487 = vmatpush1.msra.mxu0 0.0
        %488 = vmatprep.subr.mxu0 0.0
        %489 = vmatpush1.msra.mxu0 0.0
        %490 = vmatprep.subr.mxu0 0.0
        %491 = vmatpush1.msra.mxu0 0.0
        %492 = vmatprep.subr.mxu0 0.0
        %493 = vmatpush1.msra.mxu0 0.0
        %494 = vmatprep.mubr.f32.mxu0 0.0
        %495 = vmatmul.mubr.f32.gmra.mrb[0].mxu0 %v425
        %v496 = vpop.f32.mrb[0].mxu0
        %v497 = vadd.f32 0.0, %v496
        %v498 = vpop.f32.mrb[0].mxu0
        %499 = vdwg.mxu0
        %v500 = vadd.f32 %v417, %v497
        %s501 = scalar_lea.vmem %s1, 16
        %v502 = vld [vmem:[%s501] sm:$0xf]
        %503 = vrot.lane.b32.xlu0 %v421, 127
        %v504 = vpop.permute.xlu0 %503
        %v506 = vsel %vm186, %v502, 0
        %v508 = vsel %vm190, %v504, 0
        %510 = vmatprep.subr.mxu0 0.0
        %511 = vmatpush1.msra.mxu0 %v508
        %512 = vmatprep.subr.mxu0 0.0
        %513 = vmatpush1.msra.mxu0 0.0
        %514 = vmatprep.subr.mxu0 0.0
        %515 = vmatpush1.msra.mxu0 0.0
        %516 = vmatprep.subr.mxu0 0.0
        %517 = vmatpush1.msra.mxu0 0.0
        %518 = vmatprep.subr.mxu0 0.0
        %519 = vmatpush1.msra.mxu0 0.0
        %520 = vmatprep.subr.mxu0 0.0
        %521 = vmatpush1.msra.mxu0 0.0
        %522 = vmatprep.subr.mxu0 0.0
        %523 = vmatpush1.msra.mxu0 0.0
        %524 = vmatprep.subr.mxu0 0.0
        %525 = vmatpush1.msra.mxu0 0.0
        %526 = vmatprep.subr.mxu0 0.0
        %527 = vmatpush1.msra.mxu0 0.0
        %528 = vmatprep.subr.mxu0 0.0
        %529 = vmatpush1.msra.mxu0 0.0
        %530 = vmatprep.subr.mxu0 0.0
        %531 = vmatpush1.msra.mxu0 0.0
        %532 = vmatprep.subr.mxu0 0.0
        %533 = vmatpush1.msra.mxu0 0.0
        %534 = vmatprep.subr.mxu0 0.0
        %535 = vmatpush1.msra.mxu0 0.0
        %536 = vmatprep.subr.mxu0 0.0
        %537 = vmatpush1.msra.mxu0 0.0
        %538 = vmatprep.subr.mxu0 0.0
        %539 = vmatpush1.msra.mxu0 0.0
        %540 = vmatprep.subr.mxu0 0.0
        %541 = vmatpush1.msra.mxu0 0.0
        %542 = vmatprep.subr.mxu0 0.0
        %543 = vmatpush1.msra.mxu0 0.0
        %544 = vmatprep.subr.mxu0 0.0
        %545 = vmatpush1.msra.mxu0 0.0
        %546 = vmatprep.subr.mxu0 0.0
        %547 = vmatpush1.msra.mxu0 0.0
        %548 = vmatprep.subr.mxu0 0.0
        %549 = vmatpush1.msra.mxu0 0.0
        %550 = vmatprep.subr.mxu0 0.0
        %551 = vmatpush1.msra.mxu0 0.0
        %552 = vmatprep.subr.mxu0 0.0
        %553 = vmatpush1.msra.mxu0 0.0
        %554 = vmatprep.subr.mxu0 0.0
        %555 = vmatpush1.msra.mxu0 0.0
        %556 = vmatprep.subr.mxu0 0.0
        %557 = vmatpush1.msra.mxu0 0.0
        %558 = vmatprep.subr.mxu0 0.0
        %559 = vmatpush1.msra.mxu0 0.0
        %560 = vmatprep.subr.mxu0 0.0
        %561 = vmatpush1.msra.mxu0 0.0
        %562 = vmatprep.subr.mxu0 0.0
        %563 = vmatpush1.msra.mxu0 0.0
        %564 = vmatprep.subr.mxu0 0.0
        %565 = vmatpush1.msra.mxu0 0.0
        %566 = vmatprep.subr.mxu0 0.0
        %567 = vmatpush1.msra.mxu0 0.0
        %568 = vmatprep.subr.mxu0 0.0
        %569 = vmatpush1.msra.mxu0 0.0
        %570 = vmatprep.subr.mxu0 0.0
        %571 = vmatpush1.msra.mxu0 0.0
        %572 = vmatprep.subr.mxu0 0.0
        %573 = vmatpush1.msra.mxu0 0.0
        %574 = vmatprep.mubr.f32.mxu0 0.0
        %575 = vmatmul.mubr.f32.gmra.mrb[0].mxu0 %v506
        %v576 = vpop.f32.mrb[0].mxu0
        %v577 = vadd.f32 0.0, %v576
        %v578 = vpop.f32.mrb[0].mxu0
        %579 = vdwg.mxu0
        %v580 = vadd.f32 %v500, %v577
        %s581 = scalar_lea.vmem %s1, 20
        %v582 = vld [vmem:[%s581] sm:$0xf]
        %583 = vrot.lane.b32.xlu0 %v421, 126
        %v584 = vpop.permute.xlu0 %583
        %v586 = vsel %vm186, %v582, 0
        %v588 = vsel %vm190, %v584, 0
        %590 = vmatprep.subr.mxu0 0.0
        %591 = vmatpush1.msra.mxu0 %v588
        %592 = vmatprep.subr.mxu0 0.0
        %593 = vmatpush1.msra.mxu0 0.0
        %594 = vmatprep.subr.mxu0 0.0
        %595 = vmatpush1.msra.mxu0 0.0
        %596 = vmatprep.subr.mxu0 0.0
        %597 = vmatpush1.msra.mxu0 0.0
        %598 = vmatprep.subr.mxu0 0.0
        %599 = vmatpush1.msra.mxu0 0.0
        %600 = vmatprep.subr.mxu0 0.0
        %601 = vmatpush1.msra.mxu0 0.0
        %602 = vmatprep.subr.mxu0 0.0
        %603 = vmatpush1.msra.mxu0 0.0
        %604 = vmatprep.subr.mxu0 0.0
        %605 = vmatpush1.msra.mxu0 0.0
        %606 = vmatprep.subr.mxu0 0.0
        %607 = vmatpush1.msra.mxu0 0.0
        %608 = vmatprep.subr.mxu0 0.0
        %609 = vmatpush1.msra.mxu0 0.0
        %610 = vmatprep.subr.mxu0 0.0
        %611 = vmatpush1.msra.mxu0 0.0
        %612 = vmatprep.subr.mxu0 0.0
        %613 = vmatpush1.msra.mxu0 0.0
        %614 = vmatprep.subr.mxu0 0.0
        %615 = vmatpush1.msra.mxu0 0.0
        %616 = vmatprep.subr.mxu0 0.0
        %617 = vmatpush1.msra.mxu0 0.0
        %618 = vmatprep.subr.mxu0 0.0
        %619 = vmatpush1.msra.mxu0 0.0
        %620 = vmatprep.subr.mxu0 0.0
        %621 = vmatpush1.msra.mxu0 0.0
        %622 = vmatprep.subr.mxu0 0.0
        %623 = vmatpush1.msra.mxu0 0.0
        %624 = vmatprep.subr.mxu0 0.0
        %625 = vmatpush1.msra.mxu0 0.0
        %626 = vmatprep.subr.mxu0 0.0
        %627 = vmatpush1.msra.mxu0 0.0
        %628 = vmatprep.subr.mxu0 0.0
        %629 = vmatpush1.msra.mxu0 0.0
        %630 = vmatprep.subr.mxu0 0.0
        %631 = vmatpush1.msra.mxu0 0.0
        %632 = vmatprep.subr.mxu0 0.0
        %633 = vmatpush1.msra.mxu0 0.0
        %634 = vmatprep.subr.mxu0 0.0
        %635 = vmatpush1.msra.mxu0 0.0
        %636 = vmatprep.subr.mxu0 0.0
        %637 = vmatpush1.msra.mxu0 0.0
        %638 = vmatprep.subr.mxu0 0.0
        %639 = vmatpush1.msra.mxu0 0.0
        %640 = vmatprep.subr.mxu0 0.0
        %641 = vmatpush1.msra.mxu0 0.0
        %642 = vmatprep.subr.mxu0 0.0
        %643 = vmatpush1.msra.mxu0 0.0
        %644 = vmatprep.subr.mxu0 0.0
        %645 = vmatpush1.msra.mxu0 0.0
        %646 = vmatprep.subr.mxu0 0.0
        %647 = vmatpush1.msra.mxu0 0.0
        %648 = vmatprep.subr.mxu0 0.0
        %649 = vmatpush1.msra.mxu0 0.0
        %650 = vmatprep.subr.mxu0 0.0
        %651 = vmatpush1.msra.mxu0 0.0
        %652 = vmatprep.subr.mxu0 0.0
        %653 = vmatpush1.msra.mxu0 0.0
        %654 = vmatprep.mubr.f32.mxu0 0.0
        %655 = vmatmul.mubr.f32.gmra.mrb[0].mxu0 %v586
        %v656 = vpop.f32.mrb[0].mxu0
        %v657 = vadd.f32 0.0, %v656
        %v658 = vpop.f32.mrb[0].mxu0
        %659 = vdwg.mxu0
        %v660 = vadd.f32 %v580, %v657
        %s661 = sadd.s32 %s172, 2
        %s662 = smul.u32 %s661, 4
        %s663 = scalar_lea.vmem %s165, %s662
        %v664 = vld [vmem:[%s663] sm:$0xf]
        %s665 = scalar_lea.vmem %s1, 24
        %v666 = vld [vmem:[%s665] sm:$0xf]
        %v668 = vsel %vm186, %v666, 0
        %v671 = vsel %vm190, %v664, 0
        %673 = vmatprep.subr.mxu0 0.0
        %674 = vmatpush1.msra.mxu0 %v671
        %675 = vmatprep.subr.mxu0 0.0
        %676 = vmatpush1.msra.mxu0 0.0
        %677 = vmatprep.subr.mxu0 0.0
        %678 = vmatpush1.msra.mxu0 0.0
        %679 = vmatprep.subr.mxu0 0.0
        %680 = vmatpush1.msra.mxu0 0.0
        %681 = vmatprep.subr.mxu0 0.0
        %682 = vmatpush1.msra.mxu0 0.0
        %683 = vmatprep.subr.mxu0 0.0
        %684 = vmatpush1.msra.mxu0 0.0
        %685 = vmatprep.subr.mxu0 0.0
        %686 = vmatpush1.msra.mxu0 0.0
        %687 = vmatprep.subr.mxu0 0.0
        %688 = vmatpush1.msra.mxu0 0.0
        %689 = vmatprep.subr.mxu0 0.0
        %690 = vmatpush1.msra.mxu0 0.0
        %691 = vmatprep.subr.mxu0 0.0
        %692 = vmatpush1.msra.mxu0 0.0
        %693 = vmatprep.subr.mxu0 0.0
        %694 = vmatpush1.msra.mxu0 0.0
        %695 = vmatprep.subr.mxu0 0.0
        %696 = vmatpush1.msra.mxu0 0.0
        %697 = vmatprep.subr.mxu0 0.0
        %698 = vmatpush1.msra.mxu0 0.0
        %699 = vmatprep.subr.mxu0 0.0
        %700 = vmatpush1.msra.mxu0 0.0
        %701 = vmatprep.subr.mxu0 0.0
        %702 = vmatpush1.msra.mxu0 0.0
        %703 = vmatprep.subr.mxu0 0.0
        %704 = vmatpush1.msra.mxu0 0.0
        %705 = vmatprep.subr.mxu0 0.0
        %706 = vmatpush1.msra.mxu0 0.0
        %707 = vmatprep.subr.mxu0 0.0
        %708 = vmatpush1.msra.mxu0 0.0
        %709 = vmatprep.subr.mxu0 0.0
        %710 = vmatpush1.msra.mxu0 0.0
        %711 = vmatprep.subr.mxu0 0.0
        %712 = vmatpush1.msra.mxu0 0.0
        %713 = vmatprep.subr.mxu0 0.0
        %714 = vmatpush1.msra.mxu0 0.0
        %715 = vmatprep.subr.mxu0 0.0
        %716 = vmatpush1.msra.mxu0 0.0
        %717 = vmatprep.subr.mxu0 0.0
        %718 = vmatpush1.msra.mxu0 0.0
        %719 = vmatprep.subr.mxu0 0.0
        %720 = vmatpush1.msra.mxu0 0.0
        %721 = vmatprep.subr.mxu0 0.0
        %722 = vmatpush1.msra.mxu0 0.0
        %723 = vmatprep.subr.mxu0 0.0
        %724 = vmatpush1.msra.mxu0 0.0
        %725 = vmatprep.subr.mxu0 0.0
        %726 = vmatpush1.msra.mxu0 0.0
        %727 = vmatprep.subr.mxu0 0.0
        %728 = vmatpush1.msra.mxu0 0.0
        %729 = vmatprep.subr.mxu0 0.0
        %730 = vmatpush1.msra.mxu0 0.0
        %731 = vmatprep.subr.mxu0 0.0
        %732 = vmatpush1.msra.mxu0 0.0
        %733 = vmatprep.subr.mxu0 0.0
        %734 = vmatpush1.msra.mxu0 0.0
        %735 = vmatprep.subr.mxu0 0.0
        %736 = vmatpush1.msra.mxu0 0.0
        %737 = vmatprep.mubr.f32.mxu0 0.0
        %738 = vmatmul.mubr.f32.gmra.mrb[0].mxu0 %v668
        %v739 = vpop.f32.mrb[0].mxu0
        %v740 = vadd.f32 0.0, %v739
        %v741 = vpop.f32.mrb[0].mxu0
        %742 = vdwg.mxu0
        %v743 = vadd.f32 %v660, %v740
        %s744 = scalar_lea.vmem %s1, 28
        %v745 = vld [vmem:[%s744] sm:$0xf]
        %746 = vrot.lane.b32.xlu0 %v664, 127
        %v747 = vpop.permute.xlu0 %746
        %v749 = vsel %vm186, %v745, 0
        %v751 = vsel %vm190, %v747, 0
        %753 = vmatprep.subr.mxu0 0.0
        %754 = vmatpush1.msra.mxu0 %v751
        %755 = vmatprep.subr.mxu0 0.0
        %756 = vmatpush1.msra.mxu0 0.0
        %757 = vmatprep.subr.mxu0 0.0
        %758 = vmatpush1.msra.mxu0 0.0
        %759 = vmatprep.subr.mxu0 0.0
        %760 = vmatpush1.msra.mxu0 0.0
        %761 = vmatprep.subr.mxu0 0.0
        %762 = vmatpush1.msra.mxu0 0.0
        %763 = vmatprep.subr.mxu0 0.0
        %764 = vmatpush1.msra.mxu0 0.0
        %765 = vmatprep.subr.mxu0 0.0
        %766 = vmatpush1.msra.mxu0 0.0
        %767 = vmatprep.subr.mxu0 0.0
        %768 = vmatpush1.msra.mxu0 0.0
        %769 = vmatprep.subr.mxu0 0.0
        %770 = vmatpush1.msra.mxu0 0.0
        %771 = vmatprep.subr.mxu0 0.0
        %772 = vmatpush1.msra.mxu0 0.0
        %773 = vmatprep.subr.mxu0 0.0
        %774 = vmatpush1.msra.mxu0 0.0
        %775 = vmatprep.subr.mxu0 0.0
        %776 = vmatpush1.msra.mxu0 0.0
        %777 = vmatprep.subr.mxu0 0.0
        %778 = vmatpush1.msra.mxu0 0.0
        %779 = vmatprep.subr.mxu0 0.0
        %780 = vmatpush1.msra.mxu0 0.0
        %781 = vmatprep.subr.mxu0 0.0
        %782 = vmatpush1.msra.mxu0 0.0
        %783 = vmatprep.subr.mxu0 0.0
        %784 = vmatpush1.msra.mxu0 0.0
        %785 = vmatprep.subr.mxu0 0.0
        %786 = vmatpush1.msra.mxu0 0.0
        %787 = vmatprep.subr.mxu0 0.0
        %788 = vmatpush1.msra.mxu0 0.0
        %789 = vmatprep.subr.mxu0 0.0
        %790 = vmatpush1.msra.mxu0 0.0
        %791 = vmatprep.subr.mxu0 0.0
        %792 = vmatpush1.msra.mxu0 0.0
        %793 = vmatprep.subr.mxu0 0.0
        %794 = vmatpush1.msra.mxu0 0.0
        %795 = vmatprep.subr.mxu0 0.0
        %796 = vmatpush1.msra.mxu0 0.0
        %797 = vmatprep.subr.mxu0 0.0
        %798 = vmatpush1.msra.mxu0 0.0
        %799 = vmatprep.subr.mxu0 0.0
        %800 = vmatpush1.msra.mxu0 0.0
        %801 = vmatprep.subr.mxu0 0.0
        %802 = vmatpush1.msra.mxu0 0.0
        %803 = vmatprep.subr.mxu0 0.0
        %804 = vmatpush1.msra.mxu0 0.0
        %805 = vmatprep.subr.mxu0 0.0
        %806 = vmatpush1.msra.mxu0 0.0
        %807 = vmatprep.subr.mxu0 0.0
        %808 = vmatpush1.msra.mxu0 0.0
        %809 = vmatprep.subr.mxu0 0.0
        %810 = vmatpush1.msra.mxu0 0.0
        %811 = vmatprep.subr.mxu0 0.0
        %812 = vmatpush1.msra.mxu0 0.0
        %813 = vmatprep.subr.mxu0 0.0
        %814 = vmatpush1.msra.mxu0 0.0
        %815 = vmatprep.subr.mxu0 0.0
        %816 = vmatpush1.msra.mxu0 0.0
        %817 = vmatprep.mubr.f32.mxu0 0.0
        %818 = vmatmul.mubr.f32.gmra.mrb[0].mxu0 %v749
        %v819 = vpop.f32.mrb[0].mxu0
        %v820 = vadd.f32 0.0, %v819
        %v821 = vpop.f32.mrb[0].mxu0
        %822 = vdwg.mxu0
        %v823 = vadd.f32 %v743, %v820
        %s824 = scalar_lea.vmem %s1, 32
        %v825 = vld [vmem:[%s824] sm:$0xf]
        %826 = vrot.lane.b32.xlu0 %v664, 126
        %v827 = vpop.permute.xlu0 %826
        %v829 = vsel %vm186, %v825, 0
        %v831 = vsel %vm190, %v827, 0
        %833 = vmatprep.subr.mxu0 0.0
        %834 = vmatpush1.msra.mxu0 %v831
        %835 = vmatprep.subr.mxu0 0.0
        %836 = vmatpush1.msra.mxu0 0.0
        %837 = vmatprep.subr.mxu0 0.0
        %838 = vmatpush1.msra.mxu0 0.0
        %839 = vmatprep.subr.mxu0 0.0
        %840 = vmatpush1.msra.mxu0 0.0
        %841 = vmatprep.subr.mxu0 0.0
        %842 = vmatpush1.msra.mxu0 0.0
        %843 = vmatprep.subr.mxu0 0.0
        %844 = vmatpush1.msra.mxu0 0.0
        %845 = vmatprep.subr.mxu0 0.0
        %846 = vmatpush1.msra.mxu0 0.0
        %847 = vmatprep.subr.mxu0 0.0
        %848 = vmatpush1.msra.mxu0 0.0
        %849 = vmatprep.subr.mxu0 0.0
        %850 = vmatpush1.msra.mxu0 0.0
        %851 = vmatprep.subr.mxu0 0.0
        %852 = vmatpush1.msra.mxu0 0.0
        %853 = vmatprep.subr.mxu0 0.0
        %854 = vmatpush1.msra.mxu0 0.0
        %855 = vmatprep.subr.mxu0 0.0
        %856 = vmatpush1.msra.mxu0 0.0
        %857 = vmatprep.subr.mxu0 0.0
        %858 = vmatpush1.msra.mxu0 0.0
        %859 = vmatprep.subr.mxu0 0.0
        %860 = vmatpush1.msra.mxu0 0.0
        %861 = vmatprep.subr.mxu0 0.0
        %862 = vmatpush1.msra.mxu0 0.0
        %863 = vmatprep.subr.mxu0 0.0
        %864 = vmatpush1.msra.mxu0 0.0
        %865 = vmatprep.subr.mxu0 0.0
        %866 = vmatpush1.msra.mxu0 0.0
        %867 = vmatprep.subr.mxu0 0.0
        %868 = vmatpush1.msra.mxu0 0.0
        %869 = vmatprep.subr.mxu0 0.0
        %870 = vmatpush1.msra.mxu0 0.0
        %871 = vmatprep.subr.mxu0 0.0
        %872 = vmatpush1.msra.mxu0 0.0
        %873 = vmatprep.subr.mxu0 0.0
        %874 = vmatpush1.msra.mxu0 0.0
        %875 = vmatprep.subr.mxu0 0.0
        %876 = vmatpush1.msra.mxu0 0.0
        %877 = vmatprep.subr.mxu0 0.0
        %878 = vmatpush1.msra.mxu0 0.0
        %879 = vmatprep.subr.mxu0 0.0
        %880 = vmatpush1.msra.mxu0 0.0
        %881 = vmatprep.subr.mxu0 0.0
        %882 = vmatpush1.msra.mxu0 0.0
        %883 = vmatprep.subr.mxu0 0.0
        %884 = vmatpush1.msra.mxu0 0.0
        %885 = vmatprep.subr.mxu0 0.0
        %886 = vmatpush1.msra.mxu0 0.0
        %887 = vmatprep.subr.mxu0 0.0
        %888 = vmatpush1.msra.mxu0 0.0
        %889 = vmatprep.subr.mxu0 0.0
        %890 = vmatpush1.msra.mxu0 0.0
        %891 = vmatprep.subr.mxu0 0.0
        %892 = vmatpush1.msra.mxu0 0.0
        %893 = vmatprep.subr.mxu0 0.0
        %894 = vmatpush1.msra.mxu0 0.0
        %895 = vmatprep.subr.mxu0 0.0
        %896 = vmatpush1.msra.mxu0 0.0
        %897 = vmatprep.mubr.f32.mxu0 0.0
        %898 = vmatmul.mubr.f32.gmra.mrb[0].mxu0 %v829
        %v899 = vpop.f32.mrb[0].mxu0
        %v900 = vadd.f32 0.0, %v899
        %v901 = vpop.f32.mrb[0].mxu0
        %902 = vdwg.mxu0
        %v903 = vadd.f32 %v823, %v900
        %v904 = vld [vmem:[%s2] sm:$0xf]
        %906 = vset.pattern.permute.xlu0 0
        %907 = vperm.xlu0 %906, %v904
        %v908 = vpop.permute.xlu0 %907
        %v910 = vadd.f32 %v903, %v908
        %v911 = vmax.f32 %v910, 0.0
        %s912 = scalar_lea.vmem %s170, %s177
        %vm913 = vcmask 125952
        %914 = vst.msk [vmem:[%s912] sm:$0xf] %vm913, %v911
      $region37: #{up_transition.7} parent=31 // loop_footer
        %s176 = sadd.s32 1, %s172
      $region38: #{up_transition.7} parent=31 // loop_footer_branch
        %171 = sbr.rel target = $region34
      $region39: #{up_transition.7} parent=31 // loop_exit
        _
      %p915 = scmp.lt.s32.totalorder %s14, 1
      %s916 = scalar_select %p915, %s14, 1
      %s917 = smul.addr %s916, 16
      %s918 = smul.addr %s917, 4
      %s919 = scalar_lea.vmem %s3, %s918
      // Predicated region
      $region40: #{up_transition.7} parent=31 // pred_check
        %p920 = pneg %p100
      $region41: #{up_transition.7} parent=31 // pred_check_branch
        %922 = sbr.rel (%p920) target = $region43
      $region42: #{up_transition.7} parent=31 // pred_region
        _
      $region43: #{up_transition.7} parent=31 // pred_fallthru
        _
    $region32: #{up_transition.7} parent=5 // pred_fallthru
      _
    %p923 = scmp.le.s32.totalorder 2, %s9
    // Predicated region
    $region44: #{up_transition.7} parent=5 // pred_check
      %p924 = pneg %p923
    $region45: #{up_transition.7} parent=5 // pred_check_branch
      %926 = sbr.rel (%p924) target = $region47
    $region46: #{up_transition.7} parent=5 // pred_region
      %s927 = ssub.s32 %s9, 2
      // Predicated region
      $region48: #{up_transition.7} parent=46 // pred_check
        %p928 = pneg %p106
      $region49: #{up_transition.7} parent=46 // pred_check_branch
        %930 = sbr.rel (%p928) target = $region51
      $region50: #{up_transition.7} parent=46 // pred_region
        %p931 = scmp.lt.s32.totalorder %s15, 1
        %s932 = scalar_select %p931, %s15, 1
        %s933 = smul.addr %s932, 16
        %s934 = smul.addr %s933, 4
        %s935 = scalar_lea.vmem %s3, %s934
      $region51: #{up_transition.7} parent=46 // pred_fallthru
        _
    $region47: #{up_transition.7} parent=5 // pred_fallthru
      _
  $region6: #{up_transition.7} parent=0 // loop_footer
    %s13 = sadd.s32 1, %s9
  $region7: #{up_transition.7} parent=0 // loop_footer_branch
    %8 = sbr.rel target = $region3
  $region8: #{up_transition.7} parent=0 // loop_exit
    _

// kernel: up_transition.6
$region0: #{up_transition.6}
  #allocation0 [shape = 'u32[]', space=smem, size = 0x4, offset = 0x4, fixed_abs, tag = 'smem constant byte address 0x4 - core index']
  #allocation1 [shape = 'u32[144,128]{1,0:T(1,128)}', space=vmem, size = 0x12000, scoped, tag = 'internal scratch']
  %s0 = inlined_call_operand.vmem [shape: f32[2,18,8,18], index: 0, kind: input, shape index: {}]
  %s1 = inlined_call_operand.vmem [shape: f32[9,4,8], index: 1, kind: input, shape index: {}]
  %s2 = inlined_call_operand.vmem [shape: f32[4,1], index: 2, kind: input, shape index: {}]
  %s3 = inlined_call_operand.vmem [shape: f32[2,16,4,16], index: 3, kind: output, shape index: {}]
  %s4 = sld [smem:[#allocation0]]
  $region52: #{up_transition.6} parent=0
    _
  %s6 = ssub.s32 1, %s4
  %s7 = scalar_select 0, %s6, %s4
  loop: start=0, step=1, limit=4
  $region2: #{up_transition.6} parent=0 // loop_pre_header
    _
  $region3: #{up_transition.6} parent=0 // loop_header
    %s9 = sphi 0, %s13
    %p10 = scmp.ge.s32.totalorder %s9, 4
    %s19 = sphi 0, %s21
    %s22 = sphi 0, %s19
    %s23 = sphi 0, %s22
    %s39 = sphi 0, %s23
    %s43 = sphi 0, %s43
    %s45 = sphi 0, %s43
    %s46 = sphi 0, %s45
    %s60 = sphi 0, %s46
    %s64 = sphi 0, %s64
    %s66 = sphi 0, %s64
    %s67 = sphi 0, %s66
    %s81 = sphi 0, %s67
    %s87 = sphi 0, %s89
    %s90 = sphi 0, %s87
    %s91 = sphi 0, %s90
    %s107 = sphi 0, %s91
  $region4: #{up_transition.6} parent=0 // loop_header_branch
    %12 = sbr.rel (%p10) target = $region8
  $region5: #{up_transition.6} parent=0 // loop_body
    %s14 = ssub.s32 %s9, 1
    %s15 = ssub.s32 %s9, 2
    %s16 = sadd.s32 %s9, 1
    %s17 = ssub.s32 %s9, %s16
    %p18 = scmp.eq.s32.totalorder %s17, 0
    %s20 = sadd.s32 %s19, 1
    %s21 = scalar_select %p18, %s19, %s20
    %p24 = pneg %p18
    %p25 = scmp.eq.s32.totalorder %s9, 1
    %p26 = por %p24, %p25
    %p27 = scmp.ne.s32.totalorder %s19, %s22
    %p28 = scmp.eq.s32.totalorder %s9, 0
    %p29 = por %p27, %p28
    %p30 = scmp.ne.s32.totalorder %s19, %s22
    %p31 = scmp.eq.s32.totalorder %s14, 1
    %p32 = por %p30, %p31
    %p33 = scmp.ne.s32.totalorder %s22, %s23
    %p34 = scmp.eq.s32.totalorder %s14, 0
    %p35 = por %p33, %p34
    %p36 = scmp.ne.s32.totalorder %s22, %s23
    %p37 = scmp.eq.s32.totalorder %s15, 1
    %p38 = por %p36, %p37
    %p40 = scmp.ne.s32.totalorder %s23, %s39
    %p41 = scmp.eq.s32.totalorder %s15, 0
    %p42 = por %p40, %p41
    %s44 = sadd.s32 %s43, 1
    %p47 = scmp.eq.s32.totalorder %s9, 1
    %p48 = scmp.ne.s32.totalorder %s43, %s45
    %p49 = scmp.eq.s32.totalorder %s9, 0
    %p50 = por %p48, %p49
    %p51 = scmp.ne.s32.totalorder %s43, %s45
    %p52 = scmp.eq.s32.totalorder %s14, 1
    %p53 = por %p51, %p52
    %p54 = scmp.ne.s32.totalorder %s45, %s46
    %p55 = scmp.eq.s32.totalorder %s14, 0
    %p56 = por %p54, %p55
    %p57 = scmp.ne.s32.totalorder %s45, %s46
    %p58 = scmp.eq.s32.totalorder %s15, 1
    %p59 = por %p57, %p58
    %p61 = scmp.ne.s32.totalorder %s46, %s60
    %p62 = scmp.eq.s32.totalorder %s15, 0
    %p63 = por %p61, %p62
    %s65 = sadd.s32 %s64, 1
    %p68 = scmp.eq.s32.totalorder %s9, 1
    %p69 = scmp.ne.s32.totalorder %s64, %s66
    %p70 = scmp.eq.s32.totalorder %s9, 0
    %p71 = por %p69, %p70
    %p72 = scmp.ne.s32.totalorder %s64, %s66
    %p73 = scmp.eq.s32.totalorder %s14, 1
    %p74 = por %p72, %p73
    %p75 = scmp.ne.s32.totalorder %s66, %s67
    %p76 = scmp.eq.s32.totalorder %s14, 0
    %p77 = por %p75, %p76
    %p78 = scmp.ne.s32.totalorder %s66, %s67
    %p79 = scmp.eq.s32.totalorder %s15, 1
    %p80 = por %p78, %p79
    %p82 = scmp.ne.s32.totalorder %s67, %s81
    %p83 = scmp.eq.s32.totalorder %s15, 0
    %p84 = por %p82, %p83
    %s85 = ssub.s32 %s9, %s16
    %p86 = scmp.eq.s32.totalorder %s85, 0
    %s88 = sadd.s32 %s87, 1
    %s89 = scalar_select %p86, %s87, %s88
    %p92 = pneg %p86
    %p93 = scmp.eq.s32.totalorder %s9, 1
    %p94 = por %p92, %p93
    %p95 = scmp.ne.s32.totalorder %s87, %s90
    %p96 = scmp.eq.s32.totalorder %s9, 0
    %p97 = por %p95, %p96
    %p98 = scmp.ne.s32.totalorder %s87, %s90
    %p99 = scmp.eq.s32.totalorder %s14, 1
    %p100 = por %p98, %p99
    %p101 = scmp.ne.s32.totalorder %s90, %s91
    %p102 = scmp.eq.s32.totalorder %s14, 0
    %p103 = por %p101, %p102
    %p104 = scmp.ne.s32.totalorder %s90, %s91
    %p105 = scmp.eq.s32.totalorder %s15, 1
    %p106 = por %p104, %p105
    %p108 = scmp.ne.s32.totalorder %s91, %s107
    %p109 = scmp.eq.s32.totalorder %s15, 0
    %p110 = por %p108, %p109
    %p111 = scmp.le.s32.totalorder 1, %s9
    %p112 = scmp.lt.s32.totalorder %s9, 3
    %p113 = pnand %p111, %p112
    %p114 = pneg %p113
    // Predicated region
    $region9: #{up_transition.6} parent=5 // pred_check
      _
    $region10: #{up_transition.6} parent=5 // pred_check_branch
      %116 = sbr.rel (%p113) target = $region12
    $region11: #{up_transition.6} parent=5 // pred_region
      %s117 = ssub.s32 %s9, 1
      // Predicated region
      $region13: #{up_transition.6} parent=11 // pred_check
        %p118 = pneg %p56
      $region14: #{up_transition.6} parent=11 // pred_check_branch
        %120 = sbr.rel (%p118) target = $region16
      $region15: #{up_transition.6} parent=11 // pred_region
        _
      $region16: #{up_transition.6} parent=11 // pred_fallthru
        _
      // Predicated region
      $region17: #{up_transition.6} parent=11 // pred_check
        %p121 = pneg %p77
      $region18: #{up_transition.6} parent=11 // pred_check_branch
        %123 = sbr.rel (%p121) target = $region20
      $region19: #{up_transition.6} parent=11 // pred_region
        _
      $region20: #{up_transition.6} parent=11 // pred_fallthru
        _
    $region12: #{up_transition.6} parent=5 // pred_fallthru
      _
    %p124 = scmp.lt.s32.totalorder %s9, 2
    // Predicated region
    $region21: #{up_transition.6} parent=5 // pred_check
      %p125 = pneg %p124
    $region22: #{up_transition.6} parent=5 // pred_check_branch
      %127 = sbr.rel (%p125) target = $region24
    $region23: #{up_transition.6} parent=5 // pred_region
      // Predicated region
      $region25: #{up_transition.6} parent=23 // pred_check
        %p128 = pneg %p29
      $region26: #{up_transition.6} parent=23 // pred_check_branch
        %130 = sbr.rel (%p128) target = $region28
      $region27: #{up_transition.6} parent=23 // pred_region
        %p131 = scmp.lt.s32.totalorder %s9, 1
        %s132 = scalar_select %p131, %s9, 1
        %s133 = smul.addr %s132, 18
        %s134 = smul.addr %s133, 8
        %s135 = scalar_lea.vmem %s0, %s134
      $region28: #{up_transition.6} parent=23 // pred_fallthru
        _
    $region24: #{up_transition.6} parent=5 // pred_fallthru
      _
    %p136 = scmp.le.s32.totalorder 1, %s9
    %p137 = scmp.lt.s32.totalorder %s9, 3
    %p138 = pnand %p136, %p137
    %p139 = pneg %p138
    // Predicated region
    $region29: #{up_transition.6} parent=5 // pred_check
      _
    $region30: #{up_transition.6} parent=5 // pred_check_branch
      %141 = sbr.rel (%p138) target = $region32
    $region31: #{up_transition.6} parent=5 // pred_region
      %s142 = ssub.s32 %s9, 1
      %p143 = scmp.lt.s32.totalorder %s14, 1
      %s144 = scalar_select %p143, %s14, 1
      %s145 = smul.addr %s144, 18
      %s146 = smul.addr %s145, 8
      %s147 = scalar_lea.vmem %s0, %s146
      %p148 = pneg %p35
      %p149 = pneg %p32
      %p150 = pneg %p56
      %p151 = pneg %p53
      %p152 = pneg %p77
      %p153 = pneg %p74
      %p154 = pneg %p103
      %p155 = pneg %p100
      %p156 = scmp.lt.s32.totalorder %s14, 1
      %s157 = scalar_select %p156, %s14, 1
      %s158 = smul.addr %s157, 16
      %s159 = smul.addr %s158, 4
      %s160 = scalar_lea.vmem %s3, %s159
      %p161 = scmp.lt.s32.totalorder %s14, 1
      %s162 = scalar_select %p161, %s14, 1
      %s163 = smul.addr %s162, 18
      %s164 = smul.addr %s163, 8
      %s165 = scalar_lea.vmem %s0, %s164
      %p166 = scmp.lt.s32.totalorder %s14, 1
      %s167 = scalar_select %p166, %s14, 1
      %s168 = smul.addr %s167, 16
      %s169 = smul.addr %s168, 4
      %s170 = scalar_lea.vmem %s3, %s169
      loop: start=0, step=1, limit=16
      $region33: #{up_transition.6} parent=31 // loop_pre_header
        _
      $region34: #{up_transition.6} parent=31 // loop_header
        %s172 = sphi 0, %s176
        %p173 = scmp.ge.s32.totalorder %s172, 16
      $region35: #{up_transition.6} parent=31 // loop_header_branch
        %175 = sbr.rel (%p173) target = $region39
      $region36: #{up_transition.6} parent=31 // loop_body
        %s177 = smul.u32 %s172, 8
        %s178 = scalar_lea.vmem %s165, %s177
        %v179 = vld [vmem:[%s178] sm:$0xff]
        %v180 = vld [vmem:[%s1] sm:$0xf]
        %s181 = scalar_lea.vmem %s1, 4
        %v182 = vld [vmem:[%s181] sm:$0xf]
        %184 = vrot.lane.b32.xlu0 %v179, 127
        %v185 = vpop.permute.xlu0 %184
        %vm187 = vcmask 64512
        %v189 = vsel %vm187, %v182, 0
        %191 = vmatprep.subr.mxu0 0.0
        %192 = vmatpush1.msra.mxu0 %v185
        %193 = vmatprep.subr.mxu0 0.0
        %194 = vmatpush1.msra.mxu0 0.0
        %195 = vmatprep.subr.mxu0 0.0
        %196 = vmatpush1.msra.mxu0 0.0
        %197 = vmatprep.subr.mxu0 0.0
        %198 = vmatpush1.msra.mxu0 0.0
        %199 = vmatprep.subr.mxu0 0.0
        %200 = vmatpush1.msra.mxu0 0.0
        %201 = vmatprep.subr.mxu0 0.0
        %202 = vmatpush1.msra.mxu0 0.0
        %203 = vmatprep.subr.mxu0 0.0
        %204 = vmatpush1.msra.mxu0 0.0
        %205 = vmatprep.subr.mxu0 0.0
        %206 = vmatpush1.msra.mxu0 0.0
        %207 = vmatprep.subr.mxu0 0.0
        %208 = vmatpush1.msra.mxu0 0.0
        %209 = vmatprep.subr.mxu0 0.0
        %210 = vmatpush1.msra.mxu0 0.0
        %211 = vmatprep.subr.mxu0 0.0
        %212 = vmatpush1.msra.mxu0 0.0
        %213 = vmatprep.subr.mxu0 0.0
        %214 = vmatpush1.msra.mxu0 0.0
        %215 = vmatprep.subr.mxu0 0.0
        %216 = vmatpush1.msra.mxu0 0.0
        %217 = vmatprep.subr.mxu0 0.0
        %218 = vmatpush1.msra.mxu0 0.0
        %219 = vmatprep.subr.mxu0 0.0
        %220 = vmatpush1.msra.mxu0 0.0
        %221 = vmatprep.subr.mxu0 0.0
        %222 = vmatpush1.msra.mxu0 0.0
        %223 = vmatprep.subr.mxu0 0.0
        %224 = vmatpush1.msra.mxu0 0.0
        %225 = vmatprep.subr.mxu0 0.0
        %226 = vmatpush1.msra.mxu0 0.0
        %227 = vmatprep.subr.mxu0 0.0
        %228 = vmatpush1.msra.mxu0 0.0
        %229 = vmatprep.subr.mxu0 0.0
        %230 = vmatpush1.msra.mxu0 0.0
        %231 = vmatprep.subr.mxu0 0.0
        %232 = vmatpush1.msra.mxu0 0.0
        %233 = vmatprep.subr.mxu0 0.0
        %234 = vmatpush1.msra.mxu0 0.0
        %235 = vmatprep.subr.mxu0 0.0
        %236 = vmatpush1.msra.mxu0 0.0
        %237 = vmatprep.subr.mxu0 0.0
        %238 = vmatpush1.msra.mxu0 0.0
        %239 = vmatprep.subr.mxu0 0.0
        %240 = vmatpush1.msra.mxu0 0.0
        %241 = vmatprep.subr.mxu0 0.0
        %242 = vmatpush1.msra.mxu0 0.0
        %243 = vmatprep.subr.mxu0 0.0
        %244 = vmatpush1.msra.mxu0 0.0
        %245 = vmatprep.subr.mxu0 0.0
        %246 = vmatpush1.msra.mxu0 0.0
        %247 = vmatprep.subr.mxu0 0.0
        %248 = vmatpush1.msra.mxu0 0.0
        %249 = vmatprep.subr.mxu0 0.0
        %250 = vmatpush1.msra.mxu0 0.0
        %251 = vmatprep.subr.mxu0 0.0
        %252 = vmatpush1.msra.mxu0 0.0
        %253 = vmatprep.subr.mxu0 0.0
        %254 = vmatpush1.msra.mxu0 0.0
        %255 = vmatprep.mubr.f32.mxu0 0.0
        %256 = vmatmul.mubr.f32.gmra.mrb[0].mxu0 %v189
        %v257 = vpop.f32.mrb[0].mxu0
        %v258 = vadd.f32 0.0, %v257
        %v259 = vpop.f32.mrb[0].mxu0
        %260 = vdwg.mxu0
        %v262 = vsel %vm187, %v180, 0
        %264 = vmatprep.subr.mxu0 0.0
        %265 = vmatpush1.msra.mxu0 %v179
        %266 = vmatprep.subr.mxu0 0.0
        %267 = vmatpush1.msra.mxu0 0.0
        %268 = vmatprep.subr.mxu0 0.0
        %269 = vmatpush1.msra.mxu0 0.0
        %270 = vmatprep.subr.mxu0 0.0
        %271 = vmatpush1.msra.mxu0 0.0
        %272 = vmatprep.subr.mxu0 0.0
        %273 = vmatpush1.msra.mxu0 0.0
        %274 = vmatprep.subr.mxu0 0.0
        %275 = vmatpush1.msra.mxu0 0.0
        %276 = vmatprep.subr.mxu0 0.0
        %277 = vmatpush1.msra.mxu0 0.0
        %278 = vmatprep.subr.mxu0 0.0
        %279 = vmatpush1.msra.mxu0 0.0
        %280 = vmatprep.subr.mxu0 0.0
        %281 = vmatpush1.msra.mxu0 0.0
        %282 = vmatprep.subr.mxu0 0.0
        %283 = vmatpush1.msra.mxu0 0.0
        %284 = vmatprep.subr.mxu0 0.0
        %285 = vmatpush1.msra.mxu0 0.0
        %286 = vmatprep.subr.mxu0 0.0
        %287 = vmatpush1.msra.mxu0 0.0
        %288 = vmatprep.subr.mxu0 0.0
        %289 = vmatpush1.msra.mxu0 0.0
        %290 = vmatprep.subr.mxu0 0.0
        %291 = vmatpush1.msra.mxu0 0.0
        %292 = vmatprep.subr.mxu0 0.0
        %293 = vmatpush1.msra.mxu0 0.0
        %294 = vmatprep.subr.mxu0 0.0
        %295 = vmatpush1.msra.mxu0 0.0
        %296 = vmatprep.subr.mxu0 0.0
        %297 = vmatpush1.msra.mxu0 0.0
        %298 = vmatprep.subr.mxu0 0.0
        %299 = vmatpush1.msra.mxu0 0.0
        %300 = vmatprep.subr.mxu0 0.0
        %301 = vmatpush1.msra.mxu0 0.0
        %302 = vmatprep.subr.mxu0 0.0
        %303 = vmatpush1.msra.mxu0 0.0
        %304 = vmatprep.subr.mxu0 0.0
        %305 = vmatpush1.msra.mxu0 0.0
        %306 = vmatprep.subr.mxu0 0.0
        %307 = vmatpush1.msra.mxu0 0.0
        %308 = vmatprep.subr.mxu0 0.0
        %309 = vmatpush1.msra.mxu0 0.0
        %310 = vmatprep.subr.mxu0 0.0
        %311 = vmatpush1.msra.mxu0 0.0
        %312 = vmatprep.subr.mxu0 0.0
        %313 = vmatpush1.msra.mxu0 0.0
        %314 = vmatprep.subr.mxu0 0.0
        %315 = vmatpush1.msra.mxu0 0.0
        %316 = vmatprep.subr.mxu0 0.0
        %317 = vmatpush1.msra.mxu0 0.0
        %318 = vmatprep.subr.mxu0 0.0
        %319 = vmatpush1.msra.mxu0 0.0
        %320 = vmatprep.subr.mxu0 0.0
        %321 = vmatpush1.msra.mxu0 0.0
        %322 = vmatprep.subr.mxu0 0.0
        %323 = vmatpush1.msra.mxu0 0.0
        %324 = vmatprep.subr.mxu0 0.0
        %325 = vmatpush1.msra.mxu0 0.0
        %326 = vmatprep.subr.mxu0 0.0
        %327 = vmatpush1.msra.mxu0 0.0
        %328 = vmatprep.mubr.f32.mxu0 0.0
        %329 = vmatmul.mubr.f32.gmra.mrb[0].mxu0 %v262
        %v330 = vpop.f32.mrb[0].mxu0
        %v331 = vadd.f32 %v258, %v330
        %v332 = vpop.f32.mrb[0].mxu0
        %333 = vdwg.mxu0
        %s334 = scalar_lea.vmem %s1, 8
        %v335 = vld [vmem:[%s334] sm:$0xf]
        %336 = vrot.lane.b32.xlu0 %v179, 126
        %v337 = vpop.permute.xlu0 %336
        %v340 = vsel %vm187, %v335, 0
        %342 = vmatprep.subr.mxu0 0.0
        %343 = vmatpush1.msra.mxu0 %v337
        %344 = vmatprep.subr.mxu0 0.0
        %345 = vmatpush1.msra.mxu0 0.0
        %346 = vmatprep.subr.mxu0 0.0
        %347 = vmatpush1.msra.mxu0 0.0
        %348 = vmatprep.subr.mxu0 0.0
        %349 = vmatpush1.msra.mxu0 0.0
        %350 = vmatprep.subr.mxu0 0.0
        %351 = vmatpush1.msra.mxu0 0.0
        %352 = vmatprep.subr.mxu0 0.0
        %353 = vmatpush1.msra.mxu0 0.0
        %354 = vmatprep.subr.mxu0 0.0
        %355 = vmatpush1.msra.mxu0 0.0
        %356 = vmatprep.subr.mxu0 0.0
        %357 = vmatpush1.msra.mxu0 0.0
        %358 = vmatprep.subr.mxu0 0.0
        %359 = vmatpush1.msra.mxu0 0.0
        %360 = vmatprep.subr.mxu0 0.0
        %361 = vmatpush1.msra.mxu0 0.0
        %362 = vmatprep.subr.mxu0 0.0
        %363 = vmatpush1.msra.mxu0 0.0
        %364 = vmatprep.subr.mxu0 0.0
        %365 = vmatpush1.msra.mxu0 0.0
        %366 = vmatprep.subr.mxu0 0.0
        %367 = vmatpush1.msra.mxu0 0.0
        %368 = vmatprep.subr.mxu0 0.0
        %369 = vmatpush1.msra.mxu0 0.0
        %370 = vmatprep.subr.mxu0 0.0
        %371 = vmatpush1.msra.mxu0 0.0
        %372 = vmatprep.subr.mxu0 0.0
        %373 = vmatpush1.msra.mxu0 0.0
        %374 = vmatprep.subr.mxu0 0.0
        %375 = vmatpush1.msra.mxu0 0.0
        %376 = vmatprep.subr.mxu0 0.0
        %377 = vmatpush1.msra.mxu0 0.0
        %378 = vmatprep.subr.mxu0 0.0
        %379 = vmatpush1.msra.mxu0 0.0
        %380 = vmatprep.subr.mxu0 0.0
        %381 = vmatpush1.msra.mxu0 0.0
        %382 = vmatprep.subr.mxu0 0.0
        %383 = vmatpush1.msra.mxu0 0.0
        %384 = vmatprep.subr.mxu0 0.0
        %385 = vmatpush1.msra.mxu0 0.0
        %386 = vmatprep.subr.mxu0 0.0
        %387 = vmatpush1.msra.mxu0 0.0
        %388 = vmatprep.subr.mxu0 0.0
        %389 = vmatpush1.msra.mxu0 0.0
        %390 = vmatprep.subr.mxu0 0.0
        %391 = vmatpush1.msra.mxu0 0.0
        %392 = vmatprep.subr.mxu0 0.0
        %393 = vmatpush1.msra.mxu0 0.0
        %394 = vmatprep.subr.mxu0 0.0
        %395 = vmatpush1.msra.mxu0 0.0
        %396 = vmatprep.subr.mxu0 0.0
        %397 = vmatpush1.msra.mxu0 0.0
        %398 = vmatprep.subr.mxu0 0.0
        %399 = vmatpush1.msra.mxu0 0.0
        %400 = vmatprep.subr.mxu0 0.0
        %401 = vmatpush1.msra.mxu0 0.0
        %402 = vmatprep.subr.mxu0 0.0
        %403 = vmatpush1.msra.mxu0 0.0
        %404 = vmatprep.subr.mxu0 0.0
        %405 = vmatpush1.msra.mxu0 0.0
        %406 = vmatprep.mubr.f32.mxu0 0.0
        %407 = vmatmul.mubr.f32.gmra.mrb[0].mxu0 %v340
        %v408 = vpop.f32.mrb[0].mxu0
        %v409 = vadd.f32 0.0, %v408
        %v410 = vpop.f32.mrb[0].mxu0
        %411 = vdwg.mxu0
        %v412 = vadd.f32 %v331, %v409
        %s413 = sadd.s32 %s172, 1
        %s414 = smul.u32 %s413, 8
        %s415 = scalar_lea.vmem %s165, %s414
        %v416 = vld [vmem:[%s415] sm:$0xff]
        %s417 = scalar_lea.vmem %s1, 12
        %v418 = vld [vmem:[%s417] sm:$0xf]
        %v420 = vsel %vm187, %v418, 0
        %422 = vmatprep.subr.mxu0 0.0
        %423 = vmatpush1.msra.mxu0 %v416
        %424 = vmatprep.subr.mxu0 0.0
        %425 = vmatpush1.msra.mxu0 0.0
        %426 = vmatprep.subr.mxu0 0.0
        %427 = vmatpush1.msra.mxu0 0.0
        %428 = vmatprep.subr.mxu0 0.0
        %429 = vmatpush1.msra.mxu0 0.0
        %430 = vmatprep.subr.mxu0 0.0
        %431 = vmatpush1.msra.mxu0 0.0
        %432 = vmatprep.subr.mxu0 0.0
        %433 = vmatpush1.msra.mxu0 0.0
        %434 = vmatprep.subr.mxu0 0.0
        %435 = vmatpush1.msra.mxu0 0.0
        %436 = vmatprep.subr.mxu0 0.0
        %437 = vmatpush1.msra.mxu0 0.0
        %438 = vmatprep.subr.mxu0 0.0
        %439 = vmatpush1.msra.mxu0 0.0
        %440 = vmatprep.subr.mxu0 0.0
        %441 = vmatpush1.msra.mxu0 0.0
        %442 = vmatprep.subr.mxu0 0.0
        %443 = vmatpush1.msra.mxu0 0.0
        %444 = vmatprep.subr.mxu0 0.0
        %445 = vmatpush1.msra.mxu0 0.0
        %446 = vmatprep.subr.mxu0 0.0
        %447 = vmatpush1.msra.mxu0 0.0
        %448 = vmatprep.subr.mxu0 0.0
        %449 = vmatpush1.msra.mxu0 0.0
        %450 = vmatprep.subr.mxu0 0.0
        %451 = vmatpush1.msra.mxu0 0.0
        %452 = vmatprep.subr.mxu0 0.0
        %453 = vmatpush1.msra.mxu0 0.0
        %454 = vmatprep.subr.mxu0 0.0
        %455 = vmatpush1.msra.mxu0 0.0
        %456 = vmatprep.subr.mxu0 0.0
        %457 = vmatpush1.msra.mxu0 0.0
        %458 = vmatprep.subr.mxu0 0.0
        %459 = vmatpush1.msra.mxu0 0.0
        %460 = vmatprep.subr.mxu0 0.0
        %461 = vmatpush1.msra.mxu0 0.0
        %462 = vmatprep.subr.mxu0 0.0
        %463 = vmatpush1.msra.mxu0 0.0
        %464 = vmatprep.subr.mxu0 0.0
        %465 = vmatpush1.msra.mxu0 0.0
        %466 = vmatprep.subr.mxu0 0.0
        %467 = vmatpush1.msra.mxu0 0.0
        %468 = vmatprep.subr.mxu0 0.0
        %469 = vmatpush1.msra.mxu0 0.0
        %470 = vmatprep.subr.mxu0 0.0
        %471 = vmatpush1.msra.mxu0 0.0
        %472 = vmatprep.subr.mxu0 0.0
        %473 = vmatpush1.msra.mxu0 0.0
        %474 = vmatprep.subr.mxu0 0.0
        %475 = vmatpush1.msra.mxu0 0.0
        %476 = vmatprep.subr.mxu0 0.0
        %477 = vmatpush1.msra.mxu0 0.0
        %478 = vmatprep.subr.mxu0 0.0
        %479 = vmatpush1.msra.mxu0 0.0
        %480 = vmatprep.subr.mxu0 0.0
        %481 = vmatpush1.msra.mxu0 0.0
        %482 = vmatprep.subr.mxu0 0.0
        %483 = vmatpush1.msra.mxu0 0.0
        %484 = vmatprep.subr.mxu0 0.0
        %485 = vmatpush1.msra.mxu0 0.0
        %486 = vmatprep.mubr.f32.mxu0 0.0
        %487 = vmatmul.mubr.f32.gmra.mrb[0].mxu0 %v420
        %v488 = vpop.f32.mrb[0].mxu0
        %v489 = vadd.f32 0.0, %v488
        %v490 = vpop.f32.mrb[0].mxu0
        %491 = vdwg.mxu0
        %v492 = vadd.f32 %v412, %v489
        %s493 = scalar_lea.vmem %s1, 16
        %v494 = vld [vmem:[%s493] sm:$0xf]
        %496 = vrot.lane.b32.xlu0 %v416, 127
        %v497 = vpop.permute.xlu0 %496
        %v500 = vsel %vm187, %v494, 0
        %502 = vmatprep.subr.mxu0 0.0
        %503 = vmatpush1.msra.mxu0 %v497
        %504 = vmatprep.subr.mxu0 0.0
        %505 = vmatpush1.msra.mxu0 0.0
        %506 = vmatprep.subr.mxu0 0.0
        %507 = vmatpush1.msra.mxu0 0.0
        %508 = vmatprep.subr.mxu0 0.0
        %509 = vmatpush1.msra.mxu0 0.0
        %510 = vmatprep.subr.mxu0 0.0
        %511 = vmatpush1.msra.mxu0 0.0
        %512 = vmatprep.subr.mxu0 0.0
        %513 = vmatpush1.msra.mxu0 0.0
        %514 = vmatprep.subr.mxu0 0.0
        %515 = vmatpush1.msra.mxu0 0.0
        %516 = vmatprep.subr.mxu0 0.0
        %517 = vmatpush1.msra.mxu0 0.0
        %518 = vmatprep.subr.mxu0 0.0
        %519 = vmatpush1.msra.mxu0 0.0
        %520 = vmatprep.subr.mxu0 0.0
        %521 = vmatpush1.msra.mxu0 0.0
        %522 = vmatprep.subr.mxu0 0.0
        %523 = vmatpush1.msra.mxu0 0.0
        %524 = vmatprep.subr.mxu0 0.0
        %525 = vmatpush1.msra.mxu0 0.0
        %526 = vmatprep.subr.mxu0 0.0
        %527 = vmatpush1.msra.mxu0 0.0
        %528 = vmatprep.subr.mxu0 0.0
        %529 = vmatpush1.msra.mxu0 0.0
        %530 = vmatprep.subr.mxu0 0.0
        %531 = vmatpush1.msra.mxu0 0.0
        %532 = vmatprep.subr.mxu0 0.0
        %533 = vmatpush1.msra.mxu0 0.0
        %534 = vmatprep.subr.mxu0 0.0
        %535 = vmatpush1.msra.mxu0 0.0
        %536 = vmatprep.subr.mxu0 0.0
        %537 = vmatpush1.msra.mxu0 0.0
        %538 = vmatprep.subr.mxu0 0.0
        %539 = vmatpush1.msra.mxu0 0.0
        %540 = vmatprep.subr.mxu0 0.0
        %541 = vmatpush1.msra.mxu0 0.0
        %542 = vmatprep.subr.mxu0 0.0
        %543 = vmatpush1.msra.mxu0 0.0
        %544 = vmatprep.subr.mxu0 0.0
        %545 = vmatpush1.msra.mxu0 0.0
        %546 = vmatprep.subr.mxu0 0.0
        %547 = vmatpush1.msra.mxu0 0.0
        %548 = vmatprep.subr.mxu0 0.0
        %549 = vmatpush1.msra.mxu0 0.0
        %550 = vmatprep.subr.mxu0 0.0
        %551 = vmatpush1.msra.mxu0 0.0
        %552 = vmatprep.subr.mxu0 0.0
        %553 = vmatpush1.msra.mxu0 0.0
        %554 = vmatprep.subr.mxu0 0.0
        %555 = vmatpush1.msra.mxu0 0.0
        %556 = vmatprep.subr.mxu0 0.0
        %557 = vmatpush1.msra.mxu0 0.0
        %558 = vmatprep.subr.mxu0 0.0
        %559 = vmatpush1.msra.mxu0 0.0
        %560 = vmatprep.subr.mxu0 0.0
        %561 = vmatpush1.msra.mxu0 0.0
        %562 = vmatprep.subr.mxu0 0.0
        %563 = vmatpush1.msra.mxu0 0.0
        %564 = vmatprep.subr.mxu0 0.0
        %565 = vmatpush1.msra.mxu0 0.0
        %566 = vmatprep.mubr.f32.mxu0 0.0
        %567 = vmatmul.mubr.f32.gmra.mrb[0].mxu0 %v500
        %v568 = vpop.f32.mrb[0].mxu0
        %v569 = vadd.f32 0.0, %v568
        %v570 = vpop.f32.mrb[0].mxu0
        %571 = vdwg.mxu0
        %v572 = vadd.f32 %v492, %v569
        %s573 = scalar_lea.vmem %s1, 20
        %v574 = vld [vmem:[%s573] sm:$0xf]
        %575 = vrot.lane.b32.xlu0 %v416, 126
        %v576 = vpop.permute.xlu0 %575
        %v579 = vsel %vm187, %v574, 0
        %581 = vmatprep.subr.mxu0 0.0
        %582 = vmatpush1.msra.mxu0 %v576
        %583 = vmatprep.subr.mxu0 0.0
        %584 = vmatpush1.msra.mxu0 0.0
        %585 = vmatprep.subr.mxu0 0.0
        %586 = vmatpush1.msra.mxu0 0.0
        %587 = vmatprep.subr.mxu0 0.0
        %588 = vmatpush1.msra.mxu0 0.0
        %589 = vmatprep.subr.mxu0 0.0
        %590 = vmatpush1.msra.mxu0 0.0
        %591 = vmatprep.subr.mxu0 0.0
        %592 = vmatpush1.msra.mxu0 0.0
        %593 = vmatprep.subr.mxu0 0.0
        %594 = vmatpush1.msra.mxu0 0.0
        %595 = vmatprep.subr.mxu0 0.0
        %596 = vmatpush1.msra.mxu0 0.0
        %597 = vmatprep.subr.mxu0 0.0
        %598 = vmatpush1.msra.mxu0 0.0
        %599 = vmatprep.subr.mxu0 0.0
        %600 = vmatpush1.msra.mxu0 0.0
        %601 = vmatprep.subr.mxu0 0.0
        %602 = vmatpush1.msra.mxu0 0.0
        %603 = vmatprep.subr.mxu0 0.0
        %604 = vmatpush1.msra.mxu0 0.0
        %605 = vmatprep.subr.mxu0 0.0
        %606 = vmatpush1.msra.mxu0 0.0
        %607 = vmatprep.subr.mxu0 0.0
        %608 = vmatpush1.msra.mxu0 0.0
        %609 = vmatprep.subr.mxu0 0.0
        %610 = vmatpush1.msra.mxu0 0.0
        %611 = vmatprep.subr.mxu0 0.0
        %612 = vmatpush1.msra.mxu0 0.0
        %613 = vmatprep.subr.mxu0 0.0
        %614 = vmatpush1.msra.mxu0 0.0
        %615 = vmatprep.subr.mxu0 0.0
        %616 = vmatpush1.msra.mxu0 0.0
        %617 = vmatprep.subr.mxu0 0.0
        %618 = vmatpush1.msra.mxu0 0.0
        %619 = vmatprep.subr.mxu0 0.0
        %620 = vmatpush1.msra.mxu0 0.0
        %621 = vmatprep.subr.mxu0 0.0
        %622 = vmatpush1.msra.mxu0 0.0
        %623 = vmatprep.subr.mxu0 0.0
        %624 = vmatpush1.msra.mxu0 0.0
        %625 = vmatprep.subr.mxu0 0.0
        %626 = vmatpush1.msra.mxu0 0.0
        %627 = vmatprep.subr.mxu0 0.0
        %628 = vmatpush1.msra.mxu0 0.0
        %629 = vmatprep.subr.mxu0 0.0
        %630 = vmatpush1.msra.mxu0 0.0
        %631 = vmatprep.subr.mxu0 0.0
        %632 = vmatpush1.msra.mxu0 0.0
        %633 = vmatprep.subr.mxu0 0.0
        %634 = vmatpush1.msra.mxu0 0.0
        %635 = vmatprep.subr.mxu0 0.0
        %636 = vmatpush1.msra.mxu0 0.0
        %637 = vmatprep.subr.mxu0 0.0
        %638 = vmatpush1.msra.mxu0 0.0
        %639 = vmatprep.subr.mxu0 0.0
        %640 = vmatpush1.msra.mxu0 0.0
        %641 = vmatprep.subr.mxu0 0.0
        %642 = vmatpush1.msra.mxu0 0.0
        %643 = vmatprep.subr.mxu0 0.0
        %644 = vmatpush1.msra.mxu0 0.0
        %645 = vmatprep.mubr.f32.mxu0 0.0
        %646 = vmatmul.mubr.f32.gmra.mrb[0].mxu0 %v579
        %v647 = vpop.f32.mrb[0].mxu0
        %v648 = vadd.f32 0.0, %v647
        %v649 = vpop.f32.mrb[0].mxu0
        %650 = vdwg.mxu0
        %v651 = vadd.f32 %v572, %v648
        %s652 = sadd.s32 %s172, 2
        %s653 = smul.u32 %s652, 8
        %s654 = scalar_lea.vmem %s165, %s653
        %v655 = vld [vmem:[%s654] sm:$0xff]
        %s656 = scalar_lea.vmem %s1, 24
        %v657 = vld [vmem:[%s656] sm:$0xf]
        %v659 = vsel %vm187, %v657, 0
        %661 = vmatprep.subr.mxu0 0.0
        %662 = vmatpush1.msra.mxu0 %v655
        %663 = vmatprep.subr.mxu0 0.0
        %664 = vmatpush1.msra.mxu0 0.0
        %665 = vmatprep.subr.mxu0 0.0
        %666 = vmatpush1.msra.mxu0 0.0
        %667 = vmatprep.subr.mxu0 0.0
        %668 = vmatpush1.msra.mxu0 0.0
        %669 = vmatprep.subr.mxu0 0.0
        %670 = vmatpush1.msra.mxu0 0.0
        %671 = vmatprep.subr.mxu0 0.0
        %672 = vmatpush1.msra.mxu0 0.0
        %673 = vmatprep.subr.mxu0 0.0
        %674 = vmatpush1.msra.mxu0 0.0
        %675 = vmatprep.subr.mxu0 0.0
        %676 = vmatpush1.msra.mxu0 0.0
        %677 = vmatprep.subr.mxu0 0.0
        %678 = vmatpush1.msra.mxu0 0.0
        %679 = vmatprep.subr.mxu0 0.0
        %680 = vmatpush1.msra.mxu0 0.0
        %681 = vmatprep.subr.mxu0 0.0
        %682 = vmatpush1.msra.mxu0 0.0
        %683 = vmatprep.subr.mxu0 0.0
        %684 = vmatpush1.msra.mxu0 0.0
        %685 = vmatprep.subr.mxu0 0.0
        %686 = vmatpush1.msra.mxu0 0.0
        %687 = vmatprep.subr.mxu0 0.0
        %688 = vmatpush1.msra.mxu0 0.0
        %689 = vmatprep.subr.mxu0 0.0
        %690 = vmatpush1.msra.mxu0 0.0
        %691 = vmatprep.subr.mxu0 0.0
        %692 = vmatpush1.msra.mxu0 0.0
        %693 = vmatprep.subr.mxu0 0.0
        %694 = vmatpush1.msra.mxu0 0.0
        %695 = vmatprep.subr.mxu0 0.0
        %696 = vmatpush1.msra.mxu0 0.0
        %697 = vmatprep.subr.mxu0 0.0
        %698 = vmatpush1.msra.mxu0 0.0
        %699 = vmatprep.subr.mxu0 0.0
        %700 = vmatpush1.msra.mxu0 0.0
        %701 = vmatprep.subr.mxu0 0.0
        %702 = vmatpush1.msra.mxu0 0.0
        %703 = vmatprep.subr.mxu0 0.0
        %704 = vmatpush1.msra.mxu0 0.0
        %705 = vmatprep.subr.mxu0 0.0
        %706 = vmatpush1.msra.mxu0 0.0
        %707 = vmatprep.subr.mxu0 0.0
        %708 = vmatpush1.msra.mxu0 0.0
        %709 = vmatprep.subr.mxu0 0.0
        %710 = vmatpush1.msra.mxu0 0.0
        %711 = vmatprep.subr.mxu0 0.0
        %712 = vmatpush1.msra.mxu0 0.0
        %713 = vmatprep.subr.mxu0 0.0
        %714 = vmatpush1.msra.mxu0 0.0
        %715 = vmatprep.subr.mxu0 0.0
        %716 = vmatpush1.msra.mxu0 0.0
        %717 = vmatprep.subr.mxu0 0.0
        %718 = vmatpush1.msra.mxu0 0.0
        %719 = vmatprep.subr.mxu0 0.0
        %720 = vmatpush1.msra.mxu0 0.0
        %721 = vmatprep.subr.mxu0 0.0
        %722 = vmatpush1.msra.mxu0 0.0
        %723 = vmatprep.subr.mxu0 0.0
        %724 = vmatpush1.msra.mxu0 0.0
        %725 = vmatprep.mubr.f32.mxu0 0.0
        %726 = vmatmul.mubr.f32.gmra.mrb[0].mxu0 %v659
        %v727 = vpop.f32.mrb[0].mxu0
        %v728 = vadd.f32 0.0, %v727
        %v729 = vpop.f32.mrb[0].mxu0
        %730 = vdwg.mxu0
        %v731 = vadd.f32 %v651, %v728
        %s732 = scalar_lea.vmem %s1, 28
        %v733 = vld [vmem:[%s732] sm:$0xf]
        %735 = vrot.lane.b32.xlu0 %v655, 127
        %v736 = vpop.permute.xlu0 %735
        %v739 = vsel %vm187, %v733, 0
        %741 = vmatprep.subr.mxu0 0.0
        %742 = vmatpush1.msra.mxu0 %v736
        %743 = vmatprep.subr.mxu0 0.0
        %744 = vmatpush1.msra.mxu0 0.0
        %745 = vmatprep.subr.mxu0 0.0
        %746 = vmatpush1.msra.mxu0 0.0
        %747 = vmatprep.subr.mxu0 0.0
        %748 = vmatpush1.msra.mxu0 0.0
        %749 = vmatprep.subr.mxu0 0.0
        %750 = vmatpush1.msra.mxu0 0.0
        %751 = vmatprep.subr.mxu0 0.0
        %752 = vmatpush1.msra.mxu0 0.0
        %753 = vmatprep.subr.mxu0 0.0
        %754 = vmatpush1.msra.mxu0 0.0
        %755 = vmatprep.subr.mxu0 0.0
        %756 = vmatpush1.msra.mxu0 0.0
        %757 = vmatprep.subr.mxu0 0.0
        %758 = vmatpush1.msra.mxu0 0.0
        %759 = vmatprep.subr.mxu0 0.0
        %760 = vmatpush1.msra.mxu0 0.0
        %761 = vmatprep.subr.mxu0 0.0
        %762 = vmatpush1.msra.mxu0 0.0
        %763 = vmatprep.subr.mxu0 0.0
        %764 = vmatpush1.msra.mxu0 0.0
        %765 = vmatprep.subr.mxu0 0.0
        %766 = vmatpush1.msra.mxu0 0.0
        %767 = vmatprep.subr.mxu0 0.0
        %768 = vmatpush1.msra.mxu0 0.0
        %769 = vmatprep.subr.mxu0 0.0
        %770 = vmatpush1.msra.mxu0 0.0
        %771 = vmatprep.subr.mxu0 0.0
        %772 = vmatpush1.msra.mxu0 0.0
        %773 = vmatprep.subr.mxu0 0.0
        %774 = vmatpush1.msra.mxu0 0.0
        %775 = vmatprep.subr.mxu0 0.0
        %776 = vmatpush1.msra.mxu0 0.0
        %777 = vmatprep.subr.mxu0 0.0
        %778 = vmatpush1.msra.mxu0 0.0
        %779 = vmatprep.subr.mxu0 0.0
        %780 = vmatpush1.msra.mxu0 0.0
        %781 = vmatprep.subr.mxu0 0.0
        %782 = vmatpush1.msra.mxu0 0.0
        %783 = vmatprep.subr.mxu0 0.0
        %784 = vmatpush1.msra.mxu0 0.0
        %785 = vmatprep.subr.mxu0 0.0
        %786 = vmatpush1.msra.mxu0 0.0
        %787 = vmatprep.subr.mxu0 0.0
        %788 = vmatpush1.msra.mxu0 0.0
        %789 = vmatprep.subr.mxu0 0.0
        %790 = vmatpush1.msra.mxu0 0.0
        %791 = vmatprep.subr.mxu0 0.0
        %792 = vmatpush1.msra.mxu0 0.0
        %793 = vmatprep.subr.mxu0 0.0
        %794 = vmatpush1.msra.mxu0 0.0
        %795 = vmatprep.subr.mxu0 0.0
        %796 = vmatpush1.msra.mxu0 0.0
        %797 = vmatprep.subr.mxu0 0.0
        %798 = vmatpush1.msra.mxu0 0.0
        %799 = vmatprep.subr.mxu0 0.0
        %800 = vmatpush1.msra.mxu0 0.0
        %801 = vmatprep.subr.mxu0 0.0
        %802 = vmatpush1.msra.mxu0 0.0
        %803 = vmatprep.subr.mxu0 0.0
        %804 = vmatpush1.msra.mxu0 0.0
        %805 = vmatprep.mubr.f32.mxu0 0.0
        %806 = vmatmul.mubr.f32.gmra.mrb[0].mxu0 %v739
        %v807 = vpop.f32.mrb[0].mxu0
        %v808 = vadd.f32 0.0, %v807
        %v809 = vpop.f32.mrb[0].mxu0
        %810 = vdwg.mxu0
        %v811 = vadd.f32 %v731, %v808
        %s812 = scalar_lea.vmem %s1, 32
        %v813 = vld [vmem:[%s812] sm:$0xf]
        %814 = vrot.lane.b32.xlu0 %v655, 126
        %v815 = vpop.permute.xlu0 %814
        %v818 = vsel %vm187, %v813, 0
        %820 = vmatprep.subr.mxu0 0.0
        %821 = vmatpush1.msra.mxu0 %v815
        %822 = vmatprep.subr.mxu0 0.0
        %823 = vmatpush1.msra.mxu0 0.0
        %824 = vmatprep.subr.mxu0 0.0
        %825 = vmatpush1.msra.mxu0 0.0
        %826 = vmatprep.subr.mxu0 0.0
        %827 = vmatpush1.msra.mxu0 0.0
        %828 = vmatprep.subr.mxu0 0.0
        %829 = vmatpush1.msra.mxu0 0.0
        %830 = vmatprep.subr.mxu0 0.0
        %831 = vmatpush1.msra.mxu0 0.0
        %832 = vmatprep.subr.mxu0 0.0
        %833 = vmatpush1.msra.mxu0 0.0
        %834 = vmatprep.subr.mxu0 0.0
        %835 = vmatpush1.msra.mxu0 0.0
        %836 = vmatprep.subr.mxu0 0.0
        %837 = vmatpush1.msra.mxu0 0.0
        %838 = vmatprep.subr.mxu0 0.0
        %839 = vmatpush1.msra.mxu0 0.0
        %840 = vmatprep.subr.mxu0 0.0
        %841 = vmatpush1.msra.mxu0 0.0
        %842 = vmatprep.subr.mxu0 0.0
        %843 = vmatpush1.msra.mxu0 0.0
        %844 = vmatprep.subr.mxu0 0.0
        %845 = vmatpush1.msra.mxu0 0.0
        %846 = vmatprep.subr.mxu0 0.0
        %847 = vmatpush1.msra.mxu0 0.0
        %848 = vmatprep.subr.mxu0 0.0
        %849 = vmatpush1.msra.mxu0 0.0
        %850 = vmatprep.subr.mxu0 0.0
        %851 = vmatpush1.msra.mxu0 0.0
        %852 = vmatprep.subr.mxu0 0.0
        %853 = vmatpush1.msra.mxu0 0.0
        %854 = vmatprep.subr.mxu0 0.0
        %855 = vmatpush1.msra.mxu0 0.0
        %856 = vmatprep.subr.mxu0 0.0
        %857 = vmatpush1.msra.mxu0 0.0
        %858 = vmatprep.subr.mxu0 0.0
        %859 = vmatpush1.msra.mxu0 0.0
        %860 = vmatprep.subr.mxu0 0.0
        %861 = vmatpush1.msra.mxu0 0.0
        %862 = vmatprep.subr.mxu0 0.0
        %863 = vmatpush1.msra.mxu0 0.0
        %864 = vmatprep.subr.mxu0 0.0
        %865 = vmatpush1.msra.mxu0 0.0
        %866 = vmatprep.subr.mxu0 0.0
        %867 = vmatpush1.msra.mxu0 0.0
        %868 = vmatprep.subr.mxu0 0.0
        %869 = vmatpush1.msra.mxu0 0.0
        %870 = vmatprep.subr.mxu0 0.0
        %871 = vmatpush1.msra.mxu0 0.0
        %872 = vmatprep.subr.mxu0 0.0
        %873 = vmatpush1.msra.mxu0 0.0
        %874 = vmatprep.subr.mxu0 0.0
        %875 = vmatpush1.msra.mxu0 0.0
        %876 = vmatprep.subr.mxu0 0.0
        %877 = vmatpush1.msra.mxu0 0.0
        %878 = vmatprep.subr.mxu0 0.0
        %879 = vmatpush1.msra.mxu0 0.0
        %880 = vmatprep.subr.mxu0 0.0
        %881 = vmatpush1.msra.mxu0 0.0
        %882 = vmatprep.subr.mxu0 0.0
        %883 = vmatpush1.msra.mxu0 0.0
        %884 = vmatprep.mubr.f32.mxu0 0.0
        %885 = vmatmul.mubr.f32.gmra.mrb[0].mxu0 %v818
        %v886 = vpop.f32.mrb[0].mxu0
        %v887 = vadd.f32 0.0, %v886
        %v888 = vpop.f32.mrb[0].mxu0
        %889 = vdwg.mxu0
        %v890 = vadd.f32 %v811, %v887
        %v891 = vld [vmem:[%s2] sm:$0xf]
        %893 = vset.pattern.permute.xlu0 0
        %894 = vperm.xlu0 %893, %v891
        %v895 = vpop.permute.xlu0 %894
        %v897 = vadd.f32 %v890, %v895
        %v898 = vmax.f32 %v897, 0.0
        %s899 = smul.u32 %s172, 4
        %s900 = scalar_lea.vmem %s170, %s899
        %vm901 = vcmask 125952
        %902 = vst.msk [vmem:[%s900] sm:$0xf] %vm901, %v898
      $region37: #{up_transition.6} parent=31 // loop_footer
        %s176 = sadd.s32 1, %s172
      $region38: #{up_transition.6} parent=31 // loop_footer_branch
        %171 = sbr.rel target = $region34
      $region39: #{up_transition.6} parent=31 // loop_exit
        _
      %p903 = scmp.lt.s32.totalorder %s14, 1
      %s904 = scalar_select %p903, %s14, 1
      %s905 = smul.addr %s904, 16
      %s906 = smul.addr %s905, 4
      %s907 = scalar_lea.vmem %s3, %s906
      // Predicated region
      $region40: #{up_transition.6} parent=31 // pred_check
        %p908 = pneg %p100
      $region41: #{up_transition.6} parent=31 // pred_check_branch
        %910 = sbr.rel (%p908) target = $region43
      $region42: #{up_transition.6} parent=31 // pred_region
        _
      $region43: #{up_transition.6} parent=31 // pred_fallthru
        _
    $region32: #{up_transition.6} parent=5 // pred_fallthru
      _
    %p911 = scmp.le.s32.totalorder 2, %s9
    // Predicated region
    $region44: #{up_transition.6} parent=5 // pred_check
      %p912 = pneg %p911
    $region45: #{up_transition.6} parent=5 // pred_check_branch
      %914 = sbr.rel (%p912) target = $region47
    $region46: #{up_transition.6} parent=5 // pred_region
      %s915 = ssub.s32 %s9, 2
      // Predicated region
      $region48: #{up_transition.6} parent=46 // pred_check
        %p916 = pneg %p106
      $region49: #{up_transition.6} parent=46 // pred_check_branch
        %918 = sbr.rel (%p916) target = $region51
      $region50: #{up_transition.6} parent=46 // pred_region
        %p919 = scmp.lt.s32.totalorder %s15, 1
        %s920 = scalar_select %p919, %s15, 1
        %s921 = smul.addr %s920, 16
        %s922 = smul.addr %s921, 4
        %s923 = scalar_lea.vmem %s3, %s922
      $region51: #{up_transition.6} parent=46 // pred_fallthru
        _
    $region47: #{up_transition.6} parent=5 // pred_fallthru
      _
  $region6: #{up_transition.6} parent=0 // loop_footer
    %s13 = sadd.s32 1, %s9
  $region7: #{up_transition.6} parent=0 // loop_footer_branch
    %8 = sbr.rel target = $region3
  $region8: #{up_transition.6} parent=0 // loop_exit
    _

</llo_original>
